<compile_context>
chip_gen: v7x
topology: tpu7x:2x2x1
jax: 0.10.0
libtpu: 0.0.40
codegen_flags: <defaults>
</compile_context>

<pallas_src>
import jax
import jax.numpy as jnp
from jax.experimental import pallas as pl
from jax.experimental.pallas import tpu as pltpu

# Cast MXU operands to this dtype (accumulation stays f32 via
# preferred_element_type).  Use jnp.bfloat16 for production sizes on v6e/v7x.
MXU_DTYPE = jnp.float32


# ------------------------------ fused kernel ------------------------------

def fused_cnn_bilstm_kernel(
        x_ref,                                                   # (Bt, L, C0)
        c1w_ref, c1b_ref, c2w_ref, c2b_ref,                      # conv weights
        c3w_ref, c3b_ref, c4w_ref, c4b_ref,                      # (3*Cin, Cout)
        wx_ref, wh_ref, bl_ref,                                  # fused BiLSTM
        w1_ref, b1_ref, w2_ref, b2_ref, w3_ref, b3_ref,          # MLP head
        wo_ref, bo_ref,
        o_ref):                                                  # (Bt, ncls)
    f32 = jnp.float32
    H = wh_ref.shape[0] // 2          # wh is (2H, 8H) block-diagonal

    def mdot(a, w):
        return jnp.dot(a.astype(MXU_DTYPE), w.astype(MXU_DTYPE),
                       preferred_element_type=f32)

    def conv3_relu(x, w_ref, b_ref):
        # Conv1d(kernel=3, padding=1) + bias + ReLU, channels-last, batched.
        # im2col: one matmul with K = 3*Cin instead of three tap matmuls.
        bt, l, cin = x.shape
        zero = jnp.zeros((bt, 1, cin), f32)
        xm1 = jnp.concatenate([zero, x[:, :l - 1, :]], axis=1)   # x[l-1] (0-pad)
        xp1 = jnp.concatenate([x[:, 1:, :], zero], axis=1)       # x[l+1] (0-pad)
        col = jnp.concatenate([xm1, x, xp1], axis=-1)            # (bt, l, 3*cin)
        cout = w_ref.shape[-1]
        y = mdot(col.reshape(bt * l, 3 * cin), w_ref[...]) + b_ref[...]
        return jnp.maximum(y, 0.0).reshape(bt, l, cout)

    def maxpool2(x):
        # MaxPool1d(kernel=2, stride=2) along length; pure vreg ops, no VMEM.
        bt, l, c = x.shape
        pairs = [jnp.maximum(x[:, 2 * i:2 * i + 1, :],
                             x[:, 2 * i + 1:2 * i + 2, :])
                 for i in range(l // 2)]
        return jnp.concatenate(pairs, axis=1)                    # (bt, l//2, c)

    # ------------------------------ conv stack ------------------------------
    x = x_ref[...].astype(f32)                                   # (Bt, L, C0)
    bt = x.shape[0]
    a = conv3_relu(x, c1w_ref, c1b_ref)                          # conv1 + relu1
    a = maxpool2(a)                                              # pool1
    a = conv3_relu(a, c2w_ref, c2b_ref)                          # conv2 + relu2
    a = conv3_relu(a, c3w_ref, c3b_ref)                          # conv3 + relu3
    a = conv3_relu(a, c4w_ref, c4b_ref)                          # conv4 + relu4
    a = maxpool2(a)                                              # pool2 -> (Bt, T, C)
    T, C = a.shape[1], a.shape[2]

    # ------------------------------- BiLSTM ---------------------------------
    # Fused input projection for both directions: (Bt*T, C) @ (C, 8H).
    xproj = mdot(a.reshape(bt * T, C), wx_ref[...]) + bl_ref[...]
    xproj = xproj.reshape(bt, T, 8 * H)       # [:, :, :4H]=fwd, [:, :, 4H:]=bwd

    wh = wh_ref[...]                          # (2H, 8H) block-diag [Whf 0; 0 Whb]

    def gates(g, c_prev):                     # gate order i, f, g, o (PyTorch)
        i_g = jax.nn.sigmoid(g[:, 0:H])
        f_g = jax.nn.sigmoid(g[:, H:2 * H])
        g_g = jnp.tanh(g[:, 2 * H:3 * H])
        o_g = jax.nn.sigmoid(g[:, 3 * H:4 * H])
        c_new = f_g * c_prev + i_g * g_g
        h_new = o_g * jnp.tanh(c_new)
        return h_new, c_new

    h_f = jnp.zeros((bt, H), f32)
    h_b = jnp.zeros((bt, H), f32)
    c_f = jnp.zeros((bt, H), f32)
    c_b = jnp.zeros((bt, H), f32)
    hs_f = [None] * T
    hs_b = [None] * T
    # Statically unrolled T-step recurrence; forward direction walks t = s,
    # backward direction walks t = T-1-s, sharing one block-diagonal matmul.
    for s in range(T):
        tf, tb = s, T - 1 - s
        h_cat = jnp.concatenate([h_f, h_b], axis=-1)             # (bt, 2H)
        gr = mdot(h_cat, wh)                                     # (bt, 8H)
        g_f = xproj[:, tf, 0:4 * H] + gr[:, 0:4 * H]
        g_b = xproj[:, tb, 4 * H:8 * H] + gr[:, 4 * H:8 * H]
        h_f, c_f = gates(g_f, c_f)
        h_b, c_b = gates(g_b, c_b)
        hs_f[tf] = h_f
        hs_b[tb] = h_b

    # Lane-dense flattened (Bt, T*2H) feature block == torch .view(B, -1),
    # built in registers (no VMEM scratch round trip).
    pieces = []
    for t in range(T):
        pieces.append(hs_f[t])
        pieces.append(hs_b[t])
    h = jnp.concatenate(pieces, axis=-1)                         # (Bt, T*2H)

    # ------------------------------- MLP head -------------------------------
    # TODO(synk): dropout layers are identity (eval mode); no in-kernel RNG mask.
    for w_ref, b_ref in ((w1_ref, b1_ref), (w2_ref, b2_ref), (w3_ref, b3_ref)):
        h = jnp.maximum(mdot(h, w_ref[...]) + b_ref[...], 0.0)
    logits = mdot(h, wo_ref[...]) + bo_ref[...]
    m = jnp.max(logits, axis=-1, keepdims=True)
    lse = m + jnp.log(jnp.sum(jnp.exp(logits - m), axis=-1, keepdims=True))
    o_ref[...] = (logits - lse).astype(o_ref.dtype)


# --------------------------------- wrapper ---------------------------------

def cnn_bilstm_forward(x_ncl, p, *, block_b=8):
    """x_ncl: (B, C, L) -- PyTorch NCL Conv1d convention. Returns (B, ncls) log-probs."""
    x = jnp.transpose(x_ncl, (0, 2, 1)).astype(jnp.float32)      # -> (B, L, C)
    B, L, C0 = x.shape
    assert L % 4 == 0, "two MaxPool1d(2) stages require L divisible by 4"
    ncls = p["b_out"].shape[-1]

    # Pad batch up to a multiple of the batch tile so every grid step is full
    # (pad rows produce finite garbage and are sliced off below).
    n_tiles = pl.cdiv(B, block_b)
    Bp = n_tiles * block_b
    if Bp != B:
        x = jnp.pad(x, ((0, Bp - B), (0, 0), (0, 0)))

    weights = (p["conv1_w"], p["conv1_b"], p["conv2_w"], p["conv2_b"],
               p["conv3_w"], p["conv3_b"], p["conv4_w"], p["conv4_b"],
               p["lstm_wx"], p["lstm_wh"], p["lstm_b"],
               p["w1"], p["b1"], p["w2"], p["b2"], p["w3"], p["b3"],
               p["w_out"], p["b_out"])

    def resident(a):
        # full-array block with a constant index map -> stays in VMEM across grid
        nd = a.ndim
        return pl.BlockSpec(a.shape, lambda b, _nd=nd: (0,) * _nd)

    out = pl.pallas_call(
        fused_cnn_bilstm_kernel,
        out_shape=jax.ShapeDtypeStruct((Bp, ncls), jnp.float32),
        grid=(n_tiles,),
        in_specs=[pl.BlockSpec((block_b, L, C0), lambda b: (b, 0, 0))]
                 + [resident(a) for a in weights],
        out_specs=pl.BlockSpec((block_b, ncls), lambda b: (b, 0)),
        compiler_params=pltpu.CompilerParams(
            # batch tiles are independent -> shard across TensorCores (v7x)
            dimension_semantics=("parallel",)),
    )(x, *weights)
    return out[:B]


# ------------------------------ parameters ---------------------------------

def init_params(key, *, num_channels, conv_channels, lstm_hidden, fc_dims,
                num_classes, input_length):
    keys = list(jax.random.split(key, 24))
    ki = iter(keys)

    def rnd(shape, scale=0.1):
        return (scale * jax.random.normal(next(ki), shape)).astype(jnp.float32)

    p = {}
    cins = [num_channels] + conv_channels[:-1]
    for n, (ci, co) in enumerate(zip(cins, conv_channels), start=1):
        # im2col layout: rows = [tap@(l-1) | tap@(l) | tap@(l+1)] x Cin
        p[f"conv{n}_w"] = rnd((3 * ci, co))
        p[f"conv{n}_b"] = rnd((1, co))

    H, C = lstm_hidden, conv_channels[-1]
    # fused input projection: columns = [fwd i,f,g,o | bwd i,f,g,o]
    p["lstm_wx"] = rnd((C, 8 * H))
    # block-diagonal recurrent weight: [Whf 0; 0 Whb]
    whf = rnd((H, 4 * H))
    whb = rnd((H, 4 * H))
    wh = jnp.zeros((2 * H, 8 * H), jnp.float32)
    wh = wh.at[0:H, 0:4 * H].set(whf)
    wh = wh.at[H:2 * H, 4 * H:8 * H].set(whb)
    p["lstm_wh"] = wh
    p["lstm_b"] = rnd((1, 8 * H))             # b_ih + b_hh, both directions

    dims = [(input_length // 4) * 2 * lstm_hidden] + list(fc_dims) + [num_classes]
    wnames = ["w1", "w2", "w3", "w_out"]
    bnames = ["b1", "b2", "b3", "b_out"]
    for wn, bn, (di, do) in zip(wnames, bnames, zip(dims[:-1], dims[1:])):
        p[wn] = rnd((di, do))
        p[bn] = rnd((1, do))
    return p


if __name__ == "__main__":
    # Small shapes consistent with the module's structure.
    B = 2
    num_channels = 8
    input_length = 16
    conv_channels = [8, 8, 16, 16]
    lstm_hidden = 16
    fc_dims = [32, 16, 8]
    num_classes = 2

    key = jax.random.PRNGKey(0)
    kp, kx = jax.random.split(key)
    params = init_params(kp, num_channels=num_channels,
                         conv_channels=conv_channels, lstm_hidden=lstm_hidden,
                         fc_dims=fc_dims, num_classes=num_classes,
                         input_length=input_length)
    x = jax.random.normal(kx, (B, num_channels, input_length), dtype=jnp.float32)

    out = jax.jit(cnn_bilstm_forward)(x, params)
    out = jax.block_until_ready(out)

    assert out.shape == (B, num_classes), out.shape
    assert bool(jnp.all(jnp.isfinite(out)))
    # log-softmax rows must sum to ~1 in probability space
    assert bool(jnp.all(jnp.abs(jnp.sum(jnp.exp(out), axis=-1) - 1.0) < 1e-3))
    print("KERNEL_OK")
</pallas_src>

<mosaic_0001>
module attributes {stable_mosaic.version = 11 : i64} {
  func.func @fused_cnn_bilstm_kernel(%arg0: i32, %arg1: memref<8x16x8xf32, #tpu.memory_space<vmem>>, %arg2: memref<24x8xf32, #tpu.memory_space<vmem>>, %arg3: memref<1x8xf32, #tpu.memory_space<vmem>>, %arg4: memref<24x8xf32, #tpu.memory_space<vmem>>, %arg5: memref<1x8xf32, #tpu.memory_space<vmem>>, %arg6: memref<24x16xf32, #tpu.memory_space<vmem>>, %arg7: memref<1x16xf32, #tpu.memory_space<vmem>>, %arg8: memref<48x16xf32, #tpu.memory_space<vmem>>, %arg9: memref<1x16xf32, #tpu.memory_space<vmem>>, %arg10: memref<16x128xf32, #tpu.memory_space<vmem>>, %arg11: memref<32x128xf32, #tpu.memory_space<vmem>>, %arg12: memref<1x128xf32, #tpu.memory_space<vmem>>, %arg13: memref<128x32xf32, #tpu.memory_space<vmem>>, %arg14: memref<1x32xf32, #tpu.memory_space<vmem>>, %arg15: memref<32x16xf32, #tpu.memory_space<vmem>>, %arg16: memref<1x16xf32, #tpu.memory_space<vmem>>, %arg17: memref<16x8xf32, #tpu.memory_space<vmem>>, %arg18: memref<1x8xf32, #tpu.memory_space<vmem>>, %arg19: memref<8x2xf32, #tpu.memory_space<vmem>>, %arg20: memref<1x2xf32, #tpu.memory_space<vmem>>, %arg21: memref<8x2xf32, #tpu.memory_space<vmem>>) attributes {dimension_semantics = [#tpu.dimension_semantics<parallel>], iteration_bounds = array<i64: 1>, scalar_prefetch = 0 : i64, scratch_operands = 0 : i64, tpu.core_type = #tpu.core_type<tc>, window_params = [{transform_indices = @transform_0, window_bounds = array<i64: 8, 16, 8>}, {pipeline_mode = #tpu.pipeline_mode<synchronous>, transform_indices = @transform_1, window_bounds = array<i64: 24, 8>}, {pipeline_mode = #tpu.pipeline_mode<synchronous>, transform_indices = @transform_2, window_bounds = array<i64: 1, 8>}, {pipeline_mode = #tpu.pipeline_mode<synchronous>, transform_indices = @transform_3, window_bounds = array<i64: 24, 8>}, {pipeline_mode = #tpu.pipeline_mode<synchronous>, transform_indices = @transform_4, window_bounds = array<i64: 1, 8>}, {pipeline_mode = #tpu.pipeline_mode<synchronous>, transform_indices = @transform_5, window_bounds = array<i64: 24, 16>}, {pipeline_mode = #tpu.pipeline_mode<synchronous>, transform_indices = @transform_6, window_bounds = array<i64: 1, 16>}, {pipeline_mode = #tpu.pipeline_mode<synchronous>, transform_indices = @transform_7, window_bounds = array<i64: 48, 16>}, {pipeline_mode = #tpu.pipeline_mode<synchronous>, transform_indices = @transform_8, window_bounds = array<i64: 1, 16>}, {pipeline_mode = #tpu.pipeline_mode<synchronous>, transform_indices = @transform_9, window_bounds = array<i64: 16, 128>}, {pipeline_mode = #tpu.pipeline_mode<synchronous>, transform_indices = @transform_10, window_bounds = array<i64: 32, 128>}, {pipeline_mode = #tpu.pipeline_mode<synchronous>, transform_indices = @transform_11, window_bounds = array<i64: 1, 128>}, {pipeline_mode = #tpu.pipeline_mode<synchronous>, transform_indices = @transform_12, window_bounds = array<i64: 128, 32>}, {pipeline_mode = #tpu.pipeline_mode<synchronous>, transform_indices = @transform_13, window_bounds = array<i64: 1, 32>}, {pipeline_mode = #tpu.pipeline_mode<synchronous>, transform_indices = @transform_14, window_bounds = array<i64: 32, 16>}, {pipeline_mode = #tpu.pipeline_mode<synchronous>, transform_indices = @transform_15, window_bounds = array<i64: 1, 16>}, {pipeline_mode = #tpu.pipeline_mode<synchronous>, transform_indices = @transform_16, window_bounds = array<i64: 16, 8>}, {pipeline_mode = #tpu.pipeline_mode<synchronous>, transform_indices = @transform_17, window_bounds = array<i64: 1, 8>}, {pipeline_mode = #tpu.pipeline_mode<synchronous>, transform_indices = @transform_18, window_bounds = array<i64: 8, 2>}, {pipeline_mode = #tpu.pipeline_mode<synchronous>, transform_indices = @transform_19, window_bounds = array<i64: 1, 2>}, {transform_indices = @transform_20, window_bounds = array<i64: 8, 2>}]} {
    %c0 = arith.constant 0 : index
    %c0_0 = arith.constant 0 : index
    %c0_1 = arith.constant 0 : index
    %0 = vector.load %arg1[%c0, %c0_0, %c0_1] : memref<8x16x8xf32, #tpu.memory_space<vmem>>, vector<8x16x8xf32>
    %cst = arith.constant 0.000000e+00 : f32
    %1 = vector.broadcast %cst : f32 to vector<8x1x8xf32>
    %2 = vector.extract_strided_slice %0 {offsets = [0, 0, 0], sizes = [8, 15, 8], strides = [1, 1, 1]} : vector<8x16x8xf32> to vector<8x15x8xf32>
    %3 = tpu.concatenate %1, %2 in 1 : vector<8x1x8xf32>, vector<8x15x8xf32> -> vector<8x16x8xf32>
    %4 = vector.extract_strided_slice %0 {offsets = [0, 1, 0], sizes = [8, 15, 8], strides = [1, 1, 1]} : vector<8x16x8xf32> to vector<8x15x8xf32>
    %5 = tpu.concatenate %4, %1 in 1 : vector<8x15x8xf32>, vector<8x1x8xf32> -> vector<8x16x8xf32>
    %6 = tpu.concatenate %3, %0, %5 in 2 : vector<8x16x8xf32>, vector<8x16x8xf32>, vector<8x16x8xf32> -> vector<8x16x24xf32>
    %7 = vector.shape_cast %6 : vector<8x16x24xf32> to vector<128x24xf32>
    %c0_2 = arith.constant 0 : index
    %c0_3 = arith.constant 0 : index
    %8 = vector.load %arg2[%c0_2, %c0_3] : memref<24x8xf32, #tpu.memory_space<vmem>>, vector<24x8xf32>
    %cst_4 = arith.constant dense<0.000000e+00> : vector<128x8xf32>
    %9 = tpu.matmul %7, %8, %cst_4 {dimension_numbers = #tpu.dot_dimension_numbers<[1], [0], [0], [1], [0, 0, 1, 1], [], []>} : vector<128x24xf32>, vector<24x8xf32>, vector<128x8xf32> -> vector<128x8xf32>
    %c0_5 = arith.constant 0 : index
    %c0_6 = arith.constant 0 : index
    %10 = vector.load %arg3[%c0_5, %c0_6] : memref<1x8xf32, #tpu.memory_space<vmem>>, vector<1x8xf32>
    %11 = vector.broadcast %10 : vector<1x8xf32> to vector<128x8xf32>
    %12 = arith.addf %9, %11 : vector<128x8xf32>
    %cst_7 = arith.constant 0.000000e+00 : f32
    %13 = vector.broadcast %cst_7 : f32 to vector<128x8xf32>
    %14 = arith.maximumf %12, %13 : vector<128x8xf32>
    %15 = vector.shape_cast %14 : vector<128x8xf32> to vector<8x16x8xf32>
    %16 = vector.extract_strided_slice %15 {offsets = [0, 0, 0], sizes = [8, 1, 8], strides = [1, 1, 1]} : vector<8x16x8xf32> to vector<8x1x8xf32>
    %17 = vector.extract_strided_slice %15 {offsets = [0, 1, 0], sizes = [8, 1, 8], strides = [1, 1, 1]} : vector<8x16x8xf32> to vector<8x1x8xf32>
    %18 = arith.maximumf %16, %17 : vector<8x1x8xf32>
    %19 = vector.extract_strided_slice %15 {offsets = [0, 2, 0], sizes = [8, 1, 8], strides = [1, 1, 1]} : vector<8x16x8xf32> to vector<8x1x8xf32>
    %20 = vector.extract_strided_slice %15 {offsets = [0, 3, 0], sizes = [8, 1, 8], strides = [1, 1, 1]} : vector<8x16x8xf32> to vector<8x1x8xf32>
    %21 = arith.maximumf %19, %20 : vector<8x1x8xf32>
    %22 = vector.extract_strided_slice %15 {offsets = [0, 4, 0], sizes = [8, 1, 8], strides = [1, 1, 1]} : vector<8x16x8xf32> to vector<8x1x8xf32>
    %23 = vector.extract_strided_slice %15 {offsets = [0, 5, 0], sizes = [8, 1, 8], strides = [1, 1, 1]} : vector<8x16x8xf32> to vector<8x1x8xf32>
    %24 = arith.maximumf %22, %23 : vector<8x1x8xf32>
    %25 = vector.extract_strided_slice %15 {offsets = [0, 6, 0], sizes = [8, 1, 8], strides = [1, 1, 1]} : vector<8x16x8xf32> to vector<8x1x8xf32>
    %26 = vector.extract_strided_slice %15 {offsets = [0, 7, 0], sizes = [8, 1, 8], strides = [1, 1, 1]} : vector<8x16x8xf32> to vector<8x1x8xf32>
    %27 = arith.maximumf %25, %26 : vector<8x1x8xf32>
    %28 = vector.extract_strided_slice %15 {offsets = [0, 8, 0], sizes = [8, 1, 8], strides = [1, 1, 1]} : vector<8x16x8xf32> to vector<8x1x8xf32>
    %29 = vector.extract_strided_slice %15 {offsets = [0, 9, 0], sizes = [8, 1, 8], strides = [1, 1, 1]} : vector<8x16x8xf32> to vector<8x1x8xf32>
    %30 = arith.maximumf %28, %29 : vector<8x1x8xf32>
    %31 = vector.extract_strided_slice %15 {offsets = [0, 10, 0], sizes = [8, 1, 8], strides = [1, 1, 1]} : vector<8x16x8xf32> to vector<8x1x8xf32>
    %32 = vector.extract_strided_slice %15 {offsets = [0, 11, 0], sizes = [8, 1, 8], strides = [1, 1, 1]} : vector<8x16x8xf32> to vector<8x1x8xf32>
    %33 = arith.maximumf %31, %32 : vector<8x1x8xf32>
    %34 = vector.extract_strided_slice %15 {offsets = [0, 12, 0], sizes = [8, 1, 8], strides = [1, 1, 1]} : vector<8x16x8xf32> to vector<8x1x8xf32>
    %35 = vector.extract_strided_slice %15 {offsets = [0, 13, 0], sizes = [8, 1, 8], strides = [1, 1, 1]} : vector<8x16x8xf32> to vector<8x1x8xf32>
    %36 = arith.maximumf %34, %35 : vector<8x1x8xf32>
    %37 = vector.extract_strided_slice %15 {offsets = [0, 14, 0], sizes = [8, 1, 8], strides = [1, 1, 1]} : vector<8x16x8xf32> to vector<8x1x8xf32>
    %38 = vector.extract_strided_slice %15 {offsets = [0, 15, 0], sizes = [8, 1, 8], strides = [1, 1, 1]} : vector<8x16x8xf32> to vector<8x1x8xf32>
    %39 = arith.maximumf %37, %38 : vector<8x1x8xf32>
    %40 = tpu.concatenate %18, %21, %24, %27, %30, %33, %36, %39 in 1 : vector<8x1x8xf32>, vector<8x1x8xf32>, vector<8x1x8xf32>, vector<8x1x8xf32>, vector<8x1x8xf32>, vector<8x1x8xf32>, vector<8x1x8xf32>, vector<8x1x8xf32> -> vector<8x8x8xf32>
    %cst_8 = arith.constant 0.000000e+00 : f32
    %41 = vector.broadcast %cst_8 : f32 to vector<8x1x8xf32>
    %42 = vector.extract_strided_slice %40 {offsets = [0, 0, 0], sizes = [8, 7, 8], strides = [1, 1, 1]} : vector<8x8x8xf32> to vector<8x7x8xf32>
    %43 = tpu.concatenate %41, %42 in 1 : vector<8x1x8xf32>, vector<8x7x8xf32> -> vector<8x8x8xf32>
    %44 = vector.extract_strided_slice %40 {offsets = [0, 1, 0], sizes = [8, 7, 8], strides = [1, 1, 1]} : vector<8x8x8xf32> to vector<8x7x8xf32>
    %45 = tpu.concatenate %44, %41 in 1 : vector<8x7x8xf32>, vector<8x1x8xf32> -> vector<8x8x8xf32>
    %46 = tpu.concatenate %43, %40, %45 in 2 : vector<8x8x8xf32>, vector<8x8x8xf32>, vector<8x8x8xf32> -> vector<8x8x24xf32>
    %47 = vector.shape_cast %46 : vector<8x8x24xf32> to vector<64x24xf32>
    %c0_9 = arith.constant 0 : index
    %c0_10 = arith.constant 0 : index
    %48 = vector.load %arg4[%c0_9, %c0_10] : memref<24x8xf32, #tpu.memory_space<vmem>>, vector<24x8xf32>
    %cst_11 = arith.constant dense<0.000000e+00> : vector<64x8xf32>
    %49 = tpu.matmul %47, %48, %cst_11 {dimension_numbers = #tpu.dot_dimension_numbers<[1], [0], [0], [1], [0, 0, 1, 1], [], []>} : vector<64x24xf32>, vector<24x8xf32>, vector<64x8xf32> -> vector<64x8xf32>
    %c0_12 = arith.constant 0 : index
    %c0_13 = arith.constant 0 : index
    %50 = vector.load %arg5[%c0_12, %c0_13] : memref<1x8xf32, #tpu.memory_space<vmem>>, vector<1x8xf32>
    %51 = vector.broadcast %50 : vector<1x8xf32> to vector<64x8xf32>
    %52 = arith.addf %49, %51 : vector<64x8xf32>
    %cst_14 = arith.constant 0.000000e+00 : f32
    %53 = vector.broadcast %cst_14 : f32 to vector<64x8xf32>
    %54 = arith.maximumf %52, %53 : vector<64x8xf32>
    %55 = vector.shape_cast %54 : vector<64x8xf32> to vector<8x8x8xf32>
    %cst_15 = arith.constant 0.000000e+00 : f32
    %56 = vector.broadcast %cst_15 : f32 to vector<8x1x8xf32>
    %57 = vector.extract_strided_slice %55 {offsets = [0, 0, 0], sizes = [8, 7, 8], strides = [1, 1, 1]} : vector<8x8x8xf32> to vector<8x7x8xf32>
    %58 = tpu.concatenate %56, %57 in 1 : vector<8x1x8xf32>, vector<8x7x8xf32> -> vector<8x8x8xf32>
    %59 = vector.extract_strided_slice %55 {offsets = [0, 1, 0], sizes = [8, 7, 8], strides = [1, 1, 1]} : vector<8x8x8xf32> to vector<8x7x8xf32>
    %60 = tpu.concatenate %59, %56 in 1 : vector<8x7x8xf32>, vector<8x1x8xf32> -> vector<8x8x8xf32>
    %61 = tpu.concatenate %58, %55, %60 in 2 : vector<8x8x8xf32>, vector<8x8x8xf32>, vector<8x8x8xf32> -> vector<8x8x24xf32>
    %62 = vector.shape_cast %61 : vector<8x8x24xf32> to vector<64x24xf32>
    %c0_16 = arith.constant 0 : index
    %c0_17 = arith.constant 0 : index
    %63 = vector.load %arg6[%c0_16, %c0_17] : memref<24x16xf32, #tpu.memory_space<vmem>>, vector<24x16xf32>
    %cst_18 = arith.constant dense<0.000000e+00> : vector<64x16xf32>
    %64 = tpu.matmul %62, %63, %cst_18 {dimension_numbers = #tpu.dot_dimension_numbers<[1], [0], [0], [1], [0, 0, 1, 1], [], []>} : vector<64x24xf32>, vector<24x16xf32>, vector<64x16xf32> -> vector<64x16xf32>
    %c0_19 = arith.constant 0 : index
    %c0_20 = arith.constant 0 : index
    %65 = vector.load %arg7[%c0_19, %c0_20] : memref<1x16xf32, #tpu.memory_space<vmem>>, vector<1x16xf32>
    %66 = vector.broadcast %65 : vector<1x16xf32> to vector<64x16xf32>
    %67 = arith.addf %64, %66 : vector<64x16xf32>
    %cst_21 = arith.constant 0.000000e+00 : f32
    %68 = vector.broadcast %cst_21 : f32 to vector<64x16xf32>
    %69 = arith.maximumf %67, %68 : vector<64x16xf32>
    %70 = vector.shape_cast %69 : vector<64x16xf32> to vector<8x8x16xf32>
    %cst_22 = arith.constant 0.000000e+00 : f32
    %71 = vector.broadcast %cst_22 : f32 to vector<8x1x16xf32>
    %72 = vector.extract_strided_slice %70 {offsets = [0, 0, 0], sizes = [8, 7, 16], strides = [1, 1, 1]} : vector<8x8x16xf32> to vector<8x7x16xf32>
    %73 = tpu.concatenate %71, %72 in 1 : vector<8x1x16xf32>, vector<8x7x16xf32> -> vector<8x8x16xf32>
    %74 = vector.extract_strided_slice %70 {offsets = [0, 1, 0], sizes = [8, 7, 16], strides = [1, 1, 1]} : vector<8x8x16xf32> to vector<8x7x16xf32>
    %75 = tpu.concatenate %74, %71 in 1 : vector<8x7x16xf32>, vector<8x1x16xf32> -> vector<8x8x16xf32>
    %76 = tpu.concatenate %73, %70, %75 in 2 : vector<8x8x16xf32>, vector<8x8x16xf32>, vector<8x8x16xf32> -> vector<8x8x48xf32>
    %77 = vector.shape_cast %76 : vector<8x8x48xf32> to vector<64x48xf32>
    %c0_23 = arith.constant 0 : index
    %c0_24 = arith.constant 0 : index
    %78 = vector.load %arg8[%c0_23, %c0_24] : memref<48x16xf32, #tpu.memory_space<vmem>>, vector<48x16xf32>
    %cst_25 = arith.constant dense<0.000000e+00> : vector<64x16xf32>
    %79 = tpu.matmul %77, %78, %cst_25 {dimension_numbers = #tpu.dot_dimension_numbers<[1], [0], [0], [1], [0, 0, 1, 1], [], []>} : vector<64x48xf32>, vector<48x16xf32>, vector<64x16xf32> -> vector<64x16xf32>
    %c0_26 = arith.constant 0 : index
    %c0_27 = arith.constant 0 : index
    %80 = vector.load %arg9[%c0_26, %c0_27] : memref<1x16xf32, #tpu.memory_space<vmem>>, vector<1x16xf32>
    %81 = vector.broadcast %80 : vector<1x16xf32> to vector<64x16xf32>
    %82 = arith.addf %79, %81 : vector<64x16xf32>
    %cst_28 = arith.constant 0.000000e+00 : f32
    %83 = vector.broadcast %cst_28 : f32 to vector<64x16xf32>
    %84 = arith.maximumf %82, %83 : vector<64x16xf32>
    %85 = vector.shape_cast %84 : vector<64x16xf32> to vector<8x8x16xf32>
    %86 = vector.extract_strided_slice %85 {offsets = [0, 0, 0], sizes = [8, 1, 16], strides = [1, 1, 1]} : vector<8x8x16xf32> to vector<8x1x16xf32>
    %87 = vector.extract_strided_slice %85 {offsets = [0, 1, 0], sizes = [8, 1, 16], strides = [1, 1, 1]} : vector<8x8x16xf32> to vector<8x1x16xf32>
    %88 = arith.maximumf %86, %87 : vector<8x1x16xf32>
    %89 = vector.extract_strided_slice %85 {offsets = [0, 2, 0], sizes = [8, 1, 16], strides = [1, 1, 1]} : vector<8x8x16xf32> to vector<8x1x16xf32>
    %90 = vector.extract_strided_slice %85 {offsets = [0, 3, 0], sizes = [8, 1, 16], strides = [1, 1, 1]} : vector<8x8x16xf32> to vector<8x1x16xf32>
    %91 = arith.maximumf %89, %90 : vector<8x1x16xf32>
    %92 = vector.extract_strided_slice %85 {offsets = [0, 4, 0], sizes = [8, 1, 16], strides = [1, 1, 1]} : vector<8x8x16xf32> to vector<8x1x16xf32>
    %93 = vector.extract_strided_slice %85 {offsets = [0, 5, 0], sizes = [8, 1, 16], strides = [1, 1, 1]} : vector<8x8x16xf32> to vector<8x1x16xf32>
    %94 = arith.maximumf %92, %93 : vector<8x1x16xf32>
    %95 = vector.extract_strided_slice %85 {offsets = [0, 6, 0], sizes = [8, 1, 16], strides = [1, 1, 1]} : vector<8x8x16xf32> to vector<8x1x16xf32>
    %96 = vector.extract_strided_slice %85 {offsets = [0, 7, 0], sizes = [8, 1, 16], strides = [1, 1, 1]} : vector<8x8x16xf32> to vector<8x1x16xf32>
    %97 = arith.maximumf %95, %96 : vector<8x1x16xf32>
    %98 = tpu.concatenate %88, %91, %94, %97 in 1 : vector<8x1x16xf32>, vector<8x1x16xf32>, vector<8x1x16xf32>, vector<8x1x16xf32> -> vector<8x4x16xf32>
    %99 = vector.shape_cast %98 : vector<8x4x16xf32> to vector<32x16xf32>
    %c0_29 = arith.constant 0 : index
    %c0_30 = arith.constant 0 : index
    %100 = vector.load %arg10[%c0_29, %c0_30] : memref<16x128xf32, #tpu.memory_space<vmem>>, vector<16x128xf32>
    %cst_31 = arith.constant dense<0.000000e+00> : vector<32x128xf32>
    %101 = tpu.matmul %99, %100, %cst_31 {dimension_numbers = #tpu.dot_dimension_numbers<[1], [0], [0], [1], [0, 0, 1, 1], [], []>} : vector<32x16xf32>, vector<16x128xf32>, vector<32x128xf32> -> vector<32x128xf32>
    %c0_32 = arith.constant 0 : index
    %c0_33 = arith.constant 0 : index
    %102 = vector.load %arg12[%c0_32, %c0_33] : memref<1x128xf32, #tpu.memory_space<vmem>>, vector<1x128xf32>
    %103 = vector.broadcast %102 : vector<1x128xf32> to vector<32x128xf32>
    %104 = arith.addf %101, %103 : vector<32x128xf32>
    %105 = vector.shape_cast %104 : vector<32x128xf32> to vector<8x4x128xf32>
    %c0_34 = arith.constant 0 : index
    %c0_35 = arith.constant 0 : index
    %106 = vector.load %arg11[%c0_34, %c0_35] : memref<32x128xf32, #tpu.memory_space<vmem>>, vector<32x128xf32>
    %cst_36 = arith.constant 0.000000e+00 : f32
    %107 = vector.broadcast %cst_36 : f32 to vector<8x16xf32>
    %cst_37 = arith.constant 0.000000e+00 : f32
    %108 = vector.broadcast %cst_37 : f32 to vector<8x16xf32>
    %cst_38 = arith.constant 0.000000e+00 : f32
    %109 = vector.broadcast %cst_38 : f32 to vector<8x16xf32>
    %cst_39 = arith.constant 0.000000e+00 : f32
    %110 = vector.broadcast %cst_39 : f32 to vector<8x16xf32>
    %111 = tpu.concatenate %107, %108 in 1 : vector<8x16xf32>, vector<8x16xf32> -> vector<8x32xf32>
    %cst_40 = arith.constant dense<0.000000e+00> : vector<8x128xf32>
    %112 = tpu.matmul %111, %106, %cst_40 {dimension_numbers = #tpu.dot_dimension_numbers<[1], [0], [0], [1], [0, 0, 1, 1], [], []>} : vector<8x32xf32>, vector<32x128xf32>, vector<8x128xf32> -> vector<8x128xf32>
    %113 = vector.extract_strided_slice %105 {offsets = [0, 0, 0], sizes = [8, 1, 64], strides = [1, 1, 1]} : vector<8x4x128xf32> to vector<8x1x64xf32>
    %114 = vector.shape_cast %113 : vector<8x1x64xf32> to vector<8x64xf32>
    %115 = vector.extract_strided_slice %112 {offsets = [0, 0], sizes = [8, 64], strides = [1, 1]} : vector<8x128xf32> to vector<8x64xf32>
    %116 = arith.addf %114, %115 : vector<8x64xf32>
    %117 = vector.extract_strided_slice %105 {offsets = [0, 3, 64], sizes = [8, 1, 64], strides = [1, 1, 1]} : vector<8x4x128xf32> to vector<8x1x64xf32>
    %118 = vector.shape_cast %117 : vector<8x1x64xf32> to vector<8x64xf32>
    %119 = vector.extract_strided_slice %112 {offsets = [0, 64], sizes = [8, 64], strides = [1, 1]} : vector<8x128xf32> to vector<8x64xf32>
    %120 = arith.addf %118, %119 : vector<8x64xf32>
    %121 = vector.extract_strided_slice %116 {offsets = [0, 0], sizes = [8, 16], strides = [1, 1]} : vector<8x64xf32> to vector<8x16xf32>
    %122 = arith.negf %121 : vector<8x16xf32>
    %123 = math.exp %122 : vector<8x16xf32>
    %cst_41 = arith.constant 1.000000e+00 : f32
    %124 = vector.broadcast %cst_41 : f32 to vector<8x16xf32>
    %125 = arith.addf %124, %123 : vector<8x16xf32>
    %126 = arith.divf %124, %125 : vector<8x16xf32>
    %127 = vector.extract_strided_slice %116 {offsets = [0, 16], sizes = [8, 16], strides = [1, 1]} : vector<8x64xf32> to vector<8x16xf32>
    %128 = arith.negf %127 : vector<8x16xf32>
    %129 = math.exp %128 : vector<8x16xf32>
    %cst_42 = arith.constant 1.000000e+00 : f32
    %130 = vector.broadcast %cst_42 : f32 to vector<8x16xf32>
    %131 = arith.addf %130, %129 : vector<8x16xf32>
    %132 = arith.divf %130, %131 : vector<8x16xf32>
    %133 = vector.extract_strided_slice %116 {offsets = [0, 32], sizes = [8, 16], strides = [1, 1]} : vector<8x64xf32> to vector<8x16xf32>
    %134 = math.tanh %133 : vector<8x16xf32>
    %135 = vector.extract_strided_slice %116 {offsets = [0, 48], sizes = [8, 16], strides = [1, 1]} : vector<8x64xf32> to vector<8x16xf32>
    %136 = arith.negf %135 : vector<8x16xf32>
    %137 = math.exp %136 : vector<8x16xf32>
    %cst_43 = arith.constant 1.000000e+00 : f32
    %138 = vector.broadcast %cst_43 : f32 to vector<8x16xf32>
    %139 = arith.addf %138, %137 : vector<8x16xf32>
    %140 = arith.divf %138, %139 : vector<8x16xf32>
    %141 = arith.mulf %132, %109 : vector<8x16xf32>
    %142 = arith.mulf %126, %134 : vector<8x16xf32>
    %143 = arith.addf %141, %142 : vector<8x16xf32>
    %144 = math.tanh %143 : vector<8x16xf32>
    %145 = arith.mulf %140, %144 : vector<8x16xf32>
    %146 = vector.extract_strided_slice %120 {offsets = [0, 0], sizes = [8, 16], strides = [1, 1]} : vector<8x64xf32> to vector<8x16xf32>
    %147 = arith.negf %146 : vector<8x16xf32>
    %148 = math.exp %147 : vector<8x16xf32>
    %cst_44 = arith.constant 1.000000e+00 : f32
    %149 = vector.broadcast %cst_44 : f32 to vector<8x16xf32>
    %150 = arith.addf %149, %148 : vector<8x16xf32>
    %151 = arith.divf %149, %150 : vector<8x16xf32>
    %152 = vector.extract_strided_slice %120 {offsets = [0, 16], sizes = [8, 16], strides = [1, 1]} : vector<8x64xf32> to vector<8x16xf32>
    %153 = arith.negf %152 : vector<8x16xf32>
    %154 = math.exp %153 : vector<8x16xf32>
    %cst_45 = arith.constant 1.000000e+00 : f32
    %155 = vector.broadcast %cst_45 : f32 to vector<8x16xf32>
    %156 = arith.addf %155, %154 : vector<8x16xf32>
    %157 = arith.divf %155, %156 : vector<8x16xf32>
    %158 = vector.extract_strided_slice %120 {offsets = [0, 32], sizes = [8, 16], strides = [1, 1]} : vector<8x64xf32> to vector<8x16xf32>
    %159 = math.tanh %158 : vector<8x16xf32>
    %160 = vector.extract_strided_slice %120 {offsets = [0, 48], sizes = [8, 16], strides = [1, 1]} : vector<8x64xf32> to vector<8x16xf32>
    %161 = arith.negf %160 : vector<8x16xf32>
    %162 = math.exp %161 : vector<8x16xf32>
    %cst_46 = arith.constant 1.000000e+00 : f32
    %163 = vector.broadcast %cst_46 : f32 to vector<8x16xf32>
    %164 = arith.addf %163, %162 : vector<8x16xf32>
    %165 = arith.divf %163, %164 : vector<8x16xf32>
    %166 = arith.mulf %157, %110 : vector<8x16xf32>
    %167 = arith.mulf %151, %159 : vector<8x16xf32>
    %168 = arith.addf %166, %167 : vector<8x16xf32>
    %169 = math.tanh %168 : vector<8x16xf32>
    %170 = arith.mulf %165, %169 : vector<8x16xf32>
    %171 = tpu.concatenate %145, %170 in 1 : vector<8x16xf32>, vector<8x16xf32> -> vector<8x32xf32>
    %cst_47 = arith.constant dense<0.000000e+00> : vector<8x128xf32>
    %172 = tpu.matmul %171, %106, %cst_47 {dimension_numbers = #tpu.dot_dimension_numbers<[1], [0], [0], [1], [0, 0, 1, 1], [], []>} : vector<8x32xf32>, vector<32x128xf32>, vector<8x128xf32> -> vector<8x128xf32>
    %173 = vector.extract_strided_slice %105 {offsets = [0, 1, 0], sizes = [8, 1, 64], strides = [1, 1, 1]} : vector<8x4x128xf32> to vector<8x1x64xf32>
    %174 = vector.shape_cast %173 : vector<8x1x64xf32> to vector<8x64xf32>
    %175 = vector.extract_strided_slice %172 {offsets = [0, 0], sizes = [8, 64], strides = [1, 1]} : vector<8x128xf32> to vector<8x64xf32>
    %176 = arith.addf %174, %175 : vector<8x64xf32>
    %177 = vector.extract_strided_slice %105 {offsets = [0, 2, 64], sizes = [8, 1, 64], strides = [1, 1, 1]} : vector<8x4x128xf32> to vector<8x1x64xf32>
    %178 = vector.shape_cast %177 : vector<8x1x64xf32> to vector<8x64xf32>
    %179 = vector.extract_strided_slice %172 {offsets = [0, 64], sizes = [8, 64], strides = [1, 1]} : vector<8x128xf32> to vector<8x64xf32>
    %180 = arith.addf %178, %179 : vector<8x64xf32>
    %181 = vector.extract_strided_slice %176 {offsets = [0, 0], sizes = [8, 16], strides = [1, 1]} : vector<8x64xf32> to vector<8x16xf32>
    %182 = arith.negf %181 : vector<8x16xf32>
    %183 = math.exp %182 : vector<8x16xf32>
    %cst_48 = arith.constant 1.000000e+00 : f32
    %184 = vector.broadcast %cst_48 : f32 to vector<8x16xf32>
    %185 = arith.addf %184, %183 : vector<8x16xf32>
    %186 = arith.divf %184, %185 : vector<8x16xf32>
    %187 = vector.extract_strided_slice %176 {offsets = [0, 16], sizes = [8, 16], strides = [1, 1]} : vector<8x64xf32> to vector<8x16xf32>
    %188 = arith.negf %187 : vector<8x16xf32>
    %189 = math.exp %188 : vector<8x16xf32>
    %cst_49 = arith.constant 1.000000e+00 : f32
    %190 = vector.broadcast %cst_49 : f32 to vector<8x16xf32>
    %191 = arith.addf %190, %189 : vector<8x16xf32>
    %192 = arith.divf %190, %191 : vector<8x16xf32>
    %193 = vector.extract_strided_slice %176 {offsets = [0, 32], sizes = [8, 16], strides = [1, 1]} : vector<8x64xf32> to vector<8x16xf32>
    %194 = math.tanh %193 : vector<8x16xf32>
    %195 = vector.extract_strided_slice %176 {offsets = [0, 48], sizes = [8, 16], strides = [1, 1]} : vector<8x64xf32> to vector<8x16xf32>
    %196 = arith.negf %195 : vector<8x16xf32>
    %197 = math.exp %196 : vector<8x16xf32>
    %cst_50 = arith.constant 1.000000e+00 : f32
    %198 = vector.broadcast %cst_50 : f32 to vector<8x16xf32>
    %199 = arith.addf %198, %197 : vector<8x16xf32>
    %200 = arith.divf %198, %199 : vector<8x16xf32>
    %201 = arith.mulf %192, %143 : vector<8x16xf32>
    %202 = arith.mulf %186, %194 : vector<8x16xf32>
    %203 = arith.addf %201, %202 : vector<8x16xf32>
    %204 = math.tanh %203 : vector<8x16xf32>
    %205 = arith.mulf %200, %204 : vector<8x16xf32>
    %206 = vector.extract_strided_slice %180 {offsets = [0, 0], sizes = [8, 16], strides = [1, 1]} : vector<8x64xf32> to vector<8x16xf32>
    %207 = arith.negf %206 : vector<8x16xf32>
    %208 = math.exp %207 : vector<8x16xf32>
    %cst_51 = arith.constant 1.000000e+00 : f32
    %209 = vector.broadcast %cst_51 : f32 to vector<8x16xf32>
    %210 = arith.addf %209, %208 : vector<8x16xf32>
    %211 = arith.divf %209, %210 : vector<8x16xf32>
    %212 = vector.extract_strided_slice %180 {offsets = [0, 16], sizes = [8, 16], strides = [1, 1]} : vector<8x64xf32> to vector<8x16xf32>
    %213 = arith.negf %212 : vector<8x16xf32>
    %214 = math.exp %213 : vector<8x16xf32>
    %cst_52 = arith.constant 1.000000e+00 : f32
    %215 = vector.broadcast %cst_52 : f32 to vector<8x16xf32>
    %216 = arith.addf %215, %214 : vector<8x16xf32>
    %217 = arith.divf %215, %216 : vector<8x16xf32>
    %218 = vector.extract_strided_slice %180 {offsets = [0, 32], sizes = [8, 16], strides = [1, 1]} : vector<8x64xf32> to vector<8x16xf32>
    %219 = math.tanh %218 : vector<8x16xf32>
    %220 = vector.extract_strided_slice %180 {offsets = [0, 48], sizes = [8, 16], strides = [1, 1]} : vector<8x64xf32> to vector<8x16xf32>
    %221 = arith.negf %220 : vector<8x16xf32>
    %222 = math.exp %221 : vector<8x16xf32>
    %cst_53 = arith.constant 1.000000e+00 : f32
    %223 = vector.broadcast %cst_53 : f32 to vector<8x16xf32>
    %224 = arith.addf %223, %222 : vector<8x16xf32>
    %225 = arith.divf %223, %224 : vector<8x16xf32>
    %226 = arith.mulf %217, %168 : vector<8x16xf32>
    %227 = arith.mulf %211, %219 : vector<8x16xf32>
    %228 = arith.addf %226, %227 : vector<8x16xf32>
    %229 = math.tanh %228 : vector<8x16xf32>
    %230 = arith.mulf %225, %229 : vector<8x16xf32>
    %231 = tpu.concatenate %205, %230 in 1 : vector<8x16xf32>, vector<8x16xf32> -> vector<8x32xf32>
    %cst_54 = arith.constant dense<0.000000e+00> : vector<8x128xf32>
    %232 = tpu.matmul %231, %106, %cst_54 {dimension_numbers = #tpu.dot_dimension_numbers<[1], [0], [0], [1], [0, 0, 1, 1], [], []>} : vector<8x32xf32>, vector<32x128xf32>, vector<8x128xf32> -> vector<8x128xf32>
    %233 = vector.extract_strided_slice %105 {offsets = [0, 2, 0], sizes = [8, 1, 64], strides = [1, 1, 1]} : vector<8x4x128xf32> to vector<8x1x64xf32>
    %234 = vector.shape_cast %233 : vector<8x1x64xf32> to vector<8x64xf32>
    %235 = vector.extract_strided_slice %232 {offsets = [0, 0], sizes = [8, 64], strides = [1, 1]} : vector<8x128xf32> to vector<8x64xf32>
    %236 = arith.addf %234, %235 : vector<8x64xf32>
    %237 = vector.extract_strided_slice %105 {offsets = [0, 1, 64], sizes = [8, 1, 64], strides = [1, 1, 1]} : vector<8x4x128xf32> to vector<8x1x64xf32>
    %238 = vector.shape_cast %237 : vector<8x1x64xf32> to vector<8x64xf32>
    %239 = vector.extract_strided_slice %232 {offsets = [0, 64], sizes = [8, 64], strides = [1, 1]} : vector<8x128xf32> to vector<8x64xf32>
    %240 = arith.addf %238, %239 : vector<8x64xf32>
    %241 = vector.extract_strided_slice %236 {offsets = [0, 0], sizes = [8, 16], strides = [1, 1]} : vector<8x64xf32> to vector<8x16xf32>
    %242 = arith.negf %241 : vector<8x16xf32>
    %243 = math.exp %242 : vector<8x16xf32>
    %cst_55 = arith.constant 1.000000e+00 : f32
    %244 = vector.broadcast %cst_55 : f32 to vector<8x16xf32>
    %245 = arith.addf %244, %243 : vector<8x16xf32>
    %246 = arith.divf %244, %245 : vector<8x16xf32>
    %247 = vector.extract_strided_slice %236 {offsets = [0, 16], sizes = [8, 16], strides = [1, 1]} : vector<8x64xf32> to vector<8x16xf32>
    %248 = arith.negf %247 : vector<8x16xf32>
    %249 = math.exp %248 : vector<8x16xf32>
    %cst_56 = arith.constant 1.000000e+00 : f32
    %250 = vector.broadcast %cst_56 : f32 to vector<8x16xf32>
    %251 = arith.addf %250, %249 : vector<8x16xf32>
    %252 = arith.divf %250, %251 : vector<8x16xf32>
    %253 = vector.extract_strided_slice %236 {offsets = [0, 32], sizes = [8, 16], strides = [1, 1]} : vector<8x64xf32> to vector<8x16xf32>
    %254 = math.tanh %253 : vector<8x16xf32>
    %255 = vector.extract_strided_slice %236 {offsets = [0, 48], sizes = [8, 16], strides = [1, 1]} : vector<8x64xf32> to vector<8x16xf32>
    %256 = arith.negf %255 : vector<8x16xf32>
    %257 = math.exp %256 : vector<8x16xf32>
    %cst_57 = arith.constant 1.000000e+00 : f32
    %258 = vector.broadcast %cst_57 : f32 to vector<8x16xf32>
    %259 = arith.addf %258, %257 : vector<8x16xf32>
    %260 = arith.divf %258, %259 : vector<8x16xf32>
    %261 = arith.mulf %252, %203 : vector<8x16xf32>
    %262 = arith.mulf %246, %254 : vector<8x16xf32>
    %263 = arith.addf %261, %262 : vector<8x16xf32>
    %264 = math.tanh %263 : vector<8x16xf32>
    %265 = arith.mulf %260, %264 : vector<8x16xf32>
    %266 = vector.extract_strided_slice %240 {offsets = [0, 0], sizes = [8, 16], strides = [1, 1]} : vector<8x64xf32> to vector<8x16xf32>
    %267 = arith.negf %266 : vector<8x16xf32>
    %268 = math.exp %267 : vector<8x16xf32>
    %cst_58 = arith.constant 1.000000e+00 : f32
    %269 = vector.broadcast %cst_58 : f32 to vector<8x16xf32>
    %270 = arith.addf %269, %268 : vector<8x16xf32>
    %271 = arith.divf %269, %270 : vector<8x16xf32>
    %272 = vector.extract_strided_slice %240 {offsets = [0, 16], sizes = [8, 16], strides = [1, 1]} : vector<8x64xf32> to vector<8x16xf32>
    %273 = arith.negf %272 : vector<8x16xf32>
    %274 = math.exp %273 : vector<8x16xf32>
    %cst_59 = arith.constant 1.000000e+00 : f32
    %275 = vector.broadcast %cst_59 : f32 to vector<8x16xf32>
    %276 = arith.addf %275, %274 : vector<8x16xf32>
    %277 = arith.divf %275, %276 : vector<8x16xf32>
    %278 = vector.extract_strided_slice %240 {offsets = [0, 32], sizes = [8, 16], strides = [1, 1]} : vector<8x64xf32> to vector<8x16xf32>
    %279 = math.tanh %278 : vector<8x16xf32>
    %280 = vector.extract_strided_slice %240 {offsets = [0, 48], sizes = [8, 16], strides = [1, 1]} : vector<8x64xf32> to vector<8x16xf32>
    %281 = arith.negf %280 : vector<8x16xf32>
    %282 = math.exp %281 : vector<8x16xf32>
    %cst_60 = arith.constant 1.000000e+00 : f32
    %283 = vector.broadcast %cst_60 : f32 to vector<8x16xf32>
    %284 = arith.addf %283, %282 : vector<8x16xf32>
    %285 = arith.divf %283, %284 : vector<8x16xf32>
    %286 = arith.mulf %277, %228 : vector<8x16xf32>
    %287 = arith.mulf %271, %279 : vector<8x16xf32>
    %288 = arith.addf %286, %287 : vector<8x16xf32>
    %289 = math.tanh %288 : vector<8x16xf32>
    %290 = arith.mulf %285, %289 : vector<8x16xf32>
    %291 = tpu.concatenate %265, %290 in 1 : vector<8x16xf32>, vector<8x16xf32> -> vector<8x32xf32>
    %cst_61 = arith.constant dense<0.000000e+00> : vector<8x128xf32>
    %292 = tpu.matmul %291, %106, %cst_61 {dimension_numbers = #tpu.dot_dimension_numbers<[1], [0], [0], [1], [0, 0, 1, 1], [], []>} : vector<8x32xf32>, vector<32x128xf32>, vector<8x128xf32> -> vector<8x128xf32>
    %293 = vector.extract_strided_slice %105 {offsets = [0, 3, 0], sizes = [8, 1, 64], strides = [1, 1, 1]} : vector<8x4x128xf32> to vector<8x1x64xf32>
    %294 = vector.shape_cast %293 : vector<8x1x64xf32> to vector<8x64xf32>
    %295 = vector.extract_strided_slice %292 {offsets = [0, 0], sizes = [8, 64], strides = [1, 1]} : vector<8x128xf32> to vector<8x64xf32>
    %296 = arith.addf %294, %295 : vector<8x64xf32>
    %297 = vector.extract_strided_slice %105 {offsets = [0, 0, 64], sizes = [8, 1, 64], strides = [1, 1, 1]} : vector<8x4x128xf32> to vector<8x1x64xf32>
    %298 = vector.shape_cast %297 : vector<8x1x64xf32> to vector<8x64xf32>
    %299 = vector.extract_strided_slice %292 {offsets = [0, 64], sizes = [8, 64], strides = [1, 1]} : vector<8x128xf32> to vector<8x64xf32>
    %300 = arith.addf %298, %299 : vector<8x64xf32>
    %301 = vector.extract_strided_slice %296 {offsets = [0, 0], sizes = [8, 16], strides = [1, 1]} : vector<8x64xf32> to vector<8x16xf32>
    %302 = arith.negf %301 : vector<8x16xf32>
    %303 = math.exp %302 : vector<8x16xf32>
    %cst_62 = arith.constant 1.000000e+00 : f32
    %304 = vector.broadcast %cst_62 : f32 to vector<8x16xf32>
    %305 = arith.addf %304, %303 : vector<8x16xf32>
    %306 = arith.divf %304, %305 : vector<8x16xf32>
    %307 = vector.extract_strided_slice %296 {offsets = [0, 16], sizes = [8, 16], strides = [1, 1]} : vector<8x64xf32> to vector<8x16xf32>
    %308 = arith.negf %307 : vector<8x16xf32>
    %309 = math.exp %308 : vector<8x16xf32>
    %cst_63 = arith.constant 1.000000e+00 : f32
    %310 = vector.broadcast %cst_63 : f32 to vector<8x16xf32>
    %311 = arith.addf %310, %309 : vector<8x16xf32>
    %312 = arith.divf %310, %311 : vector<8x16xf32>
    %313 = vector.extract_strided_slice %296 {offsets = [0, 32], sizes = [8, 16], strides = [1, 1]} : vector<8x64xf32> to vector<8x16xf32>
    %314 = math.tanh %313 : vector<8x16xf32>
    %315 = vector.extract_strided_slice %296 {offsets = [0, 48], sizes = [8, 16], strides = [1, 1]} : vector<8x64xf32> to vector<8x16xf32>
    %316 = arith.negf %315 : vector<8x16xf32>
    %317 = math.exp %316 : vector<8x16xf32>
    %cst_64 = arith.constant 1.000000e+00 : f32
    %318 = vector.broadcast %cst_64 : f32 to vector<8x16xf32>
    %319 = arith.addf %318, %317 : vector<8x16xf32>
    %320 = arith.divf %318, %319 : vector<8x16xf32>
    %321 = arith.mulf %312, %263 : vector<8x16xf32>
    %322 = arith.mulf %306, %314 : vector<8x16xf32>
    %323 = arith.addf %321, %322 : vector<8x16xf32>
    %324 = math.tanh %323 : vector<8x16xf32>
    %325 = arith.mulf %320, %324 : vector<8x16xf32>
    %326 = vector.extract_strided_slice %300 {offsets = [0, 0], sizes = [8, 16], strides = [1, 1]} : vector<8x64xf32> to vector<8x16xf32>
    %327 = arith.negf %326 : vector<8x16xf32>
    %328 = math.exp %327 : vector<8x16xf32>
    %cst_65 = arith.constant 1.000000e+00 : f32
    %329 = vector.broadcast %cst_65 : f32 to vector<8x16xf32>
    %330 = arith.addf %329, %328 : vector<8x16xf32>
    %331 = arith.divf %329, %330 : vector<8x16xf32>
    %332 = vector.extract_strided_slice %300 {offsets = [0, 16], sizes = [8, 16], strides = [1, 1]} : vector<8x64xf32> to vector<8x16xf32>
    %333 = arith.negf %332 : vector<8x16xf32>
    %334 = math.exp %333 : vector<8x16xf32>
    %cst_66 = arith.constant 1.000000e+00 : f32
    %335 = vector.broadcast %cst_66 : f32 to vector<8x16xf32>
    %336 = arith.addf %335, %334 : vector<8x16xf32>
    %337 = arith.divf %335, %336 : vector<8x16xf32>
    %338 = vector.extract_strided_slice %300 {offsets = [0, 32], sizes = [8, 16], strides = [1, 1]} : vector<8x64xf32> to vector<8x16xf32>
    %339 = math.tanh %338 : vector<8x16xf32>
    %340 = vector.extract_strided_slice %300 {offsets = [0, 48], sizes = [8, 16], strides = [1, 1]} : vector<8x64xf32> to vector<8x16xf32>
    %341 = arith.negf %340 : vector<8x16xf32>
    %342 = math.exp %341 : vector<8x16xf32>
    %cst_67 = arith.constant 1.000000e+00 : f32
    %343 = vector.broadcast %cst_67 : f32 to vector<8x16xf32>
    %344 = arith.addf %343, %342 : vector<8x16xf32>
    %345 = arith.divf %343, %344 : vector<8x16xf32>
    %346 = arith.mulf %337, %288 : vector<8x16xf32>
    %347 = arith.mulf %331, %339 : vector<8x16xf32>
    %348 = arith.addf %346, %347 : vector<8x16xf32>
    %349 = math.tanh %348 : vector<8x16xf32>
    %350 = arith.mulf %345, %349 : vector<8x16xf32>
    %351 = tpu.concatenate %145, %350, %205, %290, %265, %230, %325, %170 in 1 : vector<8x16xf32>, vector<8x16xf32>, vector<8x16xf32>, vector<8x16xf32>, vector<8x16xf32>, vector<8x16xf32>, vector<8x16xf32>, vector<8x16xf32> -> vector<8x128xf32>
    %c0_68 = arith.constant 0 : index
    %c0_69 = arith.constant 0 : index
    %352 = vector.load %arg13[%c0_68, %c0_69] : memref<128x32xf32, #tpu.memory_space<vmem>>, vector<128x32xf32>
    %cst_70 = arith.constant dense<0.000000e+00> : vector<8x32xf32>
    %353 = tpu.matmul %351, %352, %cst_70 {dimension_numbers = #tpu.dot_dimension_numbers<[1], [0], [0], [1], [0, 0, 1, 1], [], []>} : vector<8x128xf32>, vector<128x32xf32>, vector<8x32xf32> -> vector<8x32xf32>
    %c0_71 = arith.constant 0 : index
    %c0_72 = arith.constant 0 : index
    %354 = vector.load %arg14[%c0_71, %c0_72] : memref<1x32xf32, #tpu.memory_space<vmem>>, vector<1x32xf32>
    %355 = vector.broadcast %354 : vector<1x32xf32> to vector<8x32xf32>
    %356 = arith.addf %353, %355 : vector<8x32xf32>
    %cst_73 = arith.constant 0.000000e+00 : f32
    %357 = vector.broadcast %cst_73 : f32 to vector<8x32xf32>
    %358 = arith.maximumf %356, %357 : vector<8x32xf32>
    %c0_74 = arith.constant 0 : index
    %c0_75 = arith.constant 0 : index
    %359 = vector.load %arg15[%c0_74, %c0_75] : memref<32x16xf32, #tpu.memory_space<vmem>>, vector<32x16xf32>
    %cst_76 = arith.constant dense<0.000000e+00> : vector<8x16xf32>
    %360 = tpu.matmul %358, %359, %cst_76 {dimension_numbers = #tpu.dot_dimension_numbers<[1], [0], [0], [1], [0, 0, 1, 1], [], []>} : vector<8x32xf32>, vector<32x16xf32>, vector<8x16xf32> -> vector<8x16xf32>
    %c0_77 = arith.constant 0 : index
    %c0_78 = arith.constant 0 : index
    %361 = vector.load %arg16[%c0_77, %c0_78] : memref<1x16xf32, #tpu.memory_space<vmem>>, vector<1x16xf32>
    %362 = vector.broadcast %361 : vector<1x16xf32> to vector<8x16xf32>
    %363 = arith.addf %360, %362 : vector<8x16xf32>
    %cst_79 = arith.constant 0.000000e+00 : f32
    %364 = vector.broadcast %cst_79 : f32 to vector<8x16xf32>
    %365 = arith.maximumf %363, %364 : vector<8x16xf32>
    %c0_80 = arith.constant 0 : index
    %c0_81 = arith.constant 0 : index
    %366 = vector.load %arg17[%c0_80, %c0_81] : memref<16x8xf32, #tpu.memory_space<vmem>>, vector<16x8xf32>
    %cst_82 = arith.constant dense<0.000000e+00> : vector<8x8xf32>
    %367 = tpu.matmul %365, %366, %cst_82 {dimension_numbers = #tpu.dot_dimension_numbers<[1], [0], [0], [1], [0, 0, 1, 1], [], []>} : vector<8x16xf32>, vector<16x8xf32>, vector<8x8xf32> -> vector<8x8xf32>
    %c0_83 = arith.constant 0 : index
    %c0_84 = arith.constant 0 : index
    %368 = vector.load %arg18[%c0_83, %c0_84] : memref<1x8xf32, #tpu.memory_space<vmem>>, vector<1x8xf32>
    %369 = vector.broadcast %368 : vector<1x8xf32> to vector<8x8xf32>
    %370 = arith.addf %367, %369 : vector<8x8xf32>
    %cst_85 = arith.constant 0.000000e+00 : f32
    %371 = vector.broadcast %cst_85 : f32 to vector<8x8xf32>
    %372 = arith.maximumf %370, %371 : vector<8x8xf32>
    %c0_86 = arith.constant 0 : index
    %c0_87 = arith.constant 0 : index
    %373 = vector.load %arg19[%c0_86, %c0_87] : memref<8x2xf32, #tpu.memory_space<vmem>>, vector<8x2xf32>
    %cst_88 = arith.constant dense<0.000000e+00> : vector<8x2xf32>
    %374 = tpu.matmul %372, %373, %cst_88 {dimension_numbers = #tpu.dot_dimension_numbers<[1], [0], [0], [1], [0, 0, 1, 1], [], []>} : vector<8x8xf32>, vector<8x2xf32>, vector<8x2xf32> -> vector<8x2xf32>
    %c0_89 = arith.constant 0 : index
    %c0_90 = arith.constant 0 : index
    %375 = vector.load %arg20[%c0_89, %c0_90] : memref<1x2xf32, #tpu.memory_space<vmem>>, vector<1x2xf32>
    %376 = vector.broadcast %375 : vector<1x2xf32> to vector<8x2xf32>
    %377 = arith.addf %374, %376 : vector<8x2xf32>
    %cst_91 = arith.constant dense<0xFF800000> : vector<8xf32>
    %378 = vector.multi_reduction <maximumf>, %377, %cst_91 [1] : vector<8x2xf32> to vector<8xf32>
    %379 = vector.shape_cast %378 : vector<8xf32> to vector<8x1xf32>
    %380 = vector.broadcast %379 : vector<8x1xf32> to vector<8x2xf32>
    %381 = arith.subf %377, %380 : vector<8x2xf32>
    %382 = math.exp %381 : vector<8x2xf32>
    %cst_92 = arith.constant dense<0.000000e+00> : vector<8xf32>
    %383 = vector.multi_reduction <add>, %382, %cst_92 [1] : vector<8x2xf32> to vector<8xf32>
    %384 = vector.shape_cast %383 : vector<8xf32> to vector<8x1xf32>
    %385 = math.log %384 : vector<8x1xf32>
    %386 = arith.addf %379, %385 : vector<8x1xf32>
    %387 = vector.broadcast %386 : vector<8x1xf32> to vector<8x2xf32>
    %388 = arith.subf %377, %387 : vector<8x2xf32>
    %c0_93 = arith.constant 0 : index
    %c0_94 = arith.constant 0 : index
    %389 = vector.load %arg21[%c0_93, %c0_94] : memref<8x2xf32, #tpu.memory_space<vmem>>, vector<8x2xf32>
    tpu.vector_store %arg21[%c0_93, %c0_94], %388 {strides = array<i32>} : memref<8x2xf32, #tpu.memory_space<vmem>>, vector<8x2xf32>,
    return
  }
  func.func @transform_0(%arg0: i32) -> (i32, i32, i32) {
    %c0_i32 = arith.constant 0 : i32
    %c0_i32_0 = arith.constant 0 : i32
    %c0_i32_1 = arith.constant 0 : i32
    return %arg0, %c0_i32, %c0_i32_0 : i32, i32, i32
  }
  func.func @transform_1(%arg0: i32) -> (i32, i32) {
    %c0_i32 = arith.constant 0 : i32
    %c0_i32_0 = arith.constant 0 : i32
    %c0_i32_1 = arith.constant 0 : i32
    return %c0_i32, %c0_i32_0 : i32, i32
  }
  func.func @transform_2(%arg0: i32) -> (i32, i32) {
    %c0_i32 = arith.constant 0 : i32
    %c0_i32_0 = arith.constant 0 : i32
    %c0_i32_1 = arith.constant 0 : i32
    return %c0_i32, %c0_i32_0 : i32, i32
  }
  func.func @transform_3(%arg0: i32) -> (i32, i32) {
    %c0_i32 = arith.constant 0 : i32
    %c0_i32_0 = arith.constant 0 : i32
    %c0_i32_1 = arith.constant 0 : i32
    return %c0_i32, %c0_i32_0 : i32, i32
  }
  func.func @transform_4(%arg0: i32) -> (i32, i32) {
    %c0_i32 = arith.constant 0 : i32
    %c0_i32_0 = arith.constant 0 : i32
    %c0_i32_1 = arith.constant 0 : i32
    return %c0_i32, %c0_i32_0 : i32, i32
  }
  func.func @transform_5(%arg0: i32) -> (i32, i32) {
    %c0_i32 = arith.constant 0 : i32
    %c0_i32_0 = arith.constant 0 : i32
    %c0_i32_1 = arith.constant 0 : i32
    return %c0_i32, %c0_i32_0 : i32, i32
  }
  func.func @transform_6(%arg0: i32) -> (i32, i32) {
    %c0_i32 = arith.constant 0 : i32
    %c0_i32_0 = arith.constant 0 : i32
    %c0_i32_1 = arith.constant 0 : i32
    return %c0_i32, %c0_i32_0 : i32, i32
  }
  func.func @transform_7(%arg0: i32) -> (i32, i32) {
    %c0_i32 = arith.constant 0 : i32
    %c0_i32_0 = arith.constant 0 : i32
    %c0_i32_1 = arith.constant 0 : i32
    return %c0_i32, %c0_i32_0 : i32, i32
  }
  func.func @transform_8(%arg0: i32) -> (i32, i32) {
    %c0_i32 = arith.constant 0 : i32
    %c0_i32_0 = arith.constant 0 : i32
    %c0_i32_1 = arith.constant 0 : i32
    return %c0_i32, %c0_i32_0 : i32, i32
  }
  func.func @transform_9(%arg0: i32) -> (i32, i32) {
    %c0_i32 = arith.constant 0 : i32
    %c0_i32_0 = arith.constant 0 : i32
    %c0_i32_1 = arith.constant 0 : i32
    return %c0_i32, %c0_i32_0 : i32, i32
  }
  func.func @transform_10(%arg0: i32) -> (i32, i32) {
    %c0_i32 = arith.constant 0 : i32
    %c0_i32_0 = arith.constant 0 : i32
    %c0_i32_1 = arith.constant 0 : i32
    return %c0_i32, %c0_i32_0 : i32, i32
  }
  func.func @transform_11(%arg0: i32) -> (i32, i32) {
    %c0_i32 = arith.constant 0 : i32
    %c0_i32_0 = arith.constant 0 : i32
    %c0_i32_1 = arith.constant 0 : i32
    return %c0_i32, %c0_i32_0 : i32, i32
  }
  func.func @transform_12(%arg0: i32) -> (i32, i32) {
    %c0_i32 = arith.constant 0 : i32
    %c0_i32_0 = arith.constant 0 : i32
    %c0_i32_1 = arith.constant 0 : i32
    return %c0_i32, %c0_i32_0 : i32, i32
  }
  func.func @transform_13(%arg0: i32) -> (i32, i32) {
    %c0_i32 = arith.constant 0 : i32
    %c0_i32_0 = arith.constant 0 : i32
    %c0_i32_1 = arith.constant 0 : i32
    return %c0_i32, %c0_i32_0 : i32, i32
  }
  func.func @transform_14(%arg0: i32) -> (i32, i32) {
    %c0_i32 = arith.constant 0 : i32
    %c0_i32_0 = arith.constant 0 : i32
    %c0_i32_1 = arith.constant 0 : i32
    return %c0_i32, %c0_i32_0 : i32, i32
  }
  func.func @transform_15(%arg0: i32) -> (i32, i32) {
    %c0_i32 = arith.constant 0 : i32
    %c0_i32_0 = arith.constant 0 : i32
    %c0_i32_1 = arith.constant 0 : i32
    return %c0_i32, %c0_i32_0 : i32, i32
  }
  func.func @transform_16(%arg0: i32) -> (i32, i32) {
    %c0_i32 = arith.constant 0 : i32
    %c0_i32_0 = arith.constant 0 : i32
    %c0_i32_1 = arith.constant 0 : i32
    return %c0_i32, %c0_i32_0 : i32, i32
  }
  func.func @transform_17(%arg0: i32) -> (i32, i32) {
    %c0_i32 = arith.constant 0 : i32
    %c0_i32_0 = arith.constant 0 : i32
    %c0_i32_1 = arith.constant 0 : i32
    return %c0_i32, %c0_i32_0 : i32, i32
  }
  func.func @transform_18(%arg0: i32) -> (i32, i32) {
    %c0_i32 = arith.constant 0 : i32
    %c0_i32_0 = arith.constant 0 : i32
    %c0_i32_1 = arith.constant 0 : i32
    return %c0_i32, %c0_i32_0 : i32, i32
  }
  func.func @transform_19(%arg0: i32) -> (i32, i32) {
    %c0_i32 = arith.constant 0 : i32
    %c0_i32_0 = arith.constant 0 : i32
    %c0_i32_1 = arith.constant 0 : i32
    return %c0_i32, %c0_i32_0 : i32, i32
  }
  func.func @transform_20(%arg0: i32) -> (i32, i32) {
    %c0_i32 = arith.constant 0 : i32
    %c0_i32_0 = arith.constant 0 : i32
    return %arg0, %c0_i32 : i32, i32
  }
}

</mosaic_0001>

<llo_original>
// kernel: cnn_bilstm_forward.1
$region0: #{cnn_bilstm_forward.1}
  #allocation0 [shape = 'u32[]', space=smem, size = 0x4, offset = 0x4, fixed_abs, tag = 'smem constant byte address 0x4 - core index']
  #allocation1 [shape = 'u32[144,128]{1,0:T(1,128)}', space=vmem, size = 0x12000, scoped, tag = 'internal scratch']
  %s0 = inlined_call_operand.vmem [shape: f32[8,16,8], index: 0, kind: input, shape index: {}]
  %s1 = inlined_call_operand.vmem [shape: f32[24,8], index: 1, kind: input, shape index: {}]
  %s2 = inlined_call_operand.vmem [shape: f32[1,8], index: 2, kind: input, shape index: {}]
  %s3 = inlined_call_operand.vmem [shape: f32[24,8], index: 3, kind: input, shape index: {}]
  %s4 = inlined_call_operand.vmem [shape: f32[1,8], index: 4, kind: input, shape index: {}]
  %s5 = inlined_call_operand.vmem [shape: f32[24,16], index: 5, kind: input, shape index: {}]
  %s6 = inlined_call_operand.vmem [shape: f32[1,16], index: 6, kind: input, shape index: {}]
  %s7 = inlined_call_operand.vmem [shape: f32[48,16], index: 7, kind: input, shape index: {}]
  %s8 = inlined_call_operand.vmem [shape: f32[1,16], index: 8, kind: input, shape index: {}]
  %s9 = inlined_call_operand.vmem [shape: f32[16,128], index: 9, kind: input, shape index: {}]
  %s10 = inlined_call_operand.vmem [shape: f32[32,128], index: 10, kind: input, shape index: {}]
  %s11 = inlined_call_operand.vmem [shape: f32[1,128], index: 11, kind: input, shape index: {}]
  %s12 = inlined_call_operand.vmem [shape: f32[128,32], index: 12, kind: input, shape index: {}]
  %s13 = inlined_call_operand.vmem [shape: f32[1,32], index: 13, kind: input, shape index: {}]
  %s14 = inlined_call_operand.vmem [shape: f32[32,16], index: 14, kind: input, shape index: {}]
  %s15 = inlined_call_operand.vmem [shape: f32[1,16], index: 15, kind: input, shape index: {}]
  %s16 = inlined_call_operand.vmem [shape: f32[16,8], index: 16, kind: input, shape index: {}]
  %s17 = inlined_call_operand.vmem [shape: f32[1,8], index: 17, kind: input, shape index: {}]
  %s18 = inlined_call_operand.vmem [shape: f32[8,2], index: 18, kind: input, shape index: {}]
  %s19 = inlined_call_operand.vmem [shape: f32[1,2], index: 19, kind: input, shape index: {}]
  %s20 = inlined_call_operand.vmem [shape: f32[8,2], index: 20, kind: output, shape index: {}]
  %s21 = sld [smem:[#allocation0]]
  $region90: #{cnn_bilstm_forward.1} parent=0
    _
  %s23 = ssub.s32 1, %s21
  %s24 = scalar_select 0, %s23, %s21
  // Predicated region
  $region2: #{cnn_bilstm_forward.1} parent=0 // pred_check
    _
  $region3: #{cnn_bilstm_forward.1} parent=0 // pred_check_branch
    %26 = sbr.rel (0) target = $region5
  $region4: #{cnn_bilstm_forward.1} parent=0 // pred_region
    _
  $region5: #{cnn_bilstm_forward.1} parent=0 // pred_fallthru
    _
  // Predicated region
  $region6: #{cnn_bilstm_forward.1} parent=0 // pred_check
    _
  $region7: #{cnn_bilstm_forward.1} parent=0 // pred_check_branch
    %28 = sbr.rel (0) target = $region9
  $region8: #{cnn_bilstm_forward.1} parent=0 // pred_region
    _
  $region9: #{cnn_bilstm_forward.1} parent=0 // pred_fallthru
    _
  // Predicated region
  $region10: #{cnn_bilstm_forward.1} parent=0 // pred_check
    _
  $region11: #{cnn_bilstm_forward.1} parent=0 // pred_check_branch
    %30 = sbr.rel (0) target = $region13
  $region12: #{cnn_bilstm_forward.1} parent=0 // pred_region
    _
  $region13: #{cnn_bilstm_forward.1} parent=0 // pred_fallthru
    _
  // Predicated region
  $region14: #{cnn_bilstm_forward.1} parent=0 // pred_check
    _
  $region15: #{cnn_bilstm_forward.1} parent=0 // pred_check_branch
    %32 = sbr.rel (0) target = $region17
  $region16: #{cnn_bilstm_forward.1} parent=0 // pred_region
    _
  $region17: #{cnn_bilstm_forward.1} parent=0 // pred_fallthru
    _
  // Predicated region
  $region18: #{cnn_bilstm_forward.1} parent=0 // pred_check
    _
  $region19: #{cnn_bilstm_forward.1} parent=0 // pred_check_branch
    %34 = sbr.rel (0) target = $region21
  $region20: #{cnn_bilstm_forward.1} parent=0 // pred_region
    _
  $region21: #{cnn_bilstm_forward.1} parent=0 // pred_fallthru
    _
  // Predicated region
  $region22: #{cnn_bilstm_forward.1} parent=0 // pred_check
    _
  $region23: #{cnn_bilstm_forward.1} parent=0 // pred_check_branch
    %36 = sbr.rel (0) target = $region25
  $region24: #{cnn_bilstm_forward.1} parent=0 // pred_region
    _
  $region25: #{cnn_bilstm_forward.1} parent=0 // pred_fallthru
    _
  // Predicated region
  $region26: #{cnn_bilstm_forward.1} parent=0 // pred_check
    _
  $region27: #{cnn_bilstm_forward.1} parent=0 // pred_check_branch
    %38 = sbr.rel (0) target = $region29
  $region28: #{cnn_bilstm_forward.1} parent=0 // pred_region
    _
  $region29: #{cnn_bilstm_forward.1} parent=0 // pred_fallthru
    _
  // Predicated region
  $region30: #{cnn_bilstm_forward.1} parent=0 // pred_check
    _
  $region31: #{cnn_bilstm_forward.1} parent=0 // pred_check_branch
    %40 = sbr.rel (0) target = $region33
  $region32: #{cnn_bilstm_forward.1} parent=0 // pred_region
    _
  $region33: #{cnn_bilstm_forward.1} parent=0 // pred_fallthru
    _
  // Predicated region
  $region34: #{cnn_bilstm_forward.1} parent=0 // pred_check
    _
  $region35: #{cnn_bilstm_forward.1} parent=0 // pred_check_branch
    %42 = sbr.rel (0) target = $region37
  $region36: #{cnn_bilstm_forward.1} parent=0 // pred_region
    _
  $region37: #{cnn_bilstm_forward.1} parent=0 // pred_fallthru
    _
  // Predicated region
  $region38: #{cnn_bilstm_forward.1} parent=0 // pred_check
    _
  $region39: #{cnn_bilstm_forward.1} parent=0 // pred_check_branch
    %44 = sbr.rel (0) target = $region41
  $region40: #{cnn_bilstm_forward.1} parent=0 // pred_region
    _
  $region41: #{cnn_bilstm_forward.1} parent=0 // pred_fallthru
    _
  // Predicated region
  $region42: #{cnn_bilstm_forward.1} parent=0 // pred_check
    _
  $region43: #{cnn_bilstm_forward.1} parent=0 // pred_check_branch
    %46 = sbr.rel (0) target = $region45
  $region44: #{cnn_bilstm_forward.1} parent=0 // pred_region
    _
  $region45: #{cnn_bilstm_forward.1} parent=0 // pred_fallthru
    _
  // Predicated region
  $region46: #{cnn_bilstm_forward.1} parent=0 // pred_check
    _
  $region47: #{cnn_bilstm_forward.1} parent=0 // pred_check_branch
    %48 = sbr.rel (0) target = $region49
  $region48: #{cnn_bilstm_forward.1} parent=0 // pred_region
    _
  $region49: #{cnn_bilstm_forward.1} parent=0 // pred_fallthru
    _
  // Predicated region
  $region50: #{cnn_bilstm_forward.1} parent=0 // pred_check
    _
  $region51: #{cnn_bilstm_forward.1} parent=0 // pred_check_branch
    %50 = sbr.rel (0) target = $region53
  $region52: #{cnn_bilstm_forward.1} parent=0 // pred_region
    _
  $region53: #{cnn_bilstm_forward.1} parent=0 // pred_fallthru
    _
  // Predicated region
  $region54: #{cnn_bilstm_forward.1} parent=0 // pred_check
    _
  $region55: #{cnn_bilstm_forward.1} parent=0 // pred_check_branch
    %52 = sbr.rel (0) target = $region57
  $region56: #{cnn_bilstm_forward.1} parent=0 // pred_region
    _
  $region57: #{cnn_bilstm_forward.1} parent=0 // pred_fallthru
    _
  // Predicated region
  $region58: #{cnn_bilstm_forward.1} parent=0 // pred_check
    _
  $region59: #{cnn_bilstm_forward.1} parent=0 // pred_check_branch
    %54 = sbr.rel (0) target = $region61
  $region60: #{cnn_bilstm_forward.1} parent=0 // pred_region
    _
  $region61: #{cnn_bilstm_forward.1} parent=0 // pred_fallthru
    _
  // Predicated region
  $region62: #{cnn_bilstm_forward.1} parent=0 // pred_check
    _
  $region63: #{cnn_bilstm_forward.1} parent=0 // pred_check_branch
    %56 = sbr.rel (0) target = $region65
  $region64: #{cnn_bilstm_forward.1} parent=0 // pred_region
    _
  $region65: #{cnn_bilstm_forward.1} parent=0 // pred_fallthru
    _
  // Predicated region
  $region66: #{cnn_bilstm_forward.1} parent=0 // pred_check
    _
  $region67: #{cnn_bilstm_forward.1} parent=0 // pred_check_branch
    %58 = sbr.rel (0) target = $region69
  $region68: #{cnn_bilstm_forward.1} parent=0 // pred_region
    _
  $region69: #{cnn_bilstm_forward.1} parent=0 // pred_fallthru
    _
  // Predicated region
  $region70: #{cnn_bilstm_forward.1} parent=0 // pred_check
    _
  $region71: #{cnn_bilstm_forward.1} parent=0 // pred_check_branch
    %60 = sbr.rel (0) target = $region73
  $region72: #{cnn_bilstm_forward.1} parent=0 // pred_region
    _
  $region73: #{cnn_bilstm_forward.1} parent=0 // pred_fallthru
    _
  // Predicated region
  $region74: #{cnn_bilstm_forward.1} parent=0 // pred_check
    _
  $region75: #{cnn_bilstm_forward.1} parent=0 // pred_check_branch
    %62 = sbr.rel (0) target = $region77
  $region76: #{cnn_bilstm_forward.1} parent=0 // pred_region
    _
  $region77: #{cnn_bilstm_forward.1} parent=0 // pred_fallthru
    _
  // Predicated region
  $region78: #{cnn_bilstm_forward.1} parent=0 // pred_check
    _
  $region79: #{cnn_bilstm_forward.1} parent=0 // pred_check_branch
    %64 = sbr.rel (0) target = $region81
  $region80: #{cnn_bilstm_forward.1} parent=0 // pred_region
    _
  $region81: #{cnn_bilstm_forward.1} parent=0 // pred_fallthru
    _
  %v65 = vld [vmem:[%s0] sm:$0xff]
  %v66 = vld [vmem:[%s0 + $0x8] sm:$0xff]
  %v67 = vld [vmem:[%s0 + $0x10] sm:$0xff]
  %v68 = vld [vmem:[%s0 + $0x18] sm:$0xff]
  %v69 = vld [vmem:[%s0 + $0x20] sm:$0xff]
  %v70 = vld [vmem:[%s0 + $0x28] sm:$0xff]
  %v71 = vld [vmem:[%s0 + $0x30] sm:$0xff]
  %v72 = vld [vmem:[%s0 + $0x38] sm:$0xff]
  %v73 = vld [vmem:[%s0 + $0x40] sm:$0xff]
  %v74 = vld [vmem:[%s0 + $0x48] sm:$0xff]
  %v75 = vld [vmem:[%s0 + $0x50] sm:$0xff]
  %v76 = vld [vmem:[%s0 + $0x58] sm:$0xff]
  %v77 = vld [vmem:[%s0 + $0x60] sm:$0xff]
  %v78 = vld [vmem:[%s0 + $0x68] sm:$0xff]
  %v79 = vld [vmem:[%s0 + $0x70] sm:$0xff]
  %v80 = vld [vmem:[%s0 + $0x78] sm:$0xff]
  %vm97 = vcmask 1040384
  %v98 = vrot.slane %v65, 7
  %v99 = vrot.slane %v66, 7
  %v100 = vsel %vm97, %v98, %v99
  %v101 = vrot.slane %v67, 7
  %v102 = vrot.slane %v68, 7
  %v103 = vsel %vm97, %v101, %v102
  %v104 = vrot.slane %v69, 7
  %v105 = vrot.slane %v70, 7
  %v106 = vsel %vm97, %v104, %v105
  %v107 = vrot.slane %v71, 7
  %v108 = vrot.slane %v72, 7
  %v109 = vsel %vm97, %v107, %v108
  %v110 = vrot.slane %v73, 7
  %v111 = vrot.slane %v74, 7
  %v112 = vsel %vm97, %v110, %v111
  %v113 = vrot.slane %v75, 7
  %v114 = vrot.slane %v76, 7
  %v115 = vsel %vm97, %v113, %v114
  %v116 = vrot.slane %v77, 7
  %v117 = vrot.slane %v78, 7
  %v118 = vsel %vm97, %v116, %v117
  %v119 = vrot.slane %v79, 7
  %v120 = vrot.slane %v80, 7
  %v121 = vsel %vm97, %v119, %v120
  %v138 = vsel %vm97, 0.0, %v98
  %v139 = vsel %vm97, 0.0, %v101
  %v140 = vsel %vm97, 0.0, %v104
  %v141 = vsel %vm97, 0.0, %v107
  %v142 = vsel %vm97, 0.0, %v110
  %v143 = vsel %vm97, 0.0, %v113
  %v144 = vsel %vm97, 0.0, %v116
  %v145 = vsel %vm97, 0.0, %v119
  %vm146 = vcmask 1046528
  %v147 = vrot.slane %v65, 1
  %v148 = vrot.slane %v66, 1
  %v149 = vsel %vm146, %v147, %v148
  %v150 = vrot.slane %v67, 1
  %v151 = vrot.slane %v68, 1
  %v152 = vsel %vm146, %v150, %v151
  %v153 = vrot.slane %v69, 1
  %v154 = vrot.slane %v70, 1
  %v155 = vsel %vm146, %v153, %v154
  %v156 = vrot.slane %v71, 1
  %v157 = vrot.slane %v72, 1
  %v158 = vsel %vm146, %v156, %v157
  %v159 = vrot.slane %v73, 1
  %v160 = vrot.slane %v74, 1
  %v161 = vsel %vm146, %v159, %v160
  %v162 = vrot.slane %v75, 1
  %v163 = vrot.slane %v76, 1
  %v164 = vsel %vm146, %v162, %v163
  %v165 = vrot.slane %v77, 1
  %v166 = vrot.slane %v78, 1
  %v167 = vsel %vm146, %v165, %v166
  %v168 = vrot.slane %v79, 1
  %v169 = vrot.slane %v80, 1
  %v170 = vsel %vm146, %v168, %v169
  %v179 = vsel %vm146, %v148, 0.0
  %v180 = vsel %vm146, %v151, 0.0
  %v181 = vsel %vm146, %v154, 0.0
  %v182 = vsel %vm146, %v157, 0.0
  %v183 = vsel %vm146, %v160, 0.0
  %v184 = vsel %vm146, %v163, 0.0
  %v185 = vsel %vm146, %v166, 0.0
  %v186 = vsel %vm146, %v169, 0.0
  %187 = vrot.lane.b32.xlu0 %v65, 8
  %v188 = vpop.permute.xlu0 %187
  %189 = vrot.lane.b32.xlu0 %v66, 8
  %v190 = vpop.permute.xlu0 %189
  %191 = vrot.lane.b32.xlu0 %v67, 8
  %v192 = vpop.permute.xlu0 %191
  %193 = vrot.lane.b32.xlu0 %v68, 8
  %v194 = vpop.permute.xlu0 %193
  %195 = vrot.lane.b32.xlu0 %v69, 8
  %v196 = vpop.permute.xlu0 %195
  %197 = vrot.lane.b32.xlu0 %v70, 8
  %v198 = vpop.permute.xlu0 %197
  %199 = vrot.lane.b32.xlu0 %v71, 8
  %v200 = vpop.permute.xlu0 %199
  %201 = vrot.lane.b32.xlu0 %v72, 8
  %v202 = vpop.permute.xlu0 %201
  %203 = vrot.lane.b32.xlu0 %v73, 8
  %v204 = vpop.permute.xlu0 %203
  %205 = vrot.lane.b32.xlu0 %v74, 8
  %v206 = vpop.permute.xlu0 %205
  %207 = vrot.lane.b32.xlu0 %v75, 8
  %v208 = vpop.permute.xlu0 %207
  %209 = vrot.lane.b32.xlu0 %v76, 8
  %v210 = vpop.permute.xlu0 %209
  %211 = vrot.lane.b32.xlu0 %v77, 8
  %v212 = vpop.permute.xlu0 %211
  %213 = vrot.lane.b32.xlu0 %v78, 8
  %v214 = vpop.permute.xlu0 %213
  %215 = vrot.lane.b32.xlu0 %v79, 8
  %v216 = vpop.permute.xlu0 %215
  %217 = vrot.lane.b32.xlu0 %v80, 8
  %v218 = vpop.permute.xlu0 %217
  %243 = vrot.lane.b32.xlu0 %v149, 16
  %v244 = vpop.permute.xlu0 %243
  %245 = vrot.lane.b32.xlu0 %v179, 16
  %v246 = vpop.permute.xlu0 %245
  %247 = vrot.lane.b32.xlu0 %v152, 16
  %v248 = vpop.permute.xlu0 %247
  %249 = vrot.lane.b32.xlu0 %v180, 16
  %v250 = vpop.permute.xlu0 %249
  %251 = vrot.lane.b32.xlu0 %v155, 16
  %v252 = vpop.permute.xlu0 %251
  %253 = vrot.lane.b32.xlu0 %v181, 16
  %v254 = vpop.permute.xlu0 %253
  %255 = vrot.lane.b32.xlu0 %v158, 16
  %v256 = vpop.permute.xlu0 %255
  %257 = vrot.lane.b32.xlu0 %v182, 16
  %v258 = vpop.permute.xlu0 %257
  %259 = vrot.lane.b32.xlu0 %v161, 16
  %v260 = vpop.permute.xlu0 %259
  %261 = vrot.lane.b32.xlu0 %v183, 16
  %v262 = vpop.permute.xlu0 %261
  %263 = vrot.lane.b32.xlu0 %v164, 16
  %v264 = vpop.permute.xlu0 %263
  %265 = vrot.lane.b32.xlu0 %v184, 16
  %v266 = vpop.permute.xlu0 %265
  %267 = vrot.lane.b32.xlu0 %v167, 16
  %v268 = vpop.permute.xlu0 %267
  %269 = vrot.lane.b32.xlu0 %v185, 16
  %v270 = vpop.permute.xlu0 %269
  %271 = vrot.lane.b32.xlu0 %v170, 16
  %v272 = vpop.permute.xlu0 %271
  %273 = vrot.lane.b32.xlu0 %v186, 16
  %v274 = vpop.permute.xlu0 %273
  %vm291 = vcmask 64512
  %v292 = vsel %vm291, %v138, %v188
  %v293 = vsel %vm291, %v100, %v190
  %v294 = vsel %vm291, %v139, %v192
  %v295 = vsel %vm291, %v103, %v194
  %v296 = vsel %vm291, %v140, %v196
  %v297 = vsel %vm291, %v106, %v198
  %v298 = vsel %vm291, %v141, %v200
  %v299 = vsel %vm291, %v109, %v202
  %v300 = vsel %vm291, %v142, %v204
  %v301 = vsel %vm291, %v112, %v206
  %v302 = vsel %vm291, %v143, %v208
  %v303 = vsel %vm291, %v115, %v210
  %v304 = vsel %vm291, %v144, %v212
  %v305 = vsel %vm291, %v118, %v214
  %v306 = vsel %vm291, %v145, %v216
  %v307 = vsel %vm291, %v121, %v218
  %vm308 = vcmask 130048
  %v309 = vsel %vm308, %v292, %v244
  %v310 = vsel %vm308, %v293, %v246
  %v311 = vsel %vm308, %v294, %v248
  %v312 = vsel %vm308, %v295, %v250
  %v313 = vsel %vm308, %v296, %v252
  %v314 = vsel %vm308, %v297, %v254
  %v315 = vsel %vm308, %v298, %v256
  %v316 = vsel %vm308, %v299, %v258
  %v317 = vsel %vm308, %v300, %v260
  %v318 = vsel %vm308, %v301, %v262
  %v319 = vsel %vm308, %v302, %v264
  %v320 = vsel %vm308, %v303, %v266
  %v321 = vsel %vm308, %v304, %v268
  %v322 = vsel %vm308, %v305, %v270
  %v323 = vsel %vm308, %v306, %v272
  %v324 = vsel %vm308, %v307, %v274
  %v325 = vld [vmem:[%s1] sm:$0xff]
  %v326 = vld [vmem:[%s1 + $0x8] sm:$0xff]
  %v327 = vld [vmem:[%s1 + $0x10] sm:$0xff]
  %v328 = vld [vmem:[%s2] sm:$0x1]
  %v330 = vlaneseq
  %v331 = vshrl.u32 %v330, 7
  %v332 = vsub.s32 0, %v331
  %v333 = vrot.slane %v328, %v332
  %vm335 = vcmask 195584
  %v337 = vsel %vm335, %v309, 0
  %v340 = vsel %vm335, %v310, 0
  %v343 = vsel %vm335, %v311, 0
  %v346 = vsel %vm335, %v312, 0
  %v349 = vsel %vm335, %v313, 0
  %v352 = vsel %vm335, %v314, 0
  %v355 = vsel %vm335, %v315, 0
  %v358 = vsel %vm335, %v316, 0
  %v361 = vsel %vm335, %v317, 0
  %v364 = vsel %vm335, %v318, 0
  %v367 = vsel %vm335, %v319, 0
  %v370 = vsel %vm335, %v320, 0
  %v373 = vsel %vm335, %v321, 0
  %v376 = vsel %vm335, %v322, 0
  %v379 = vsel %vm335, %v323, 0
  %v382 = vsel %vm335, %v324, 0
  %384 = vmatprep.subr.mxu0 0.0
  %385 = vmatpush1.msra.mxu0 %v325
  %386 = vmatprep.subr.mxu0 0.0
  %387 = vmatpush1.msra.mxu0 %v326
  %388 = vmatprep.subr.mxu0 0.0
  %389 = vmatpush1.msra.mxu0 %v327
  %390 = vmatprep.subr.mxu0 0.0
  %391 = vmatpush1.msra.mxu0 0.0
  %392 = vmatprep.subr.mxu0 0.0
  %393 = vmatpush1.msra.mxu0 0.0
  %394 = vmatprep.subr.mxu0 0.0
  %395 = vmatpush1.msra.mxu0 0.0
  %396 = vmatprep.subr.mxu0 0.0
  %397 = vmatpush1.msra.mxu0 0.0
  %398 = vmatprep.subr.mxu0 0.0
  %399 = vmatpush1.msra.mxu0 0.0
  %400 = vmatprep.subr.mxu0 0.0
  %401 = vmatpush1.msra.mxu0 0.0
  %402 = vmatprep.subr.mxu0 0.0
  %403 = vmatpush1.msra.mxu0 0.0
  %404 = vmatprep.subr.mxu0 0.0
  %405 = vmatpush1.msra.mxu0 0.0
  %406 = vmatprep.subr.mxu0 0.0
  %407 = vmatpush1.msra.mxu0 0.0
  %408 = vmatprep.subr.mxu0 0.0
  %409 = vmatpush1.msra.mxu0 0.0
  %410 = vmatprep.subr.mxu0 0.0
  %411 = vmatpush1.msra.mxu0 0.0
  %412 = vmatprep.subr.mxu0 0.0
  %413 = vmatpush1.msra.mxu0 0.0
  %414 = vmatprep.subr.mxu0 0.0
  %415 = vmatpush1.msra.mxu0 0.0
  %416 = vmatprep.subr.mxu0 0.0
  %417 = vmatpush1.msra.mxu0 0.0
  %418 = vmatprep.subr.mxu0 0.0
  %419 = vmatpush1.msra.mxu0 0.0
  %420 = vmatprep.subr.mxu0 0.0
  %421 = vmatpush1.msra.mxu0 0.0
  %422 = vmatprep.subr.mxu0 0.0
  %423 = vmatpush1.msra.mxu0 0.0
  %424 = vmatprep.subr.mxu0 0.0
  %425 = vmatpush1.msra.mxu0 0.0
  %426 = vmatprep.subr.mxu0 0.0
  %427 = vmatpush1.msra.mxu0 0.0
  %428 = vmatprep.subr.mxu0 0.0
  %429 = vmatpush1.msra.mxu0 0.0
  %430 = vmatprep.subr.mxu0 0.0
  %431 = vmatpush1.msra.mxu0 0.0
  %432 = vmatprep.subr.mxu0 0.0
  %433 = vmatpush1.msra.mxu0 0.0
  %434 = vmatprep.subr.mxu0 0.0
  %435 = vmatpush1.msra.mxu0 0.0
  %436 = vmatprep.subr.mxu0 0.0
  %437 = vmatpush1.msra.mxu0 0.0
  %438 = vmatprep.subr.mxu0 0.0
  %439 = vmatpush1.msra.mxu0 0.0
  %440 = vmatprep.subr.mxu0 0.0
  %441 = vmatpush1.msra.mxu0 0.0
  %442 = vmatprep.subr.mxu0 0.0
  %443 = vmatpush1.msra.mxu0 0.0
  %444 = vmatprep.subr.mxu0 0.0
  %445 = vmatpush1.msra.mxu0 0.0
  %446 = vmatprep.subr.mxu0 0.0
  %447 = vmatpush1.msra.mxu0 0.0
  %448 = vmatprep.mubr.f32.mxu0 0.0
  %449 = vmatmul.mubr.f32.gmra.mrb[0].mxu0 %v337
  %v450 = vpop.f32.mrb[0].mxu0
  %v451 = vadd.f32 %v333, %v450
  %v452 = vpop.f32.mrb[0].mxu0
  %453 = vmatprep.mubr.f32.mxu0 0.0
  %454 = vmatmul.mubr.f32.gmra.mrb[0].mxu0 %v340
  %v455 = vpop.f32.mrb[0].mxu0
  %v456 = vadd.f32 %v333, %v455
  %v457 = vpop.f32.mrb[0].mxu0
  %458 = vmatprep.mubr.f32.mxu0 0.0
  %459 = vmatmul.mubr.f32.gmra.mrb[0].mxu0 %v343
  %v460 = vpop.f32.mrb[0].mxu0
  %v461 = vadd.f32 %v333, %v460
  %v462 = vpop.f32.mrb[0].mxu0
  %463 = vmatprep.mubr.f32.mxu0 0.0
  %464 = vmatmul.mubr.f32.gmra.mrb[0].mxu0 %v346
  %v465 = vpop.f32.mrb[0].mxu0
  %v466 = vadd.f32 %v333, %v465
  %v467 = vpop.f32.mrb[0].mxu0
  %468 = vmatprep.mubr.f32.mxu0 0.0
  %469 = vmatmul.mubr.f32.gmra.mrb[0].mxu0 %v349
  %v470 = vpop.f32.mrb[0].mxu0
  %v471 = vadd.f32 %v333, %v470
  %v472 = vpop.f32.mrb[0].mxu0
  %473 = vmatprep.mubr.f32.mxu0 0.0
  %474 = vmatmul.mubr.f32.gmra.mrb[0].mxu0 %v352
  %v475 = vpop.f32.mrb[0].mxu0
  %v476 = vadd.f32 %v333, %v475
  %v477 = vpop.f32.mrb[0].mxu0
  %478 = vmatprep.mubr.f32.mxu0 0.0
  %479 = vmatmul.mubr.f32.gmra.mrb[0].mxu0 %v355
  %v480 = vpop.f32.mrb[0].mxu0
  %v481 = vadd.f32 %v333, %v480
  %v482 = vpop.f32.mrb[0].mxu0
  %483 = vmatprep.mubr.f32.mxu0 0.0
  %484 = vmatmul.mubr.f32.gmra.mrb[0].mxu0 %v358
  %v485 = vpop.f32.mrb[0].mxu0
  %v486 = vadd.f32 %v333, %v485
  %v487 = vpop.f32.mrb[0].mxu0
  %488 = vmatprep.mubr.f32.mxu0 0.0
  %489 = vmatmul.mubr.f32.gmra.mrb[0].mxu0 %v361
  %v490 = vpop.f32.mrb[0].mxu0
  %v491 = vadd.f32 %v333, %v490
  %v492 = vpop.f32.mrb[0].mxu0
  %493 = vmatprep.mubr.f32.mxu0 0.0
  %494 = vmatmul.mubr.f32.gmra.mrb[0].mxu0 %v364
  %v495 = vpop.f32.mrb[0].mxu0
  %v496 = vadd.f32 %v333, %v495
  %v497 = vpop.f32.mrb[0].mxu0
  %498 = vmatprep.mubr.f32.mxu0 0.0
  %499 = vmatmul.mubr.f32.gmra.mrb[0].mxu0 %v367
  %v500 = vpop.f32.mrb[0].mxu0
  %v501 = vadd.f32 %v333, %v500
  %v502 = vpop.f32.mrb[0].mxu0
  %503 = vmatprep.mubr.f32.mxu0 0.0
  %504 = vmatmul.mubr.f32.gmra.mrb[0].mxu0 %v370
  %v505 = vpop.f32.mrb[0].mxu0
  %v506 = vadd.f32 %v333, %v505
  %v507 = vpop.f32.mrb[0].mxu0
  %508 = vmatprep.mubr.f32.mxu0 0.0
  %509 = vmatmul.mubr.f32.gmra.mrb[0].mxu0 %v373
  %v510 = vpop.f32.mrb[0].mxu0
  %v511 = vadd.f32 %v333, %v510
  %v512 = vpop.f32.mrb[0].mxu0
  %513 = vmatprep.mubr.f32.mxu0 0.0
  %514 = vmatmul.mubr.f32.gmra.mrb[0].mxu0 %v376
  %v515 = vpop.f32.mrb[0].mxu0
  %v516 = vadd.f32 %v333, %v515
  %v517 = vpop.f32.mrb[0].mxu0
  %518 = vmatprep.mubr.f32.mxu0 0.0
  %519 = vmatmul.mubr.f32.gmra.mrb[0].mxu0 %v379
  %v520 = vpop.f32.mrb[0].mxu0
  %v521 = vadd.f32 %v333, %v520
  %v522 = vpop.f32.mrb[0].mxu0
  %523 = vmatprep.mubr.f32.mxu0 0.0
  %524 = vmatmul.mubr.f32.gmra.mrb[0].mxu0 %v382
  %v525 = vpop.f32.mrb[0].mxu0
  %v526 = vadd.f32 %v333, %v525
  %v527 = vpop.f32.mrb[0].mxu0
  %528 = vdwg.mxu0
  %v529 = vmax.f32 %v451, 0.0
  %v530 = vmax.f32 %v456, 0.0
  %v531 = vmax.f32 %v461, 0.0
  %v532 = vmax.f32 %v466, 0.0
  %v533 = vmax.f32 %v471, 0.0
  %v534 = vmax.f32 %v476, 0.0
  %v535 = vmax.f32 %v481, 0.0
  %v536 = vmax.f32 %v486, 0.0
  %v537 = vmax.f32 %v491, 0.0
  %v538 = vmax.f32 %v496, 0.0
  %v539 = vmax.f32 %v501, 0.0
  %v540 = vmax.f32 %v506, 0.0
  %v541 = vmax.f32 %v511, 0.0
  %v542 = vmax.f32 %v516, 0.0
  %v543 = vmax.f32 %v521, 0.0
  %v544 = vmax.f32 %v526, 0.0
  %v553 = vrot.slane %v529, 1
  %v554 = vrot.slane %v531, 1
  %v555 = vrot.slane %v533, 1
  %v556 = vrot.slane %v535, 1
  %v557 = vrot.slane %v537, 1
  %v558 = vrot.slane %v539, 1
  %v559 = vrot.slane %v541, 1
  %v560 = vrot.slane %v543, 1
  %v569 = vmax.f32 %v529, %v553
  %v570 = vmax.f32 %v531, %v554
  %v571 = vmax.f32 %v533, %v555
  %v572 = vmax.f32 %v535, %v556
  %v573 = vmax.f32 %v537, %v557
  %v574 = vmax.f32 %v539, %v558
  %v575 = vmax.f32 %v541, %v559
  %v576 = vmax.f32 %v543, %v560
  %v585 = vrot.slane %v530, 1
  %v586 = vrot.slane %v532, 1
  %v587 = vrot.slane %v534, 1
  %v588 = vrot.slane %v536, 1
  %v589 = vrot.slane %v538, 1
  %v590 = vrot.slane %v540, 1
  %v591 = vrot.slane %v542, 1
  %v592 = vrot.slane %v544, 1
  %v601 = vmax.f32 %v530, %v585
  %v602 = vmax.f32 %v532, %v586
  %v603 = vmax.f32 %v534, %v587
  %v604 = vmax.f32 %v536, %v588
  %v605 = vmax.f32 %v538, %v589
  %v606 = vmax.f32 %v540, %v590
  %v607 = vmax.f32 %v542, %v591
  %v608 = vmax.f32 %v544, %v592
  %v617 = vrot.slane %v569, 1
  %v618 = vrot.slane %v570, 1
  %v619 = vrot.slane %v571, 1
  %v620 = vrot.slane %v572, 1
  %v621 = vrot.slane %v573, 1
  %v622 = vrot.slane %v574, 1
  %v623 = vrot.slane %v575, 1
  %v624 = vrot.slane %v576, 1
  %v633 = vrot.slane %v569, 2
  %v634 = vrot.slane %v570, 2
  %v635 = vrot.slane %v571, 2
  %v636 = vrot.slane %v572, 2
  %v637 = vrot.slane %v573, 2
  %v638 = vrot.slane %v574, 2
  %v639 = vrot.slane %v575, 2
  %v640 = vrot.slane %v576, 2
  %v649 = vrot.slane %v569, 3
  %v650 = vrot.slane %v570, 3
  %v651 = vrot.slane %v571, 3
  %v652 = vrot.slane %v572, 3
  %v653 = vrot.slane %v573, 3
  %v654 = vrot.slane %v574, 3
  %v655 = vrot.slane %v575, 3
  %v656 = vrot.slane %v576, 3
  %v673 = vrot.slane %v601, 4
  %v674 = vrot.slane %v602, 4
  %v675 = vrot.slane %v603, 4
  %v676 = vrot.slane %v604, 4
  %v677 = vrot.slane %v605, 4
  %v678 = vrot.slane %v606, 4
  %v679 = vrot.slane %v607, 4
  %v680 = vrot.slane %v608, 4
  %v689 = vrot.slane %v601, 5
  %v690 = vrot.slane %v602, 5
  %v691 = vrot.slane %v603, 5
  %v692 = vrot.slane %v604, 5
  %v693 = vrot.slane %v605, 5
  %v694 = vrot.slane %v606, 5
  %v695 = vrot.slane %v607, 5
  %v696 = vrot.slane %v608, 5
  %v705 = vrot.slane %v601, 6
  %v706 = vrot.slane %v602, 6
  %v707 = vrot.slane %v603, 6
  %v708 = vrot.slane %v604, 6
  %v709 = vrot.slane %v605, 6
  %v710 = vrot.slane %v606, 6
  %v711 = vrot.slane %v607, 6
  %v712 = vrot.slane %v608, 6
  %v721 = vrot.slane %v601, 7
  %v722 = vrot.slane %v602, 7
  %v723 = vrot.slane %v603, 7
  %v724 = vrot.slane %v604, 7
  %v725 = vrot.slane %v605, 7
  %v726 = vrot.slane %v606, 7
  %v727 = vrot.slane %v607, 7
  %v728 = vrot.slane %v608, 7
  %v737 = vsel %vm97, %v569, %v617
  %v738 = vsel %vm97, %v570, %v618
  %v739 = vsel %vm97, %v571, %v619
  %v740 = vsel %vm97, %v572, %v620
  %v741 = vsel %vm97, %v573, %v621
  %v742 = vsel %vm97, %v574, %v622
  %v743 = vsel %vm97, %v575, %v623
  %v744 = vsel %vm97, %v576, %v624
  %vm745 = vcmask 1041408
  %v746 = vsel %vm745, %v737, %v633
  %v747 = vsel %vm745, %v738, %v634
  %v748 = vsel %vm745, %v739, %v635
  %v749 = vsel %vm745, %v740, %v636
  %v750 = vsel %vm745, %v741, %v637
  %v751 = vsel %vm745, %v742, %v638
  %v752 = vsel %vm745, %v743, %v639
  %v753 = vsel %vm745, %v744, %v640
  %vm754 = vcmask 1042432
  %v755 = vsel %vm754, %v746, %v649
  %v756 = vsel %vm754, %v747, %v650
  %v757 = vsel %vm754, %v748, %v651
  %v758 = vsel %vm754, %v749, %v652
  %v759 = vsel %vm754, %v750, %v653
  %v760 = vsel %vm754, %v751, %v654
  %v761 = vsel %vm754, %v752, %v655
  %v762 = vsel %vm754, %v753, %v656
  %vm763 = vcmask 1043456
  %v764 = vsel %vm763, %v755, %v673
  %v765 = vsel %vm763, %v756, %v674
  %v766 = vsel %vm763, %v757, %v675
  %v767 = vsel %vm763, %v758, %v676
  %v768 = vsel %vm763, %v759, %v677
  %v769 = vsel %vm763, %v760, %v678
  %v770 = vsel %vm763, %v761, %v679
  %v771 = vsel %vm763, %v762, %v680
  %vm772 = vcmask 1044480
  %v773 = vsel %vm772, %v764, %v689
  %v774 = vsel %vm772, %v765, %v690
  %v775 = vsel %vm772, %v766, %v691
  %v776 = vsel %vm772, %v767, %v692
  %v777 = vsel %vm772, %v768, %v693
  %v778 = vsel %vm772, %v769, %v694
  %v779 = vsel %vm772, %v770, %v695
  %v780 = vsel %vm772, %v771, %v696
  %vm781 = vcmask 1045504
  %v782 = vsel %vm781, %v773, %v705
  %v783 = vsel %vm781, %v774, %v706
  %v784 = vsel %vm781, %v775, %v707
  %v785 = vsel %vm781, %v776, %v708
  %v786 = vsel %vm781, %v777, %v709
  %v787 = vsel %vm781, %v778, %v710
  %v788 = vsel %vm781, %v779, %v711
  %v789 = vsel %vm781, %v780, %v712
  %v790 = vsel %vm146, %v782, %v721
  %v791 = vsel %vm146, %v783, %v722
  %v792 = vsel %vm146, %v784, %v723
  %v793 = vsel %vm146, %v785, %v724
  %v794 = vsel %vm146, %v786, %v725
  %v795 = vsel %vm146, %v787, %v726
  %v796 = vsel %vm146, %v788, %v727
  %v797 = vsel %vm146, %v789, %v728
  %v806 = vrot.slane %v790, 7
  %v807 = vrot.slane %v791, 7
  %v808 = vrot.slane %v792, 7
  %v809 = vrot.slane %v793, 7
  %v810 = vrot.slane %v794, 7
  %v811 = vrot.slane %v795, 7
  %v812 = vrot.slane %v796, 7
  %v813 = vrot.slane %v797, 7
  %v822 = vsel %vm97, 0.0, %v806
  %v823 = vsel %vm97, 0.0, %v807
  %v824 = vsel %vm97, 0.0, %v808
  %v825 = vsel %vm97, 0.0, %v809
  %v826 = vsel %vm97, 0.0, %v810
  %v827 = vsel %vm97, 0.0, %v811
  %v828 = vsel %vm97, 0.0, %v812
  %v829 = vsel %vm97, 0.0, %v813
  %v830 = vrot.slane %v790, 1
  %v831 = vrot.slane %v791, 1
  %v832 = vrot.slane %v792, 1
  %v833 = vrot.slane %v793, 1
  %v834 = vrot.slane %v794, 1
  %v835 = vrot.slane %v795, 1
  %v836 = vrot.slane %v796, 1
  %v837 = vrot.slane %v797, 1
  %v846 = vsel %vm146, %v830, 0.0
  %v847 = vsel %vm146, %v831, 0.0
  %v848 = vsel %vm146, %v832, 0.0
  %v849 = vsel %vm146, %v833, 0.0
  %v850 = vsel %vm146, %v834, 0.0
  %v851 = vsel %vm146, %v835, 0.0
  %v852 = vsel %vm146, %v836, 0.0
  %v853 = vsel %vm146, %v837, 0.0
  %854 = vrot.lane.b32.xlu0 %v790, 8
  %v855 = vpop.permute.xlu0 %854
  %856 = vrot.lane.b32.xlu0 %v791, 8
  %v857 = vpop.permute.xlu0 %856
  %858 = vrot.lane.b32.xlu0 %v792, 8
  %v859 = vpop.permute.xlu0 %858
  %860 = vrot.lane.b32.xlu0 %v793, 8
  %v861 = vpop.permute.xlu0 %860
  %862 = vrot.lane.b32.xlu0 %v794, 8
  %v863 = vpop.permute.xlu0 %862
  %864 = vrot.lane.b32.xlu0 %v795, 8
  %v865 = vpop.permute.xlu0 %864
  %866 = vrot.lane.b32.xlu0 %v796, 8
  %v867 = vpop.permute.xlu0 %866
  %868 = vrot.lane.b32.xlu0 %v797, 8
  %v869 = vpop.permute.xlu0 %868
  %886 = vrot.lane.b32.xlu0 %v846, 16
  %v887 = vpop.permute.xlu0 %886
  %888 = vrot.lane.b32.xlu0 %v847, 16
  %v889 = vpop.permute.xlu0 %888
  %890 = vrot.lane.b32.xlu0 %v848, 16
  %v891 = vpop.permute.xlu0 %890
  %892 = vrot.lane.b32.xlu0 %v849, 16
  %v893 = vpop.permute.xlu0 %892
  %894 = vrot.lane.b32.xlu0 %v850, 16
  %v895 = vpop.permute.xlu0 %894
  %896 = vrot.lane.b32.xlu0 %v851, 16
  %v897 = vpop.permute.xlu0 %896
  %898 = vrot.lane.b32.xlu0 %v852, 16
  %v899 = vpop.permute.xlu0 %898
  %900 = vrot.lane.b32.xlu0 %v853, 16
  %v901 = vpop.permute.xlu0 %900
  %v910 = vsel %vm291, %v822, %v855
  %v911 = vsel %vm291, %v823, %v857
  %v912 = vsel %vm291, %v824, %v859
  %v913 = vsel %vm291, %v825, %v861
  %v914 = vsel %vm291, %v826, %v863
  %v915 = vsel %vm291, %v827, %v865
  %v916 = vsel %vm291, %v828, %v867
  %v917 = vsel %vm291, %v829, %v869
  %v918 = vsel %vm308, %v910, %v887
  %v919 = vsel %vm308, %v911, %v889
  %v920 = vsel %vm308, %v912, %v891
  %v921 = vsel %vm308, %v913, %v893
  %v922 = vsel %vm308, %v914, %v895
  %v923 = vsel %vm308, %v915, %v897
  %v924 = vsel %vm308, %v916, %v899
  %v925 = vsel %vm308, %v917, %v901
  %v926 = vld [vmem:[%s3] sm:$0xff]
  %v927 = vld [vmem:[%s3 + $0x8] sm:$0xff]
  %v928 = vld [vmem:[%s3 + $0x10] sm:$0xff]
  %v929 = vld [vmem:[%s4] sm:$0x1]
  %v931 = vlaneseq
  %v932 = vshrl.u32 %v931, 7
  %v933 = vsub.s32 0, %v932
  %v934 = vrot.slane %v929, %v933
  %v937 = vsel %vm335, %v918, 0
  %v940 = vsel %vm335, %v919, 0
  %v943 = vsel %vm335, %v920, 0
  %v946 = vsel %vm335, %v921, 0
  %v949 = vsel %vm335, %v922, 0
  %v952 = vsel %vm335, %v923, 0
  %v955 = vsel %vm335, %v924, 0
  %v958 = vsel %vm335, %v925, 0
  %960 = vmatprep.subr.mxu0 0.0
  %961 = vmatpush1.msra.mxu0 %v926
  %962 = vmatprep.subr.mxu0 0.0
  %963 = vmatpush1.msra.mxu0 %v927
  %964 = vmatprep.subr.mxu0 0.0
  %965 = vmatpush1.msra.mxu0 %v928
  %966 = vmatprep.subr.mxu0 0.0
  %967 = vmatpush1.msra.mxu0 0.0
  %968 = vmatprep.subr.mxu0 0.0
  %969 = vmatpush1.msra.mxu0 0.0
  %970 = vmatprep.subr.mxu0 0.0
  %971 = vmatpush1.msra.mxu0 0.0
  %972 = vmatprep.subr.mxu0 0.0
  %973 = vmatpush1.msra.mxu0 0.0
  %974 = vmatprep.subr.mxu0 0.0
  %975 = vmatpush1.msra.mxu0 0.0
  %976 = vmatprep.subr.mxu0 0.0
  %977 = vmatpush1.msra.mxu0 0.0
  %978 = vmatprep.subr.mxu0 0.0
  %979 = vmatpush1.msra.mxu0 0.0
  %980 = vmatprep.subr.mxu0 0.0
  %981 = vmatpush1.msra.mxu0 0.0
  %982 = vmatprep.subr.mxu0 0.0
  %983 = vmatpush1.msra.mxu0 0.0
  %984 = vmatprep.subr.mxu0 0.0
  %985 = vmatpush1.msra.mxu0 0.0
  %986 = vmatprep.subr.mxu0 0.0
  %987 = vmatpush1.msra.mxu0 0.0
  %988 = vmatprep.subr.mxu0 0.0
  %989 = vmatpush1.msra.mxu0 0.0
  %990 = vmatprep.subr.mxu0 0.0
  %991 = vmatpush1.msra.mxu0 0.0
  %992 = vmatprep.subr.mxu0 0.0
  %993 = vmatpush1.msra.mxu0 0.0
  %994 = vmatprep.subr.mxu0 0.0
  %995 = vmatpush1.msra.mxu0 0.0
  %996 = vmatprep.subr.mxu0 0.0
  %997 = vmatpush1.msra.mxu0 0.0
  %998 = vmatprep.subr.mxu0 0.0
  %999 = vmatpush1.msra.mxu0 0.0
  %1000 = vmatprep.subr.mxu0 0.0
  %1001 = vmatpush1.msra.mxu0 0.0
  %1002 = vmatprep.subr.mxu0 0.0
  %1003 = vmatpush1.msra.mxu0 0.0
  %1004 = vmatprep.subr.mxu0 0.0
  %1005 = vmatpush1.msra.mxu0 0.0
  %1006 = vmatprep.subr.mxu0 0.0
  %1007 = vmatpush1.msra.mxu0 0.0
  %1008 = vmatprep.subr.mxu0 0.0
  %1009 = vmatpush1.msra.mxu0 0.0
  %1010 = vmatprep.subr.mxu0 0.0
  %1011 = vmatpush1.msra.mxu0 0.0
  %1012 = vmatprep.subr.mxu0 0.0
  %1013 = vmatpush1.msra.mxu0 0.0
  %1014 = vmatprep.subr.mxu0 0.0
  %1015 = vmatpush1.msra.mxu0 0.0
  %1016 = vmatprep.subr.mxu0 0.0
  %1017 = vmatpush1.msra.mxu0 0.0
  %1018 = vmatprep.subr.mxu0 0.0
  %1019 = vmatpush1.msra.mxu0 0.0
  %1020 = vmatprep.subr.mxu0 0.0
  %1021 = vmatpush1.msra.mxu0 0.0
  %1022 = vmatprep.subr.mxu0 0.0
  %1023 = vmatpush1.msra.mxu0 0.0
  %1024 = vmatprep.mubr.f32.mxu0 0.0
  %1025 = vmatmul.mubr.f32.gmra.mrb[0].mxu0 %v937
  %v1026 = vpop.f32.mrb[0].mxu0
  %v1027 = vadd.f32 %v934, %v1026
  %v1028 = vpop.f32.mrb[0].mxu0
  %1029 = vmatprep.mubr.f32.mxu0 0.0
  %1030 = vmatmul.mubr.f32.gmra.mrb[0].mxu0 %v940
  %v1031 = vpop.f32.mrb[0].mxu0
  %v1032 = vadd.f32 %v934, %v1031
  %v1033 = vpop.f32.mrb[0].mxu0
  %1034 = vmatprep.mubr.f32.mxu0 0.0
  %1035 = vmatmul.mubr.f32.gmra.mrb[0].mxu0 %v943
  %v1036 = vpop.f32.mrb[0].mxu0
  %v1037 = vadd.f32 %v934, %v1036
  %v1038 = vpop.f32.mrb[0].mxu0
  %1039 = vmatprep.mubr.f32.mxu0 0.0
  %1040 = vmatmul.mubr.f32.gmra.mrb[0].mxu0 %v946
  %v1041 = vpop.f32.mrb[0].mxu0
  %v1042 = vadd.f32 %v934, %v1041
  %v1043 = vpop.f32.mrb[0].mxu0
  %1044 = vmatprep.mubr.f32.mxu0 0.0
  %1045 = vmatmul.mubr.f32.gmra.mrb[0].mxu0 %v949
  %v1046 = vpop.f32.mrb[0].mxu0
  %v1047 = vadd.f32 %v934, %v1046
  %v1048 = vpop.f32.mrb[0].mxu0
  %1049 = vmatprep.mubr.f32.mxu0 0.0
  %1050 = vmatmul.mubr.f32.gmra.mrb[0].mxu0 %v952
  %v1051 = vpop.f32.mrb[0].mxu0
  %v1052 = vadd.f32 %v934, %v1051
  %v1053 = vpop.f32.mrb[0].mxu0
  %1054 = vmatprep.mubr.f32.mxu0 0.0
  %1055 = vmatmul.mubr.f32.gmra.mrb[0].mxu0 %v955
  %v1056 = vpop.f32.mrb[0].mxu0
  %v1057 = vadd.f32 %v934, %v1056
  %v1058 = vpop.f32.mrb[0].mxu0
  %1059 = vmatprep.mubr.f32.mxu0 0.0
  %1060 = vmatmul.mubr.f32.gmra.mrb[0].mxu0 %v958
  %v1061 = vpop.f32.mrb[0].mxu0
  %v1062 = vadd.f32 %v934, %v1061
  %v1063 = vpop.f32.mrb[0].mxu0
  %1064 = vdwg.mxu0
  %v1065 = vmax.f32 %v1027, 0.0
  %v1066 = vmax.f32 %v1032, 0.0
  %v1067 = vmax.f32 %v1037, 0.0
  %v1068 = vmax.f32 %v1042, 0.0
  %v1069 = vmax.f32 %v1047, 0.0
  %v1070 = vmax.f32 %v1052, 0.0
  %v1071 = vmax.f32 %v1057, 0.0
  %v1072 = vmax.f32 %v1062, 0.0
  %v1081 = vrot.slane %v1065, 7
  %v1082 = vrot.slane %v1066, 7
  %v1083 = vrot.slane %v1067, 7
  %v1084 = vrot.slane %v1068, 7
  %v1085 = vrot.slane %v1069, 7
  %v1086 = vrot.slane %v1070, 7
  %v1087 = vrot.slane %v1071, 7
  %v1088 = vrot.slane %v1072, 7
  %v1097 = vsel %vm97, 0.0, %v1081
  %v1098 = vsel %vm97, 0.0, %v1082
  %v1099 = vsel %vm97, 0.0, %v1083
  %v1100 = vsel %vm97, 0.0, %v1084
  %v1101 = vsel %vm97, 0.0, %v1085
  %v1102 = vsel %vm97, 0.0, %v1086
  %v1103 = vsel %vm97, 0.0, %v1087
  %v1104 = vsel %vm97, 0.0, %v1088
  %v1105 = vrot.slane %v1065, 1
  %v1106 = vrot.slane %v1066, 1
  %v1107 = vrot.slane %v1067, 1
  %v1108 = vrot.slane %v1068, 1
  %v1109 = vrot.slane %v1069, 1
  %v1110 = vrot.slane %v1070, 1
  %v1111 = vrot.slane %v1071, 1
  %v1112 = vrot.slane %v1072, 1
  %v1121 = vsel %vm146, %v1105, 0.0
  %v1122 = vsel %vm146, %v1106, 0.0
  %v1123 = vsel %vm146, %v1107, 0.0
  %v1124 = vsel %vm146, %v1108, 0.0
  %v1125 = vsel %vm146, %v1109, 0.0
  %v1126 = vsel %vm146, %v1110, 0.0
  %v1127 = vsel %vm146, %v1111, 0.0
  %v1128 = vsel %vm146, %v1112, 0.0
  %1129 = vrot.lane.b32.xlu0 %v1065, 8
  %v1130 = vpop.permute.xlu0 %1129
  %1131 = vrot.lane.b32.xlu0 %v1066, 8
  %v1132 = vpop.permute.xlu0 %1131
  %1133 = vrot.lane.b32.xlu0 %v1067, 8
  %v1134 = vpop.permute.xlu0 %1133
  %1135 = vrot.lane.b32.xlu0 %v1068, 8
  %v1136 = vpop.permute.xlu0 %1135
  %1137 = vrot.lane.b32.xlu0 %v1069, 8
  %v1138 = vpop.permute.xlu0 %1137
  %1139 = vrot.lane.b32.xlu0 %v1070, 8
  %v1140 = vpop.permute.xlu0 %1139
  %1141 = vrot.lane.b32.xlu0 %v1071, 8
  %v1142 = vpop.permute.xlu0 %1141
  %1143 = vrot.lane.b32.xlu0 %v1072, 8
  %v1144 = vpop.permute.xlu0 %1143
  %1161 = vrot.lane.b32.xlu0 %v1121, 16
  %v1162 = vpop.permute.xlu0 %1161
  %1163 = vrot.lane.b32.xlu0 %v1122, 16
  %v1164 = vpop.permute.xlu0 %1163
  %1165 = vrot.lane.b32.xlu0 %v1123, 16
  %v1166 = vpop.permute.xlu0 %1165
  %1167 = vrot.lane.b32.xlu0 %v1124, 16
  %v1168 = vpop.permute.xlu0 %1167
  %1169 = vrot.lane.b32.xlu0 %v1125, 16
  %v1170 = vpop.permute.xlu0 %1169
  %1171 = vrot.lane.b32.xlu0 %v1126, 16
  %v1172 = vpop.permute.xlu0 %1171
  %1173 = vrot.lane.b32.xlu0 %v1127, 16
  %v1174 = vpop.permute.xlu0 %1173
  %1175 = vrot.lane.b32.xlu0 %v1128, 16
  %v1176 = vpop.permute.xlu0 %1175
  %v1185 = vsel %vm291, %v1097, %v1130
  %v1186 = vsel %vm291, %v1098, %v1132
  %v1187 = vsel %vm291, %v1099, %v1134
  %v1188 = vsel %vm291, %v1100, %v1136
  %v1189 = vsel %vm291, %v1101, %v1138
  %v1190 = vsel %vm291, %v1102, %v1140
  %v1191 = vsel %vm291, %v1103, %v1142
  %v1192 = vsel %vm291, %v1104, %v1144
  %v1193 = vsel %vm308, %v1185, %v1162
  %v1194 = vsel %vm308, %v1186, %v1164
  %v1195 = vsel %vm308, %v1187, %v1166
  %v1196 = vsel %vm308, %v1188, %v1168
  %v1197 = vsel %vm308, %v1189, %v1170
  %v1198 = vsel %vm308, %v1190, %v1172
  %v1199 = vsel %vm308, %v1191, %v1174
  %v1200 = vsel %vm308, %v1192, %v1176
  %v1201 = vld [vmem:[%s5] sm:$0xff]
  %v1202 = vld [vmem:[%s5 + $0x8] sm:$0xff]
  %v1203 = vld [vmem:[%s5 + $0x10] sm:$0xff]
  %v1204 = vld [vmem:[%s6] sm:$0x1]
  %v1206 = vlaneseq
  %v1207 = vshrl.u32 %v1206, 7
  %v1208 = vsub.s32 0, %v1207
  %v1209 = vrot.slane %v1204, %v1208
  %v1212 = vsel %vm335, %v1193, 0
  %v1215 = vsel %vm335, %v1194, 0
  %v1218 = vsel %vm335, %v1195, 0
  %v1221 = vsel %vm335, %v1196, 0
  %v1224 = vsel %vm335, %v1197, 0
  %v1227 = vsel %vm335, %v1198, 0
  %v1230 = vsel %vm335, %v1199, 0
  %v1233 = vsel %vm335, %v1200, 0
  %1235 = vmatprep.subr.mxu0 0.0
  %1236 = vmatpush1.msra.mxu0 %v1201
  %1237 = vmatprep.subr.mxu0 0.0
  %1238 = vmatpush1.msra.mxu0 %v1202
  %1239 = vmatprep.subr.mxu0 0.0
  %1240 = vmatpush1.msra.mxu0 %v1203
  %1241 = vmatprep.subr.mxu0 0.0
  %1242 = vmatpush1.msra.mxu0 0.0
  %1243 = vmatprep.subr.mxu0 0.0
  %1244 = vmatpush1.msra.mxu0 0.0
  %1245 = vmatprep.subr.mxu0 0.0
  %1246 = vmatpush1.msra.mxu0 0.0
  %1247 = vmatprep.subr.mxu0 0.0
  %1248 = vmatpush1.msra.mxu0 0.0
  %1249 = vmatprep.subr.mxu0 0.0
  %1250 = vmatpush1.msra.mxu0 0.0
  %1251 = vmatprep.subr.mxu0 0.0
  %1252 = vmatpush1.msra.mxu0 0.0
  %1253 = vmatprep.subr.mxu0 0.0
  %1254 = vmatpush1.msra.mxu0 0.0
  %1255 = vmatprep.subr.mxu0 0.0
  %1256 = vmatpush1.msra.mxu0 0.0
  %1257 = vmatprep.subr.mxu0 0.0
  %1258 = vmatpush1.msra.mxu0 0.0
  %1259 = vmatprep.subr.mxu0 0.0
  %1260 = vmatpush1.msra.mxu0 0.0
  %1261 = vmatprep.subr.mxu0 0.0
  %1262 = vmatpush1.msra.mxu0 0.0
  %1263 = vmatprep.subr.mxu0 0.0
  %1264 = vmatpush1.msra.mxu0 0.0
  %1265 = vmatprep.subr.mxu0 0.0
  %1266 = vmatpush1.msra.mxu0 0.0
  %1267 = vmatprep.subr.mxu0 0.0
  %1268 = vmatpush1.msra.mxu0 0.0
  %1269 = vmatprep.subr.mxu0 0.0
  %1270 = vmatpush1.msra.mxu0 0.0
  %1271 = vmatprep.subr.mxu0 0.0
  %1272 = vmatpush1.msra.mxu0 0.0
  %1273 = vmatprep.subr.mxu0 0.0
  %1274 = vmatpush1.msra.mxu0 0.0
  %1275 = vmatprep.subr.mxu0 0.0
  %1276 = vmatpush1.msra.mxu0 0.0
  %1277 = vmatprep.subr.mxu0 0.0
  %1278 = vmatpush1.msra.mxu0 0.0
  %1279 = vmatprep.subr.mxu0 0.0
  %1280 = vmatpush1.msra.mxu0 0.0
  %1281 = vmatprep.subr.mxu0 0.0
  %1282 = vmatpush1.msra.mxu0 0.0
  %1283 = vmatprep.subr.mxu0 0.0
  %1284 = vmatpush1.msra.mxu0 0.0
  %1285 = vmatprep.subr.mxu0 0.0
  %1286 = vmatpush1.msra.mxu0 0.0
  %1287 = vmatprep.subr.mxu0 0.0
  %1288 = vmatpush1.msra.mxu0 0.0
  %1289 = vmatprep.subr.mxu0 0.0
  %1290 = vmatpush1.msra.mxu0 0.0
  %1291 = vmatprep.subr.mxu0 0.0
  %1292 = vmatpush1.msra.mxu0 0.0
  %1293 = vmatprep.subr.mxu0 0.0
  %1294 = vmatpush1.msra.mxu0 0.0
  %1295 = vmatprep.subr.mxu0 0.0
  %1296 = vmatpush1.msra.mxu0 0.0
  %1297 = vmatprep.subr.mxu0 0.0
  %1298 = vmatpush1.msra.mxu0 0.0
  %1299 = vmatprep.mubr.f32.mxu0 0.0
  %1300 = vmatmul.mubr.f32.gmra.mrb[0].mxu0 %v1212
  %v1301 = vpop.f32.mrb[0].mxu0
  %v1302 = vadd.f32 %v1209, %v1301
  %v1303 = vpop.f32.mrb[0].mxu0
  %1304 = vmatprep.mubr.f32.mxu0 0.0
  %1305 = vmatmul.mubr.f32.gmra.mrb[0].mxu0 %v1215
  %v1306 = vpop.f32.mrb[0].mxu0
  %v1307 = vadd.f32 %v1209, %v1306
  %v1308 = vpop.f32.mrb[0].mxu0
  %1309 = vmatprep.mubr.f32.mxu0 0.0
  %1310 = vmatmul.mubr.f32.gmra.mrb[0].mxu0 %v1218
  %v1311 = vpop.f32.mrb[0].mxu0
  %v1312 = vadd.f32 %v1209, %v1311
  %v1313 = vpop.f32.mrb[0].mxu0
  %1314 = vmatprep.mubr.f32.mxu0 0.0
  %1315 = vmatmul.mubr.f32.gmra.mrb[0].mxu0 %v1221
  %v1316 = vpop.f32.mrb[0].mxu0
  %v1317 = vadd.f32 %v1209, %v1316
  %v1318 = vpop.f32.mrb[0].mxu0
  %1319 = vmatprep.mubr.f32.mxu0 0.0
  %1320 = vmatmul.mubr.f32.gmra.mrb[0].mxu0 %v1224
  %v1321 = vpop.f32.mrb[0].mxu0
  %v1322 = vadd.f32 %v1209, %v1321
  %v1323 = vpop.f32.mrb[0].mxu0
  %1324 = vmatprep.mubr.f32.mxu0 0.0
  %1325 = vmatmul.mubr.f32.gmra.mrb[0].mxu0 %v1227
  %v1326 = vpop.f32.mrb[0].mxu0
  %v1327 = vadd.f32 %v1209, %v1326
  %v1328 = vpop.f32.mrb[0].mxu0
  %1329 = vmatprep.mubr.f32.mxu0 0.0
  %1330 = vmatmul.mubr.f32.gmra.mrb[0].mxu0 %v1230
  %v1331 = vpop.f32.mrb[0].mxu0
  %v1332 = vadd.f32 %v1209, %v1331
  %v1333 = vpop.f32.mrb[0].mxu0
  %1334 = vmatprep.mubr.f32.mxu0 0.0
  %1335 = vmatmul.mubr.f32.gmra.mrb[0].mxu0 %v1233
  %v1336 = vpop.f32.mrb[0].mxu0
  %v1337 = vadd.f32 %v1209, %v1336
  %v1338 = vpop.f32.mrb[0].mxu0
  %1339 = vdwg.mxu0
  %v1340 = vmax.f32 %v1302, 0.0
  %v1341 = vmax.f32 %v1307, 0.0
  %v1342 = vmax.f32 %v1312, 0.0
  %v1343 = vmax.f32 %v1317, 0.0
  %v1344 = vmax.f32 %v1322, 0.0
  %v1345 = vmax.f32 %v1327, 0.0
  %v1346 = vmax.f32 %v1332, 0.0
  %v1347 = vmax.f32 %v1337, 0.0
  %v1356 = vrot.slane %v1340, 7
  %v1357 = vrot.slane %v1341, 7
  %v1358 = vrot.slane %v1342, 7
  %v1359 = vrot.slane %v1343, 7
  %v1360 = vrot.slane %v1344, 7
  %v1361 = vrot.slane %v1345, 7
  %v1362 = vrot.slane %v1346, 7
  %v1363 = vrot.slane %v1347, 7
  %v1372 = vsel %vm97, 0.0, %v1356
  %v1373 = vsel %vm97, 0.0, %v1357
  %v1374 = vsel %vm97, 0.0, %v1358
  %v1375 = vsel %vm97, 0.0, %v1359
  %v1376 = vsel %vm97, 0.0, %v1360
  %v1377 = vsel %vm97, 0.0, %v1361
  %v1378 = vsel %vm97, 0.0, %v1362
  %v1379 = vsel %vm97, 0.0, %v1363
  %v1380 = vrot.slane %v1340, 1
  %v1381 = vrot.slane %v1341, 1
  %v1382 = vrot.slane %v1342, 1
  %v1383 = vrot.slane %v1343, 1
  %v1384 = vrot.slane %v1344, 1
  %v1385 = vrot.slane %v1345, 1
  %v1386 = vrot.slane %v1346, 1
  %v1387 = vrot.slane %v1347, 1
  %v1396 = vsel %vm146, %v1380, 0.0
  %v1397 = vsel %vm146, %v1381, 0.0
  %v1398 = vsel %vm146, %v1382, 0.0
  %v1399 = vsel %vm146, %v1383, 0.0
  %v1400 = vsel %vm146, %v1384, 0.0
  %v1401 = vsel %vm146, %v1385, 0.0
  %v1402 = vsel %vm146, %v1386, 0.0
  %v1403 = vsel %vm146, %v1387, 0.0
  %1404 = vrot.lane.b32.xlu0 %v1340, 16
  %v1405 = vpop.permute.xlu0 %1404
  %1406 = vrot.lane.b32.xlu0 %v1341, 16
  %v1407 = vpop.permute.xlu0 %1406
  %1408 = vrot.lane.b32.xlu0 %v1342, 16
  %v1409 = vpop.permute.xlu0 %1408
  %1410 = vrot.lane.b32.xlu0 %v1343, 16
  %v1411 = vpop.permute.xlu0 %1410
  %1412 = vrot.lane.b32.xlu0 %v1344, 16
  %v1413 = vpop.permute.xlu0 %1412
  %1414 = vrot.lane.b32.xlu0 %v1345, 16
  %v1415 = vpop.permute.xlu0 %1414
  %1416 = vrot.lane.b32.xlu0 %v1346, 16
  %v1417 = vpop.permute.xlu0 %1416
  %1418 = vrot.lane.b32.xlu0 %v1347, 16
  %v1419 = vpop.permute.xlu0 %1418
  %1436 = vrot.lane.b32.xlu0 %v1396, 32
  %v1437 = vpop.permute.xlu0 %1436
  %1438 = vrot.lane.b32.xlu0 %v1397, 32
  %v1439 = vpop.permute.xlu0 %1438
  %1440 = vrot.lane.b32.xlu0 %v1398, 32
  %v1441 = vpop.permute.xlu0 %1440
  %1442 = vrot.lane.b32.xlu0 %v1399, 32
  %v1443 = vpop.permute.xlu0 %1442
  %1444 = vrot.lane.b32.xlu0 %v1400, 32
  %v1445 = vpop.permute.xlu0 %1444
  %1446 = vrot.lane.b32.xlu0 %v1401, 32
  %v1447 = vpop.permute.xlu0 %1446
  %1448 = vrot.lane.b32.xlu0 %v1402, 32
  %v1449 = vpop.permute.xlu0 %1448
  %1450 = vrot.lane.b32.xlu0 %v1403, 32
  %v1451 = vpop.permute.xlu0 %1450
  %v1460 = vsel %vm308, %v1372, %v1405
  %v1461 = vsel %vm308, %v1373, %v1407
  %v1462 = vsel %vm308, %v1374, %v1409
  %v1463 = vsel %vm308, %v1375, %v1411
  %v1464 = vsel %vm308, %v1376, %v1413
  %v1465 = vsel %vm308, %v1377, %v1415
  %v1466 = vsel %vm308, %v1378, %v1417
  %v1467 = vsel %vm308, %v1379, %v1419
  %vm1468 = vcmask 261120
  %v1469 = vsel %vm1468, %v1460, %v1437
  %v1470 = vsel %vm1468, %v1461, %v1439
  %v1471 = vsel %vm1468, %v1462, %v1441
  %v1472 = vsel %vm1468, %v1463, %v1443
  %v1473 = vsel %vm1468, %v1464, %v1445
  %v1474 = vsel %vm1468, %v1465, %v1447
  %v1475 = vsel %vm1468, %v1466, %v1449
  %v1476 = vsel %vm1468, %v1467, %v1451
  %v1477 = vld [vmem:[%s7] sm:$0xff]
  %v1478 = vld [vmem:[%s7 + $0x8] sm:$0xff]
  %v1479 = vld [vmem:[%s7 + $0x10] sm:$0xff]
  %v1480 = vld [vmem:[%s7 + $0x18] sm:$0xff]
  %v1481 = vld [vmem:[%s7 + $0x20] sm:$0xff]
  %v1482 = vld [vmem:[%s7 + $0x28] sm:$0xff]
  %v1483 = vld [vmem:[%s8] sm:$0x1]
  %v1485 = vlaneseq
  %v1486 = vshrl.u32 %v1485, 7
  %v1487 = vsub.s32 0, %v1486
  %v1488 = vrot.slane %v1483, %v1487
  %vm1490 = vcmask 392192
  %v1492 = vsel %vm1490, %v1469, 0
  %v1495 = vsel %vm1490, %v1470, 0
  %v1498 = vsel %vm1490, %v1471, 0
  %v1501 = vsel %vm1490, %v1472, 0
  %v1504 = vsel %vm1490, %v1473, 0
  %v1507 = vsel %vm1490, %v1474, 0
  %v1510 = vsel %vm1490, %v1475, 0
  %v1513 = vsel %vm1490, %v1476, 0
  %1515 = vmatprep.subr.mxu0 0.0
  %1516 = vmatpush1.msra.mxu0 %v1477
  %1517 = vmatprep.subr.mxu0 0.0
  %1518 = vmatpush1.msra.mxu0 %v1478
  %1519 = vmatprep.subr.mxu0 0.0
  %1520 = vmatpush1.msra.mxu0 %v1479
  %1521 = vmatprep.subr.mxu0 0.0
  %1522 = vmatpush1.msra.mxu0 %v1480
  %1523 = vmatprep.subr.mxu0 0.0
  %1524 = vmatpush1.msra.mxu0 %v1481
  %1525 = vmatprep.subr.mxu0 0.0
  %1526 = vmatpush1.msra.mxu0 %v1482
  %1527 = vmatprep.subr.mxu0 0.0
  %1528 = vmatpush1.msra.mxu0 0.0
  %1529 = vmatprep.subr.mxu0 0.0
  %1530 = vmatpush1.msra.mxu0 0.0
  %1531 = vmatprep.subr.mxu0 0.0
  %1532 = vmatpush1.msra.mxu0 0.0
  %1533 = vmatprep.subr.mxu0 0.0
  %1534 = vmatpush1.msra.mxu0 0.0
  %1535 = vmatprep.subr.mxu0 0.0
  %1536 = vmatpush1.msra.mxu0 0.0
  %1537 = vmatprep.subr.mxu0 0.0
  %1538 = vmatpush1.msra.mxu0 0.0
  %1539 = vmatprep.subr.mxu0 0.0
  %1540 = vmatpush1.msra.mxu0 0.0
  %1541 = vmatprep.subr.mxu0 0.0
  %1542 = vmatpush1.msra.mxu0 0.0
  %1543 = vmatprep.subr.mxu0 0.0
  %1544 = vmatpush1.msra.mxu0 0.0
  %1545 = vmatprep.subr.mxu0 0.0
  %1546 = vmatpush1.msra.mxu0 0.0
  %1547 = vmatprep.subr.mxu0 0.0
  %1548 = vmatpush1.msra.mxu0 0.0
  %1549 = vmatprep.subr.mxu0 0.0
  %1550 = vmatpush1.msra.mxu0 0.0
  %1551 = vmatprep.subr.mxu0 0.0
  %1552 = vmatpush1.msra.mxu0 0.0
  %1553 = vmatprep.subr.mxu0 0.0
  %1554 = vmatpush1.msra.mxu0 0.0
  %1555 = vmatprep.subr.mxu0 0.0
  %1556 = vmatpush1.msra.mxu0 0.0
  %1557 = vmatprep.subr.mxu0 0.0
  %1558 = vmatpush1.msra.mxu0 0.0
  %1559 = vmatprep.subr.mxu0 0.0
  %1560 = vmatpush1.msra.mxu0 0.0
  %1561 = vmatprep.subr.mxu0 0.0
  %1562 = vmatpush1.msra.mxu0 0.0
  %1563 = vmatprep.subr.mxu0 0.0
  %1564 = vmatpush1.msra.mxu0 0.0
  %1565 = vmatprep.subr.mxu0 0.0
  %1566 = vmatpush1.msra.mxu0 0.0
  %1567 = vmatprep.subr.mxu0 0.0
  %1568 = vmatpush1.msra.mxu0 0.0
  %1569 = vmatprep.subr.mxu0 0.0
  %1570 = vmatpush1.msra.mxu0 0.0
  %1571 = vmatprep.subr.mxu0 0.0
  %1572 = vmatpush1.msra.mxu0 0.0
  %1573 = vmatprep.subr.mxu0 0.0
  %1574 = vmatpush1.msra.mxu0 0.0
  %1575 = vmatprep.subr.mxu0 0.0
  %1576 = vmatpush1.msra.mxu0 0.0
  %1577 = vmatprep.subr.mxu0 0.0
  %1578 = vmatpush1.msra.mxu0 0.0
  %1579 = vmatprep.mubr.f32.mxu0 0.0
  %1580 = vmatmul.mubr.f32.gmra.mrb[0].mxu0 %v1492
  %v1581 = vpop.f32.mrb[0].mxu0
  %v1582 = vadd.f32 %v1488, %v1581
  %v1583 = vpop.f32.mrb[0].mxu0
  %1584 = vmatprep.mubr.f32.mxu0 0.0
  %1585 = vmatmul.mubr.f32.gmra.mrb[0].mxu0 %v1495
  %v1586 = vpop.f32.mrb[0].mxu0
  %v1587 = vadd.f32 %v1488, %v1586
  %v1588 = vpop.f32.mrb[0].mxu0
  %1589 = vmatprep.mubr.f32.mxu0 0.0
  %1590 = vmatmul.mubr.f32.gmra.mrb[0].mxu0 %v1498
  %v1591 = vpop.f32.mrb[0].mxu0
  %v1592 = vadd.f32 %v1488, %v1591
  %v1593 = vpop.f32.mrb[0].mxu0
  %1594 = vmatprep.mubr.f32.mxu0 0.0
  %1595 = vmatmul.mubr.f32.gmra.mrb[0].mxu0 %v1501
  %v1596 = vpop.f32.mrb[0].mxu0
  %v1597 = vadd.f32 %v1488, %v1596
  %v1598 = vpop.f32.mrb[0].mxu0
  %1599 = vmatprep.mubr.f32.mxu0 0.0
  %1600 = vmatmul.mubr.f32.gmra.mrb[0].mxu0 %v1504
  %v1601 = vpop.f32.mrb[0].mxu0
  %v1602 = vadd.f32 %v1488, %v1601
  %v1603 = vpop.f32.mrb[0].mxu0
  %1604 = vmatprep.mubr.f32.mxu0 0.0
  %1605 = vmatmul.mubr.f32.gmra.mrb[0].mxu0 %v1507
  %v1606 = vpop.f32.mrb[0].mxu0
  %v1607 = vadd.f32 %v1488, %v1606
  %v1608 = vpop.f32.mrb[0].mxu0
  %1609 = vmatprep.mubr.f32.mxu0 0.0
  %1610 = vmatmul.mubr.f32.gmra.mrb[0].mxu0 %v1510
  %v1611 = vpop.f32.mrb[0].mxu0
  %v1612 = vadd.f32 %v1488, %v1611
  %v1613 = vpop.f32.mrb[0].mxu0
  %1614 = vmatprep.mubr.f32.mxu0 0.0
  %1615 = vmatmul.mubr.f32.gmra.mrb[0].mxu0 %v1513
  %v1616 = vpop.f32.mrb[0].mxu0
  %v1617 = vadd.f32 %v1488, %v1616
  %v1618 = vpop.f32.mrb[0].mxu0
  %1619 = vdwg.mxu0
  %v1620 = vmax.f32 %v1582, 0.0
  %v1621 = vmax.f32 %v1587, 0.0
  %v1622 = vmax.f32 %v1592, 0.0
  %v1623 = vmax.f32 %v1597, 0.0
  %v1624 = vmax.f32 %v1602, 0.0
  %v1625 = vmax.f32 %v1607, 0.0
  %v1626 = vmax.f32 %v1612, 0.0
  %v1627 = vmax.f32 %v1617, 0.0
  %v1636 = vrot.slane %v1620, 1
  %v1637 = vrot.slane %v1621, 1
  %v1638 = vrot.slane %v1622, 1
  %v1639 = vrot.slane %v1623, 1
  %v1640 = vrot.slane %v1624, 1
  %v1641 = vrot.slane %v1625, 1
  %v1642 = vrot.slane %v1626, 1
  %v1643 = vrot.slane %v1627, 1
  %v1652 = vmax.f32 %v1620, %v1636
  %v1653 = vmax.f32 %v1621, %v1637
  %v1654 = vmax.f32 %v1622, %v1638
  %v1655 = vmax.f32 %v1623, %v1639
  %v1656 = vmax.f32 %v1624, %v1640
  %v1657 = vmax.f32 %v1625, %v1641
  %v1658 = vmax.f32 %v1626, %v1642
  %v1659 = vmax.f32 %v1627, %v1643
  %v1668 = vrot.slane %v1652, 1
  %v1669 = vrot.slane %v1653, 1
  %v1670 = vrot.slane %v1654, 1
  %v1671 = vrot.slane %v1655, 1
  %v1672 = vrot.slane %v1656, 1
  %v1673 = vrot.slane %v1657, 1
  %v1674 = vrot.slane %v1658, 1
  %v1675 = vrot.slane %v1659, 1
  %v1684 = vrot.slane %v1652, 2
  %v1685 = vrot.slane %v1653, 2
  %v1686 = vrot.slane %v1654, 2
  %v1687 = vrot.slane %v1655, 2
  %v1688 = vrot.slane %v1656, 2
  %v1689 = vrot.slane %v1657, 2
  %v1690 = vrot.slane %v1658, 2
  %v1691 = vrot.slane %v1659, 2
  %v1700 = vrot.slane %v1652, 3
  %v1701 = vrot.slane %v1653, 3
  %v1702 = vrot.slane %v1654, 3
  %v1703 = vrot.slane %v1655, 3
  %v1704 = vrot.slane %v1656, 3
  %v1705 = vrot.slane %v1657, 3
  %v1706 = vrot.slane %v1658, 3
  %v1707 = vrot.slane %v1659, 3
  %v1716 = vsel %vm97, %v1652, %v1668
  %v1717 = vsel %vm97, %v1653, %v1669
  %v1718 = vsel %vm97, %v1654, %v1670
  %v1719 = vsel %vm97, %v1655, %v1671
  %v1720 = vsel %vm97, %v1656, %v1672
  %v1721 = vsel %vm97, %v1657, %v1673
  %v1722 = vsel %vm97, %v1658, %v1674
  %v1723 = vsel %vm97, %v1659, %v1675
  %v1724 = vsel %vm745, %v1716, %v1684
  %v1725 = vsel %vm745, %v1717, %v1685
  %v1726 = vsel %vm745, %v1718, %v1686
  %v1727 = vsel %vm745, %v1719, %v1687
  %v1728 = vsel %vm745, %v1720, %v1688
  %v1729 = vsel %vm745, %v1721, %v1689
  %v1730 = vsel %vm745, %v1722, %v1690
  %v1731 = vsel %vm745, %v1723, %v1691
  %v1732 = vsel %vm754, %v1724, %v1700
  %v1733 = vsel %vm754, %v1725, %v1701
  %v1734 = vsel %vm754, %v1726, %v1702
  %v1735 = vsel %vm754, %v1727, %v1703
  %v1736 = vsel %vm754, %v1728, %v1704
  %v1737 = vsel %vm754, %v1729, %v1705
  %v1738 = vsel %vm754, %v1730, %v1706
  %v1739 = vsel %vm754, %v1731, %v1707
  %v1740 = vld [vmem:[%s9] sm:$0xff]
  %v1741 = vld [vmem:[%s9 + $0x8] sm:$0xff]
  %v1742 = vld [vmem:[%s11] sm:$0x1]
  %v1744 = vlaneseq
  %v1745 = vshrl.u32 %v1744, 7
  %v1746 = vsub.s32 0, %v1745
  %v1747 = vrot.slane %v1742, %v1746
  %v1757 = vcombine.low %v1732, %v1733
  %v1758 = vcombine.low %v1734, %v1735
  %v1759 = vcombine.low %v1736, %v1737
  %v1760 = vcombine.low %v1738, %v1739
  %v1761 = vsel %vm308, %v1757, 0
  %v1763 = vsel %vm308, %v1758, 0
  %v1765 = vsel %vm308, %v1759, 0
  %v1767 = vsel %vm308, %v1760, 0
  %1769 = vmatprep.subr.mxu0 0.0
  %1770 = vmatpush1.msra.mxu0 %v1740
  %1771 = vmatprep.subr.mxu0 0.0
  %1772 = vmatpush1.msra.mxu0 %v1741
  %1773 = vmatprep.subr.mxu0 0.0
  %1774 = vmatpush1.msra.mxu0 0.0
  %1775 = vmatprep.subr.mxu0 0.0
  %1776 = vmatpush1.msra.mxu0 0.0
  %1777 = vmatprep.subr.mxu0 0.0
  %1778 = vmatpush1.msra.mxu0 0.0
  %1779 = vmatprep.subr.mxu0 0.0
  %1780 = vmatpush1.msra.mxu0 0.0
  %1781 = vmatprep.subr.mxu0 0.0
  %1782 = vmatpush1.msra.mxu0 0.0
  %1783 = vmatprep.subr.mxu0 0.0
  %1784 = vmatpush1.msra.mxu0 0.0
  %1785 = vmatprep.subr.mxu0 0.0
  %1786 = vmatpush1.msra.mxu0 0.0
  %1787 = vmatprep.subr.mxu0 0.0
  %1788 = vmatpush1.msra.mxu0 0.0
  %1789 = vmatprep.subr.mxu0 0.0
  %1790 = vmatpush1.msra.mxu0 0.0
  %1791 = vmatprep.subr.mxu0 0.0
  %1792 = vmatpush1.msra.mxu0 0.0
  %1793 = vmatprep.subr.mxu0 0.0
  %1794 = vmatpush1.msra.mxu0 0.0
  %1795 = vmatprep.subr.mxu0 0.0
  %1796 = vmatpush1.msra.mxu0 0.0
  %1797 = vmatprep.subr.mxu0 0.0
  %1798 = vmatpush1.msra.mxu0 0.0
  %1799 = vmatprep.subr.mxu0 0.0
  %1800 = vmatpush1.msra.mxu0 0.0
  %1801 = vmatprep.subr.mxu0 0.0
  %1802 = vmatpush1.msra.mxu0 0.0
  %1803 = vmatprep.subr.mxu0 0.0
  %1804 = vmatpush1.msra.mxu0 0.0
  %1805 = vmatprep.subr.mxu0 0.0
  %1806 = vmatpush1.msra.mxu0 0.0
  %1807 = vmatprep.subr.mxu0 0.0
  %1808 = vmatpush1.msra.mxu0 0.0
  %1809 = vmatprep.subr.mxu0 0.0
  %1810 = vmatpush1.msra.mxu0 0.0
  %1811 = vmatprep.subr.mxu0 0.0
  %1812 = vmatpush1.msra.mxu0 0.0
  %1813 = vmatprep.subr.mxu0 0.0
  %1814 = vmatpush1.msra.mxu0 0.0
  %1815 = vmatprep.subr.mxu0 0.0
  %1816 = vmatpush1.msra.mxu0 0.0
  %1817 = vmatprep.subr.mxu0 0.0
  %1818 = vmatpush1.msra.mxu0 0.0
  %1819 = vmatprep.subr.mxu0 0.0
  %1820 = vmatpush1.msra.mxu0 0.0
  %1821 = vmatprep.subr.mxu0 0.0
  %1822 = vmatpush1.msra.mxu0 0.0
  %1823 = vmatprep.subr.mxu0 0.0
  %1824 = vmatpush1.msra.mxu0 0.0
  %1825 = vmatprep.subr.mxu0 0.0
  %1826 = vmatpush1.msra.mxu0 0.0
  %1827 = vmatprep.subr.mxu0 0.0
  %1828 = vmatpush1.msra.mxu0 0.0
  %1829 = vmatprep.subr.mxu0 0.0
  %1830 = vmatpush1.msra.mxu0 0.0
  %1831 = vmatprep.subr.mxu0 0.0
  %1832 = vmatpush1.msra.mxu0 0.0
  %1833 = vmatprep.mubr.f32.mxu0 0.0
  %1834 = vmatmul.mubr.f32.gmra.mrb[0].mxu0 %v1761
  %v1835 = vpop.f32.mrb[0].mxu0
  %v1836 = vadd.f32 %v1747, %v1835
  %v1837 = vpop.f32.mrb[0].mxu0
  %1838 = vmatprep.mubr.f32.mxu0 0.0
  %1839 = vmatmul.mubr.f32.gmra.mrb[0].mxu0 %v1763
  %v1840 = vpop.f32.mrb[0].mxu0
  %v1841 = vadd.f32 %v1747, %v1840
  %v1842 = vpop.f32.mrb[0].mxu0
  %1843 = vmatprep.mubr.f32.mxu0 0.0
  %1844 = vmatmul.mubr.f32.gmra.mrb[0].mxu0 %v1765
  %v1845 = vpop.f32.mrb[0].mxu0
  %v1846 = vadd.f32 %v1747, %v1845
  %v1847 = vpop.f32.mrb[0].mxu0
  %1848 = vmatprep.mubr.f32.mxu0 0.0
  %1849 = vmatmul.mubr.f32.gmra.mrb[0].mxu0 %v1767
  %v1850 = vpop.f32.mrb[0].mxu0
  %v1851 = vadd.f32 %v1747, %v1850
  %v1852 = vpop.f32.mrb[0].mxu0
  %1853 = vdwg.mxu0
  %v1858 = vcombine.high %v1836, %v1836
  %v1859 = vcombine.high %v1841, %v1841
  %v1860 = vcombine.high %v1846, %v1846
  %v1861 = vcombine.high %v1851, %v1851
  %v1866 = vld [vmem:[%s10] sm:$0xff]
  %v1867 = vld [vmem:[%s10 + $0x8] sm:$0xff]
  %v1868 = vld [vmem:[%s10 + $0x10] sm:$0xff]
  %v1869 = vld [vmem:[%s10 + $0x18] sm:$0xff]
  %v1871 = vsel %vm1468, 0.0, 0
  %1873 = vmatprep.subr.mxu0 0.0
  %1874 = vmatpush1.msra.mxu0 %v1866
  %1875 = vmatprep.subr.mxu0 0.0
  %1876 = vmatpush1.msra.mxu0 %v1867
  %1877 = vmatprep.subr.mxu0 0.0
  %1878 = vmatpush1.msra.mxu0 %v1868
  %1879 = vmatprep.subr.mxu0 0.0
  %1880 = vmatpush1.msra.mxu0 %v1869
  %1881 = vmatprep.subr.mxu0 0.0
  %1882 = vmatpush1.msra.mxu0 0.0
  %1883 = vmatprep.subr.mxu0 0.0
  %1884 = vmatpush1.msra.mxu0 0.0
  %1885 = vmatprep.subr.mxu0 0.0
  %1886 = vmatpush1.msra.mxu0 0.0
  %1887 = vmatprep.subr.mxu0 0.0
  %1888 = vmatpush1.msra.mxu0 0.0
  %1889 = vmatprep.subr.mxu0 0.0
  %1890 = vmatpush1.msra.mxu0 0.0
  %1891 = vmatprep.subr.mxu0 0.0
  %1892 = vmatpush1.msra.mxu0 0.0
  %1893 = vmatprep.subr.mxu0 0.0
  %1894 = vmatpush1.msra.mxu0 0.0
  %1895 = vmatprep.subr.mxu0 0.0
  %1896 = vmatpush1.msra.mxu0 0.0
  %1897 = vmatprep.subr.mxu0 0.0
  %1898 = vmatpush1.msra.mxu0 0.0
  %1899 = vmatprep.subr.mxu0 0.0
  %1900 = vmatpush1.msra.mxu0 0.0
  %1901 = vmatprep.subr.mxu0 0.0
  %1902 = vmatpush1.msra.mxu0 0.0
  %1903 = vmatprep.subr.mxu0 0.0
  %1904 = vmatpush1.msra.mxu0 0.0
  %1905 = vmatprep.subr.mxu0 0.0
  %1906 = vmatpush1.msra.mxu0 0.0
  %1907 = vmatprep.subr.mxu0 0.0
  %1908 = vmatpush1.msra.mxu0 0.0
  %1909 = vmatprep.subr.mxu0 0.0
  %1910 = vmatpush1.msra.mxu0 0.0
  %1911 = vmatprep.subr.mxu0 0.0
  %1912 = vmatpush1.msra.mxu0 0.0
  %1913 = vmatprep.subr.mxu0 0.0
  %1914 = vmatpush1.msra.mxu0 0.0
  %1915 = vmatprep.subr.mxu0 0.0
  %1916 = vmatpush1.msra.mxu0 0.0
  %1917 = vmatprep.subr.mxu0 0.0
  %1918 = vmatpush1.msra.mxu0 0.0
  %1919 = vmatprep.subr.mxu0 0.0
  %1920 = vmatpush1.msra.mxu0 0.0
  %1921 = vmatprep.subr.mxu0 0.0
  %1922 = vmatpush1.msra.mxu0 0.0
  %1923 = vmatprep.subr.mxu0 0.0
  %1924 = vmatpush1.msra.mxu0 0.0
  %1925 = vmatprep.subr.mxu0 0.0
  %1926 = vmatpush1.msra.mxu0 0.0
  %1927 = vmatprep.subr.mxu0 0.0
  %1928 = vmatpush1.msra.mxu0 0.0
  %1929 = vmatprep.subr.mxu0 0.0
  %1930 = vmatpush1.msra.mxu0 0.0
  %1931 = vmatprep.subr.mxu0 0.0
  %1932 = vmatpush1.msra.mxu0 0.0
  %1933 = vmatprep.subr.mxu0 0.0
  %1934 = vmatpush1.msra.mxu0 0.0
  %1935 = vmatprep.subr.mxu0 0.0
  %1936 = vmatpush1.msra.mxu0 0.0
  %1937 = vmatprep.mubr.f32.mxu0 0.0
  %1938 = vmatmul.mubr.f32.gmra.mrb[0].mxu0 %v1871
  %v1939 = vpop.f32.mrb[0].mxu0
  %v1940 = vadd.f32 0.0, %v1939
  %v1941 = vpop.f32.mrb[0].mxu0
  %1942 = vdwg.mxu0
  %v1944 = vcombine.high %v1940, %v1940
  %v1945 = vrot.slane %v1940, 1
  %v1946 = vrot.slane %v1940, 2
  %v1947 = vrot.slane %v1940, 3
  %v1948 = vrot.slane %v1944, 1
  %v1949 = vrot.slane %v1944, 2
  %v1950 = vrot.slane %v1944, 3
  %v1959 = vadd.f32 %v1836, %v1940
  %v1960 = vadd.f32 %v1858, %v1945
  %v1961 = vadd.f32 %v1841, %v1946
  %v1962 = vadd.f32 %v1859, %v1947
  %v1963 = vadd.f32 %v1846, %v1944
  %v1964 = vadd.f32 %v1860, %v1948
  %v1965 = vadd.f32 %v1851, %v1949
  %v1966 = vadd.f32 %v1861, %v1950
  %v1967 = vrot.slane %v1940, 5
  %v1968 = vrot.slane %v1940, 6
  %v1969 = vrot.slane %v1940, 7
  %v1970 = vrot.slane %v1944, 5
  %v1971 = vrot.slane %v1944, 6
  %v1972 = vrot.slane %v1944, 7
  %v1979 = vadd.f32 %v1836, %v1967
  %v1980 = vadd.f32 %v1858, %v1968
  %v1981 = vadd.f32 %v1841, %v1969
  %v1982 = vadd.f32 %v1859, %v1940
  %v1983 = vadd.f32 %v1846, %v1970
  %v1984 = vadd.f32 %v1860, %v1971
  %v1985 = vadd.f32 %v1851, %v1972
  %v1986 = vadd.f32 %v1861, %v1944
  %v1987 = vxor.u32 %v1959, 2147483648
  %v1988 = vxor.u32 %v1960, 2147483648
  %v1989 = vxor.u32 %v1961, 2147483648
  %v1990 = vxor.u32 %v1962, 2147483648
  %v1991 = vxor.u32 %v1963, 2147483648
  %v1992 = vxor.u32 %v1964, 2147483648
  %v1993 = vxor.u32 %v1965, 2147483648
  %v1994 = vxor.u32 %v1966, 2147483648
  %v1995 = vmul.f32 %v1987, 1.442695
  %v1996 = vpow.pop %v1995
  %v1997 = vmul.f32 %v1988, 1.442695
  %v1998 = vpow.pop %v1997
  %v1999 = vmul.f32 %v1989, 1.442695
  %v2000 = vpow.pop %v1999
  %v2001 = vmul.f32 %v1990, 1.442695
  %v2002 = vpow.pop %v2001
  %v2003 = vmul.f32 %v1991, 1.442695
  %v2004 = vpow.pop %v2003
  %v2005 = vmul.f32 %v1992, 1.442695
  %v2006 = vpow.pop %v2005
  %v2007 = vmul.f32 %v1993, 1.442695
  %v2008 = vpow.pop %v2007
  %v2009 = vmul.f32 %v1994, 1.442695
  %v2010 = vpow.pop %v2009
  %v2011 = vadd.f32 %v1996, 1.0
  %v2012 = vadd.f32 %v1998, 1.0
  %v2013 = vadd.f32 %v2000, 1.0
  %v2014 = vadd.f32 %v2002, 1.0
  %v2015 = vadd.f32 %v2004, 1.0
  %v2016 = vadd.f32 %v2006, 1.0
  %v2017 = vadd.f32 %v2008, 1.0
  %v2018 = vadd.f32 %v2010, 1.0
  %v2019 = vrcp.pop %v2011
  %v2020 = vmul.f32 1.0, %v2019
  %v2021 = vrcp.pop %v2012
  %v2022 = vmul.f32 1.0, %v2021
  %v2023 = vrcp.pop %v2013
  %v2024 = vmul.f32 1.0, %v2023
  %v2025 = vrcp.pop %v2014
  %v2026 = vmul.f32 1.0, %v2025
  %v2027 = vrcp.pop %v2015
  %v2028 = vmul.f32 1.0, %v2027
  %v2029 = vrcp.pop %v2016
  %v2030 = vmul.f32 1.0, %v2029
  %v2031 = vrcp.pop %v2017
  %v2032 = vmul.f32 1.0, %v2031
  %v2033 = vrcp.pop %v2018
  %v2034 = vmul.f32 1.0, %v2033
  %v2035 = vtanh.pop %v1959
  %v2036 = vtanh.pop %v1960
  %v2037 = vtanh.pop %v1961
  %v2038 = vtanh.pop %v1962
  %v2039 = vtanh.pop %v1963
  %v2040 = vtanh.pop %v1964
  %v2041 = vtanh.pop %v1965
  %v2042 = vtanh.pop %v1966
  %v2043 = vmul.f32 %v2020, 0.0
  %v2044 = vmul.f32 %v2022, 0.0
  %v2045 = vmul.f32 %v2024, 0.0
  %v2046 = vmul.f32 %v2026, 0.0
  %v2047 = vmul.f32 %v2028, 0.0
  %v2048 = vmul.f32 %v2030, 0.0
  %v2049 = vmul.f32 %v2032, 0.0
  %v2050 = vmul.f32 %v2034, 0.0
  %2059 = vrot.lane.b32.xlu0 %v2035, 96
  %v2060 = vpop.permute.xlu0 %2059
  %2061 = vrot.lane.b32.xlu0 %v2036, 96
  %v2062 = vpop.permute.xlu0 %2061
  %2063 = vrot.lane.b32.xlu0 %v2037, 96
  %v2064 = vpop.permute.xlu0 %2063
  %2065 = vrot.lane.b32.xlu0 %v2038, 96
  %v2066 = vpop.permute.xlu0 %2065
  %2067 = vrot.lane.b32.xlu0 %v2039, 96
  %v2068 = vpop.permute.xlu0 %2067
  %2069 = vrot.lane.b32.xlu0 %v2040, 96
  %v2070 = vpop.permute.xlu0 %2069
  %2071 = vrot.lane.b32.xlu0 %v2041, 96
  %v2072 = vpop.permute.xlu0 %2071
  %2073 = vrot.lane.b32.xlu0 %v2042, 96
  %v2074 = vpop.permute.xlu0 %2073
  %v2083 = vmul.f32 %v2020, %v2060
  %v2084 = vmul.f32 %v2022, %v2062
  %v2085 = vmul.f32 %v2024, %v2064
  %v2086 = vmul.f32 %v2026, %v2066
  %v2087 = vmul.f32 %v2028, %v2068
  %v2088 = vmul.f32 %v2030, %v2070
  %v2089 = vmul.f32 %v2032, %v2072
  %v2090 = vmul.f32 %v2034, %v2074
  %2099 = vrot.lane.b32.xlu0 %v2083, 16
  %v2100 = vpop.permute.xlu0 %2099
  %2101 = vrot.lane.b32.xlu0 %v2084, 16
  %v2102 = vpop.permute.xlu0 %2101
  %2103 = vrot.lane.b32.xlu0 %v2085, 16
  %v2104 = vpop.permute.xlu0 %2103
  %2105 = vrot.lane.b32.xlu0 %v2086, 16
  %v2106 = vpop.permute.xlu0 %2105
  %2107 = vrot.lane.b32.xlu0 %v2087, 16
  %v2108 = vpop.permute.xlu0 %2107
  %2109 = vrot.lane.b32.xlu0 %v2088, 16
  %v2110 = vpop.permute.xlu0 %2109
  %2111 = vrot.lane.b32.xlu0 %v2089, 16
  %v2112 = vpop.permute.xlu0 %2111
  %2113 = vrot.lane.b32.xlu0 %v2090, 16
  %v2114 = vpop.permute.xlu0 %2113
  %v2123 = vadd.f32 %v2043, %v2100
  %v2124 = vadd.f32 %v2044, %v2102
  %v2125 = vadd.f32 %v2045, %v2104
  %v2126 = vadd.f32 %v2046, %v2106
  %v2127 = vadd.f32 %v2047, %v2108
  %v2128 = vadd.f32 %v2048, %v2110
  %v2129 = vadd.f32 %v2049, %v2112
  %v2130 = vadd.f32 %v2050, %v2114
  %v2131 = vtanh.pop %v2123
  %v2132 = vtanh.pop %v2124
  %v2133 = vtanh.pop %v2125
  %v2134 = vtanh.pop %v2126
  %v2135 = vtanh.pop %v2127
  %v2136 = vtanh.pop %v2128
  %v2137 = vtanh.pop %v2129
  %v2138 = vtanh.pop %v2130
  %2147 = vrot.lane.b32.xlu0 %v2131, 32
  %v2148 = vpop.permute.xlu0 %2147
  %2149 = vrot.lane.b32.xlu0 %v2132, 32
  %v2150 = vpop.permute.xlu0 %2149
  %2151 = vrot.lane.b32.xlu0 %v2133, 32
  %v2152 = vpop.permute.xlu0 %2151
  %2153 = vrot.lane.b32.xlu0 %v2134, 32
  %v2154 = vpop.permute.xlu0 %2153
  %2155 = vrot.lane.b32.xlu0 %v2135, 32
  %v2156 = vpop.permute.xlu0 %2155
  %2157 = vrot.lane.b32.xlu0 %v2136, 32
  %v2158 = vpop.permute.xlu0 %2157
  %2159 = vrot.lane.b32.xlu0 %v2137, 32
  %v2160 = vpop.permute.xlu0 %2159
  %2161 = vrot.lane.b32.xlu0 %v2138, 32
  %v2162 = vpop.permute.xlu0 %2161
  %v2171 = vmul.f32 %v2020, %v2148
  %v2172 = vmul.f32 %v2022, %v2150
  %v2173 = vmul.f32 %v2024, %v2152
  %v2174 = vmul.f32 %v2026, %v2154
  %v2175 = vmul.f32 %v2028, %v2156
  %v2176 = vmul.f32 %v2030, %v2158
  %v2177 = vmul.f32 %v2032, %v2160
  %v2178 = vmul.f32 %v2034, %v2162
  %v2179 = vxor.u32 %v1979, 2147483648
  %v2180 = vxor.u32 %v1980, 2147483648
  %v2181 = vxor.u32 %v1981, 2147483648
  %v2182 = vxor.u32 %v1982, 2147483648
  %v2183 = vxor.u32 %v1983, 2147483648
  %v2184 = vxor.u32 %v1984, 2147483648
  %v2185 = vxor.u32 %v1985, 2147483648
  %v2186 = vxor.u32 %v1986, 2147483648
  %v2187 = vmul.f32 %v2179, 1.442695
  %v2188 = vpow.pop %v2187
  %v2189 = vmul.f32 %v2180, 1.442695
  %v2190 = vpow.pop %v2189
  %v2191 = vmul.f32 %v2181, 1.442695
  %v2192 = vpow.pop %v2191
  %v2193 = vmul.f32 %v2182, 1.442695
  %v2194 = vpow.pop %v2193
  %v2195 = vmul.f32 %v2183, 1.442695
  %v2196 = vpow.pop %v2195
  %v2197 = vmul.f32 %v2184, 1.442695
  %v2198 = vpow.pop %v2197
  %v2199 = vmul.f32 %v2185, 1.442695
  %v2200 = vpow.pop %v2199
  %v2201 = vmul.f32 %v2186, 1.442695
  %v2202 = vpow.pop %v2201
  %v2203 = vadd.f32 %v2188, 1.0
  %v2204 = vadd.f32 %v2190, 1.0
  %v2205 = vadd.f32 %v2192, 1.0
  %v2206 = vadd.f32 %v2194, 1.0
  %v2207 = vadd.f32 %v2196, 1.0
  %v2208 = vadd.f32 %v2198, 1.0
  %v2209 = vadd.f32 %v2200, 1.0
  %v2210 = vadd.f32 %v2202, 1.0
  %v2211 = vrcp.pop %v2203
  %v2212 = vmul.f32 1.0, %v2211
  %v2213 = vrcp.pop %v2204
  %v2214 = vmul.f32 1.0, %v2213
  %v2215 = vrcp.pop %v2205
  %v2216 = vmul.f32 1.0, %v2215
  %v2217 = vrcp.pop %v2206
  %v2218 = vmul.f32 1.0, %v2217
  %v2219 = vrcp.pop %v2207
  %v2220 = vmul.f32 1.0, %v2219
  %v2221 = vrcp.pop %v2208
  %v2222 = vmul.f32 1.0, %v2221
  %v2223 = vrcp.pop %v2209
  %v2224 = vmul.f32 1.0, %v2223
  %v2225 = vrcp.pop %v2210
  %v2226 = vmul.f32 1.0, %v2225
  %v2227 = vtanh.pop %v1979
  %v2228 = vtanh.pop %v1980
  %v2229 = vtanh.pop %v1981
  %v2230 = vtanh.pop %v1982
  %v2231 = vtanh.pop %v1983
  %v2232 = vtanh.pop %v1984
  %v2233 = vtanh.pop %v1985
  %v2234 = vtanh.pop %v1986
  %v2235 = vmul.f32 %v2212, 0.0
  %v2236 = vmul.f32 %v2214, 0.0
  %v2237 = vmul.f32 %v2216, 0.0
  %v2238 = vmul.f32 %v2218, 0.0
  %v2239 = vmul.f32 %v2220, 0.0
  %v2240 = vmul.f32 %v2222, 0.0
  %v2241 = vmul.f32 %v2224, 0.0
  %v2242 = vmul.f32 %v2226, 0.0
  %2251 = vrot.lane.b32.xlu0 %v2227, 96
  %v2252 = vpop.permute.xlu0 %2251
  %2253 = vrot.lane.b32.xlu0 %v2228, 96
  %v2254 = vpop.permute.xlu0 %2253
  %2255 = vrot.lane.b32.xlu0 %v2229, 96
  %v2256 = vpop.permute.xlu0 %2255
  %2257 = vrot.lane.b32.xlu0 %v2230, 96
  %v2258 = vpop.permute.xlu0 %2257
  %2259 = vrot.lane.b32.xlu0 %v2231, 96
  %v2260 = vpop.permute.xlu0 %2259
  %2261 = vrot.lane.b32.xlu0 %v2232, 96
  %v2262 = vpop.permute.xlu0 %2261
  %2263 = vrot.lane.b32.xlu0 %v2233, 96
  %v2264 = vpop.permute.xlu0 %2263
  %2265 = vrot.lane.b32.xlu0 %v2234, 96
  %v2266 = vpop.permute.xlu0 %2265
  %v2275 = vmul.f32 %v2212, %v2252
  %v2276 = vmul.f32 %v2214, %v2254
  %v2277 = vmul.f32 %v2216, %v2256
  %v2278 = vmul.f32 %v2218, %v2258
  %v2279 = vmul.f32 %v2220, %v2260
  %v2280 = vmul.f32 %v2222, %v2262
  %v2281 = vmul.f32 %v2224, %v2264
  %v2282 = vmul.f32 %v2226, %v2266
  %2291 = vrot.lane.b32.xlu0 %v2275, 16
  %v2292 = vpop.permute.xlu0 %2291
  %2293 = vrot.lane.b32.xlu0 %v2276, 16
  %v2294 = vpop.permute.xlu0 %2293
  %2295 = vrot.lane.b32.xlu0 %v2277, 16
  %v2296 = vpop.permute.xlu0 %2295
  %2297 = vrot.lane.b32.xlu0 %v2278, 16
  %v2298 = vpop.permute.xlu0 %2297
  %2299 = vrot.lane.b32.xlu0 %v2279, 16
  %v2300 = vpop.permute.xlu0 %2299
  %2301 = vrot.lane.b32.xlu0 %v2280, 16
  %v2302 = vpop.permute.xlu0 %2301
  %2303 = vrot.lane.b32.xlu0 %v2281, 16
  %v2304 = vpop.permute.xlu0 %2303
  %2305 = vrot.lane.b32.xlu0 %v2282, 16
  %v2306 = vpop.permute.xlu0 %2305
  %v2315 = vadd.f32 %v2235, %v2292
  %v2316 = vadd.f32 %v2236, %v2294
  %v2317 = vadd.f32 %v2237, %v2296
  %v2318 = vadd.f32 %v2238, %v2298
  %v2319 = vadd.f32 %v2239, %v2300
  %v2320 = vadd.f32 %v2240, %v2302
  %v2321 = vadd.f32 %v2241, %v2304
  %v2322 = vadd.f32 %v2242, %v2306
  %v2323 = vtanh.pop %v2315
  %v2324 = vtanh.pop %v2316
  %v2325 = vtanh.pop %v2317
  %v2326 = vtanh.pop %v2318
  %v2327 = vtanh.pop %v2319
  %v2328 = vtanh.pop %v2320
  %v2329 = vtanh.pop %v2321
  %v2330 = vtanh.pop %v2322
  %2339 = vrot.lane.b32.xlu0 %v2323, 32
  %v2340 = vpop.permute.xlu0 %2339
  %2341 = vrot.lane.b32.xlu0 %v2324, 32
  %v2342 = vpop.permute.xlu0 %2341
  %2343 = vrot.lane.b32.xlu0 %v2325, 32
  %v2344 = vpop.permute.xlu0 %2343
  %2345 = vrot.lane.b32.xlu0 %v2326, 32
  %v2346 = vpop.permute.xlu0 %2345
  %2347 = vrot.lane.b32.xlu0 %v2327, 32
  %v2348 = vpop.permute.xlu0 %2347
  %2349 = vrot.lane.b32.xlu0 %v2328, 32
  %v2350 = vpop.permute.xlu0 %2349
  %2351 = vrot.lane.b32.xlu0 %v2329, 32
  %v2352 = vpop.permute.xlu0 %2351
  %2353 = vrot.lane.b32.xlu0 %v2330, 32
  %v2354 = vpop.permute.xlu0 %2353
  %v2363 = vmul.f32 %v2212, %v2340
  %v2364 = vmul.f32 %v2214, %v2342
  %v2365 = vmul.f32 %v2216, %v2344
  %v2366 = vmul.f32 %v2218, %v2346
  %v2367 = vmul.f32 %v2220, %v2348
  %v2368 = vmul.f32 %v2222, %v2350
  %v2369 = vmul.f32 %v2224, %v2352
  %v2370 = vmul.f32 %v2226, %v2354
  %v2379 = vlaneseq
  %v2380 = vshrl.u32 %v2379, 7
  %v2381 = vsub.s32 0, %v2380
  %v2382 = vrot.slane %v2171, %v2381
  %v2383 = vlaneseq
  %v2384 = vshrl.u32 %v2383, 7
  %v2385 = vsub.s32 0, %v2384
  %v2386 = vrot.slane %v2172, %v2385
  %v2387 = vlaneseq
  %v2388 = vshrl.u32 %v2387, 7
  %v2389 = vsub.s32 0, %v2388
  %v2390 = vrot.slane %v2173, %v2389
  %v2391 = vlaneseq
  %v2392 = vshrl.u32 %v2391, 7
  %v2393 = vsub.s32 0, %v2392
  %v2394 = vrot.slane %v2174, %v2393
  %v2395 = vlaneseq
  %v2396 = vshrl.u32 %v2395, 7
  %v2397 = vsub.s32 0, %v2396
  %v2398 = vrot.slane %v2175, %v2397
  %v2399 = vlaneseq
  %v2400 = vshrl.u32 %v2399, 7
  %v2401 = vsub.s32 0, %v2400
  %v2402 = vrot.slane %v2176, %v2401
  %v2403 = vlaneseq
  %v2404 = vshrl.u32 %v2403, 7
  %v2405 = vsub.s32 0, %v2404
  %v2406 = vrot.slane %v2177, %v2405
  %v2407 = vlaneseq
  %v2408 = vshrl.u32 %v2407, 7
  %v2409 = vsub.s32 0, %v2408
  %v2410 = vrot.slane %v2178, %v2409
  %vm2411 = vcmask 1041409
  %v2412 = vsel %vm2411, %v2386, %v2382
  %vm2413 = vcmask 1042434
  %v2414 = vsel %vm2413, %v2390, %v2412
  %vm2415 = vcmask 1043459
  %v2416 = vsel %vm2415, %v2394, %v2414
  %vm2417 = vcmask 1044484
  %v2418 = vsel %vm2417, %v2398, %v2416
  %vm2419 = vcmask 1045509
  %v2420 = vsel %vm2419, %v2402, %v2418
  %vm2421 = vcmask 1046534
  %v2422 = vsel %vm2421, %v2406, %v2420
  %vm2423 = vcmask 1047559
  %v2424 = vsel %vm2423, %v2410, %v2422
  %2425 = vrot.lane.b32.xlu0 %v2424, 80
  %v2426 = vpop.permute.xlu0 %2425
  %v2436 = vlaneseq
  %v2437 = vshrl.u32 %v2436, 7
  %v2438 = vsub.s32 3, %v2437
  %v2439 = vrot.slane %v2363, %v2438
  %v2440 = vlaneseq
  %v2441 = vshrl.u32 %v2440, 7
  %v2442 = vsub.s32 3, %v2441
  %v2443 = vrot.slane %v2364, %v2442
  %v2444 = vlaneseq
  %v2445 = vshrl.u32 %v2444, 7
  %v2446 = vsub.s32 3, %v2445
  %v2447 = vrot.slane %v2365, %v2446
  %v2448 = vlaneseq
  %v2449 = vshrl.u32 %v2448, 7
  %v2450 = vsub.s32 3, %v2449
  %v2451 = vrot.slane %v2366, %v2450
  %v2452 = vlaneseq
  %v2453 = vshrl.u32 %v2452, 7
  %v2454 = vsub.s32 3, %v2453
  %v2455 = vrot.slane %v2367, %v2454
  %v2456 = vlaneseq
  %v2457 = vshrl.u32 %v2456, 7
  %v2458 = vsub.s32 3, %v2457
  %v2459 = vrot.slane %v2368, %v2458
  %v2460 = vlaneseq
  %v2461 = vshrl.u32 %v2460, 7
  %v2462 = vsub.s32 3, %v2461
  %v2463 = vrot.slane %v2369, %v2462
  %v2464 = vlaneseq
  %v2465 = vshrl.u32 %v2464, 7
  %v2466 = vsub.s32 3, %v2465
  %v2467 = vrot.slane %v2370, %v2466
  %v2468 = vsel %vm2411, %v2443, %v2439
  %v2469 = vsel %vm2413, %v2447, %v2468
  %v2470 = vsel %vm2415, %v2451, %v2469
  %v2471 = vsel %vm2417, %v2455, %v2470
  %v2472 = vsel %vm2419, %v2459, %v2471
  %v2473 = vsel %vm2421, %v2463, %v2472
  %v2474 = vsel %vm2423, %v2467, %v2473
  %2475 = vrot.lane.b32.xlu0 %v2474, 32
  %v2476 = vpop.permute.xlu0 %2475
  %v2478 = vsel %vm308, %v2426, %v2476
  %v2480 = vsel %vm1468, %v2478, 0
  %2482 = vmatprep.subr.mxu0 0.0
  %2483 = vmatpush1.msra.mxu0 %v1866
  %2484 = vmatprep.subr.mxu0 0.0
  %2485 = vmatpush1.msra.mxu0 %v1867
  %2486 = vmatprep.subr.mxu0 0.0
  %2487 = vmatpush1.msra.mxu0 %v1868
  %2488 = vmatprep.subr.mxu0 0.0
  %2489 = vmatpush1.msra.mxu0 %v1869
  %2490 = vmatprep.subr.mxu0 0.0
  %2491 = vmatpush1.msra.mxu0 0.0
  %2492 = vmatprep.subr.mxu0 0.0
  %2493 = vmatpush1.msra.mxu0 0.0
  %2494 = vmatprep.subr.mxu0 0.0
  %2495 = vmatpush1.msra.mxu0 0.0
  %2496 = vmatprep.subr.mxu0 0.0
  %2497 = vmatpush1.msra.mxu0 0.0
  %2498 = vmatprep.subr.mxu0 0.0
  %2499 = vmatpush1.msra.mxu0 0.0
  %2500 = vmatprep.subr.mxu0 0.0
  %2501 = vmatpush1.msra.mxu0 0.0
  %2502 = vmatprep.subr.mxu0 0.0
  %2503 = vmatpush1.msra.mxu0 0.0
  %2504 = vmatprep.subr.mxu0 0.0
  %2505 = vmatpush1.msra.mxu0 0.0
  %2506 = vmatprep.subr.mxu0 0.0
  %2507 = vmatpush1.msra.mxu0 0.0
  %2508 = vmatprep.subr.mxu0 0.0
  %2509 = vmatpush1.msra.mxu0 0.0
  %2510 = vmatprep.subr.mxu0 0.0
  %2511 = vmatpush1.msra.mxu0 0.0
  %2512 = vmatprep.subr.mxu0 0.0
  %2513 = vmatpush1.msra.mxu0 0.0
  %2514 = vmatprep.subr.mxu0 0.0
  %2515 = vmatpush1.msra.mxu0 0.0
  %2516 = vmatprep.subr.mxu0 0.0
  %2517 = vmatpush1.msra.mxu0 0.0
  %2518 = vmatprep.subr.mxu0 0.0
  %2519 = vmatpush1.msra.mxu0 0.0
  %2520 = vmatprep.subr.mxu0 0.0
  %2521 = vmatpush1.msra.mxu0 0.0
  %2522 = vmatprep.subr.mxu0 0.0
  %2523 = vmatpush1.msra.mxu0 0.0
  %2524 = vmatprep.subr.mxu0 0.0
  %2525 = vmatpush1.msra.mxu0 0.0
  %2526 = vmatprep.subr.mxu0 0.0
  %2527 = vmatpush1.msra.mxu0 0.0
  %2528 = vmatprep.subr.mxu0 0.0
  %2529 = vmatpush1.msra.mxu0 0.0
  %2530 = vmatprep.subr.mxu0 0.0
  %2531 = vmatpush1.msra.mxu0 0.0
  %2532 = vmatprep.subr.mxu0 0.0
  %2533 = vmatpush1.msra.mxu0 0.0
  %2534 = vmatprep.subr.mxu0 0.0
  %2535 = vmatpush1.msra.mxu0 0.0
  %2536 = vmatprep.subr.mxu0 0.0
  %2537 = vmatpush1.msra.mxu0 0.0
  %2538 = vmatprep.subr.mxu0 0.0
  %2539 = vmatpush1.msra.mxu0 0.0
  %2540 = vmatprep.subr.mxu0 0.0
  %2541 = vmatpush1.msra.mxu0 0.0
  %2542 = vmatprep.subr.mxu0 0.0
  %2543 = vmatpush1.msra.mxu0 0.0
  %2544 = vmatprep.subr.mxu0 0.0
  %2545 = vmatpush1.msra.mxu0 0.0
  %2546 = vmatprep.mubr.f32.mxu0 0.0
  %2547 = vmatmul.mubr.f32.gmra.mrb[0].mxu0 %v2480
  %v2548 = vpop.f32.mrb[0].mxu0
  %v2549 = vadd.f32 0.0, %v2548
  %v2550 = vpop.f32.mrb[0].mxu0
  %2551 = vdwg.mxu0
  %v2553 = vcombine.high %v2549, %v2549
  %v2554 = vrot.slane %v2549, 7
  %v2555 = vrot.slane %v2549, 1
  %v2556 = vrot.slane %v2549, 2
  %v2557 = vrot.slane %v2553, 7
  %v2558 = vrot.slane %v2553, 1
  %v2559 = vrot.slane %v2553, 2
  %v2568 = vadd.f32 %v1836, %v2554
  %v2569 = vadd.f32 %v1858, %v2549
  %v2570 = vadd.f32 %v1841, %v2555
  %v2571 = vadd.f32 %v1859, %v2556
  %v2572 = vadd.f32 %v1846, %v2557
  %v2573 = vadd.f32 %v1860, %v2553
  %v2574 = vadd.f32 %v1851, %v2558
  %v2575 = vadd.f32 %v1861, %v2559
  %v2576 = vrot.slane %v2549, 6
  %v2577 = vrot.slane %v2553, 6
  %v2580 = vadd.f32 %v1836, %v2576
  %v2581 = vadd.f32 %v1858, %v2554
  %v2582 = vadd.f32 %v1841, %v2549
  %v2583 = vadd.f32 %v1859, %v2555
  %v2584 = vadd.f32 %v1846, %v2577
  %v2585 = vadd.f32 %v1860, %v2557
  %v2586 = vadd.f32 %v1851, %v2553
  %v2587 = vadd.f32 %v1861, %v2558
  %v2588 = vxor.u32 %v2568, 2147483648
  %v2589 = vxor.u32 %v2569, 2147483648
  %v2590 = vxor.u32 %v2570, 2147483648
  %v2591 = vxor.u32 %v2571, 2147483648
  %v2592 = vxor.u32 %v2572, 2147483648
  %v2593 = vxor.u32 %v2573, 2147483648
  %v2594 = vxor.u32 %v2574, 2147483648
  %v2595 = vxor.u32 %v2575, 2147483648
  %v2596 = vmul.f32 %v2588, 1.442695
  %v2597 = vpow.pop %v2596
  %v2598 = vmul.f32 %v2589, 1.442695
  %v2599 = vpow.pop %v2598
  %v2600 = vmul.f32 %v2590, 1.442695
  %v2601 = vpow.pop %v2600
  %v2602 = vmul.f32 %v2591, 1.442695
  %v2603 = vpow.pop %v2602
  %v2604 = vmul.f32 %v2592, 1.442695
  %v2605 = vpow.pop %v2604
  %v2606 = vmul.f32 %v2593, 1.442695
  %v2607 = vpow.pop %v2606
  %v2608 = vmul.f32 %v2594, 1.442695
  %v2609 = vpow.pop %v2608
  %v2610 = vmul.f32 %v2595, 1.442695
  %v2611 = vpow.pop %v2610
  %v2612 = vadd.f32 %v2597, 1.0
  %v2613 = vadd.f32 %v2599, 1.0
  %v2614 = vadd.f32 %v2601, 1.0
  %v2615 = vadd.f32 %v2603, 1.0
  %v2616 = vadd.f32 %v2605, 1.0
  %v2617 = vadd.f32 %v2607, 1.0
  %v2618 = vadd.f32 %v2609, 1.0
  %v2619 = vadd.f32 %v2611, 1.0
  %v2620 = vrcp.pop %v2612
  %v2621 = vmul.f32 1.0, %v2620
  %v2622 = vrcp.pop %v2613
  %v2623 = vmul.f32 1.0, %v2622
  %v2624 = vrcp.pop %v2614
  %v2625 = vmul.f32 1.0, %v2624
  %v2626 = vrcp.pop %v2615
  %v2627 = vmul.f32 1.0, %v2626
  %v2628 = vrcp.pop %v2616
  %v2629 = vmul.f32 1.0, %v2628
  %v2630 = vrcp.pop %v2617
  %v2631 = vmul.f32 1.0, %v2630
  %v2632 = vrcp.pop %v2618
  %v2633 = vmul.f32 1.0, %v2632
  %v2634 = vrcp.pop %v2619
  %v2635 = vmul.f32 1.0, %v2634
  %v2636 = vtanh.pop %v2568
  %v2637 = vtanh.pop %v2569
  %v2638 = vtanh.pop %v2570
  %v2639 = vtanh.pop %v2571
  %v2640 = vtanh.pop %v2572
  %v2641 = vtanh.pop %v2573
  %v2642 = vtanh.pop %v2574
  %v2643 = vtanh.pop %v2575
  %v2652 = vrot.slane %v2123, 7
  %v2653 = vrot.slane %v2124, 7
  %v2654 = vrot.slane %v2125, 7
  %v2655 = vrot.slane %v2126, 7
  %v2656 = vrot.slane %v2127, 7
  %v2657 = vrot.slane %v2128, 7
  %v2658 = vrot.slane %v2129, 7
  %v2659 = vrot.slane %v2130, 7
  %v2668 = vmul.f32 %v2621, %v2652
  %v2669 = vmul.f32 %v2623, %v2653
  %v2670 = vmul.f32 %v2625, %v2654
  %v2671 = vmul.f32 %v2627, %v2655
  %v2672 = vmul.f32 %v2629, %v2656
  %v2673 = vmul.f32 %v2631, %v2657
  %v2674 = vmul.f32 %v2633, %v2658
  %v2675 = vmul.f32 %v2635, %v2659
  %2684 = vrot.lane.b32.xlu0 %v2636, 96
  %v2685 = vpop.permute.xlu0 %2684
  %2686 = vrot.lane.b32.xlu0 %v2637, 96
  %v2687 = vpop.permute.xlu0 %2686
  %2688 = vrot.lane.b32.xlu0 %v2638, 96
  %v2689 = vpop.permute.xlu0 %2688
  %2690 = vrot.lane.b32.xlu0 %v2639, 96
  %v2691 = vpop.permute.xlu0 %2690
  %2692 = vrot.lane.b32.xlu0 %v2640, 96
  %v2693 = vpop.permute.xlu0 %2692
  %2694 = vrot.lane.b32.xlu0 %v2641, 96
  %v2695 = vpop.permute.xlu0 %2694
  %2696 = vrot.lane.b32.xlu0 %v2642, 96
  %v2697 = vpop.permute.xlu0 %2696
  %2698 = vrot.lane.b32.xlu0 %v2643, 96
  %v2699 = vpop.permute.xlu0 %2698
  %v2708 = vmul.f32 %v2621, %v2685
  %v2709 = vmul.f32 %v2623, %v2687
  %v2710 = vmul.f32 %v2625, %v2689
  %v2711 = vmul.f32 %v2627, %v2691
  %v2712 = vmul.f32 %v2629, %v2693
  %v2713 = vmul.f32 %v2631, %v2695
  %v2714 = vmul.f32 %v2633, %v2697
  %v2715 = vmul.f32 %v2635, %v2699
  %2724 = vrot.lane.b32.xlu0 %v2708, 16
  %v2725 = vpop.permute.xlu0 %2724
  %2726 = vrot.lane.b32.xlu0 %v2709, 16
  %v2727 = vpop.permute.xlu0 %2726
  %2728 = vrot.lane.b32.xlu0 %v2710, 16
  %v2729 = vpop.permute.xlu0 %2728
  %2730 = vrot.lane.b32.xlu0 %v2711, 16
  %v2731 = vpop.permute.xlu0 %2730
  %2732 = vrot.lane.b32.xlu0 %v2712, 16
  %v2733 = vpop.permute.xlu0 %2732
  %2734 = vrot.lane.b32.xlu0 %v2713, 16
  %v2735 = vpop.permute.xlu0 %2734
  %2736 = vrot.lane.b32.xlu0 %v2714, 16
  %v2737 = vpop.permute.xlu0 %2736
  %2738 = vrot.lane.b32.xlu0 %v2715, 16
  %v2739 = vpop.permute.xlu0 %2738
  %v2748 = vadd.f32 %v2668, %v2725
  %v2749 = vadd.f32 %v2669, %v2727
  %v2750 = vadd.f32 %v2670, %v2729
  %v2751 = vadd.f32 %v2671, %v2731
  %v2752 = vadd.f32 %v2672, %v2733
  %v2753 = vadd.f32 %v2673, %v2735
  %v2754 = vadd.f32 %v2674, %v2737
  %v2755 = vadd.f32 %v2675, %v2739
  %v2756 = vtanh.pop %v2748
  %v2757 = vtanh.pop %v2749
  %v2758 = vtanh.pop %v2750
  %v2759 = vtanh.pop %v2751
  %v2760 = vtanh.pop %v2752
  %v2761 = vtanh.pop %v2753
  %v2762 = vtanh.pop %v2754
  %v2763 = vtanh.pop %v2755
  %2772 = vrot.lane.b32.xlu0 %v2756, 32
  %v2773 = vpop.permute.xlu0 %2772
  %2774 = vrot.lane.b32.xlu0 %v2757, 32
  %v2775 = vpop.permute.xlu0 %2774
  %2776 = vrot.lane.b32.xlu0 %v2758, 32
  %v2777 = vpop.permute.xlu0 %2776
  %2778 = vrot.lane.b32.xlu0 %v2759, 32
  %v2779 = vpop.permute.xlu0 %2778
  %2780 = vrot.lane.b32.xlu0 %v2760, 32
  %v2781 = vpop.permute.xlu0 %2780
  %2782 = vrot.lane.b32.xlu0 %v2761, 32
  %v2783 = vpop.permute.xlu0 %2782
  %2784 = vrot.lane.b32.xlu0 %v2762, 32
  %v2785 = vpop.permute.xlu0 %2784
  %2786 = vrot.lane.b32.xlu0 %v2763, 32
  %v2787 = vpop.permute.xlu0 %2786
  %v2796 = vmul.f32 %v2621, %v2773
  %v2797 = vmul.f32 %v2623, %v2775
  %v2798 = vmul.f32 %v2625, %v2777
  %v2799 = vmul.f32 %v2627, %v2779
  %v2800 = vmul.f32 %v2629, %v2781
  %v2801 = vmul.f32 %v2631, %v2783
  %v2802 = vmul.f32 %v2633, %v2785
  %v2803 = vmul.f32 %v2635, %v2787
  %v2804 = vxor.u32 %v2580, 2147483648
  %v2805 = vxor.u32 %v2581, 2147483648
  %v2806 = vxor.u32 %v2582, 2147483648
  %v2807 = vxor.u32 %v2583, 2147483648
  %v2808 = vxor.u32 %v2584, 2147483648
  %v2809 = vxor.u32 %v2585, 2147483648
  %v2810 = vxor.u32 %v2586, 2147483648
  %v2811 = vxor.u32 %v2587, 2147483648
  %v2812 = vmul.f32 %v2804, 1.442695
  %v2813 = vpow.pop %v2812
  %v2814 = vmul.f32 %v2805, 1.442695
  %v2815 = vpow.pop %v2814
  %v2816 = vmul.f32 %v2806, 1.442695
  %v2817 = vpow.pop %v2816
  %v2818 = vmul.f32 %v2807, 1.442695
  %v2819 = vpow.pop %v2818
  %v2820 = vmul.f32 %v2808, 1.442695
  %v2821 = vpow.pop %v2820
  %v2822 = vmul.f32 %v2809, 1.442695
  %v2823 = vpow.pop %v2822
  %v2824 = vmul.f32 %v2810, 1.442695
  %v2825 = vpow.pop %v2824
  %v2826 = vmul.f32 %v2811, 1.442695
  %v2827 = vpow.pop %v2826
  %v2828 = vadd.f32 %v2813, 1.0
  %v2829 = vadd.f32 %v2815, 1.0
  %v2830 = vadd.f32 %v2817, 1.0
  %v2831 = vadd.f32 %v2819, 1.0
  %v2832 = vadd.f32 %v2821, 1.0
  %v2833 = vadd.f32 %v2823, 1.0
  %v2834 = vadd.f32 %v2825, 1.0
  %v2835 = vadd.f32 %v2827, 1.0
  %v2836 = vrcp.pop %v2828
  %v2837 = vmul.f32 1.0, %v2836
  %v2838 = vrcp.pop %v2829
  %v2839 = vmul.f32 1.0, %v2838
  %v2840 = vrcp.pop %v2830
  %v2841 = vmul.f32 1.0, %v2840
  %v2842 = vrcp.pop %v2831
  %v2843 = vmul.f32 1.0, %v2842
  %v2844 = vrcp.pop %v2832
  %v2845 = vmul.f32 1.0, %v2844
  %v2846 = vrcp.pop %v2833
  %v2847 = vmul.f32 1.0, %v2846
  %v2848 = vrcp.pop %v2834
  %v2849 = vmul.f32 1.0, %v2848
  %v2850 = vrcp.pop %v2835
  %v2851 = vmul.f32 1.0, %v2850
  %v2852 = vtanh.pop %v2580
  %v2853 = vtanh.pop %v2581
  %v2854 = vtanh.pop %v2582
  %v2855 = vtanh.pop %v2583
  %v2856 = vtanh.pop %v2584
  %v2857 = vtanh.pop %v2585
  %v2858 = vtanh.pop %v2586
  %v2859 = vtanh.pop %v2587
  %v2868 = vrot.slane %v2315, 5
  %v2869 = vrot.slane %v2868, 4
  %v2870 = vrot.slane %v2316, 5
  %v2871 = vrot.slane %v2870, 4
  %v2872 = vrot.slane %v2317, 5
  %v2873 = vrot.slane %v2872, 4
  %v2874 = vrot.slane %v2318, 5
  %v2875 = vrot.slane %v2874, 4
  %v2876 = vrot.slane %v2319, 5
  %v2877 = vrot.slane %v2876, 4
  %v2878 = vrot.slane %v2320, 5
  %v2879 = vrot.slane %v2878, 4
  %v2880 = vrot.slane %v2321, 5
  %v2881 = vrot.slane %v2880, 4
  %v2882 = vrot.slane %v2322, 5
  %v2883 = vrot.slane %v2882, 4
  %v2892 = vmul.f32 %v2837, %v2869
  %v2893 = vmul.f32 %v2839, %v2871
  %v2894 = vmul.f32 %v2841, %v2873
  %v2895 = vmul.f32 %v2843, %v2875
  %v2896 = vmul.f32 %v2845, %v2877
  %v2897 = vmul.f32 %v2847, %v2879
  %v2898 = vmul.f32 %v2849, %v2881
  %v2899 = vmul.f32 %v2851, %v2883
  %2908 = vrot.lane.b32.xlu0 %v2852, 96
  %v2909 = vpop.permute.xlu0 %2908
  %2910 = vrot.lane.b32.xlu0 %v2853, 96
  %v2911 = vpop.permute.xlu0 %2910
  %2912 = vrot.lane.b32.xlu0 %v2854, 96
  %v2913 = vpop.permute.xlu0 %2912
  %2914 = vrot.lane.b32.xlu0 %v2855, 96
  %v2915 = vpop.permute.xlu0 %2914
  %2916 = vrot.lane.b32.xlu0 %v2856, 96
  %v2917 = vpop.permute.xlu0 %2916
  %2918 = vrot.lane.b32.xlu0 %v2857, 96
  %v2919 = vpop.permute.xlu0 %2918
  %2920 = vrot.lane.b32.xlu0 %v2858, 96
  %v2921 = vpop.permute.xlu0 %2920
  %2922 = vrot.lane.b32.xlu0 %v2859, 96
  %v2923 = vpop.permute.xlu0 %2922
  %v2932 = vmul.f32 %v2837, %v2909
  %v2933 = vmul.f32 %v2839, %v2911
  %v2934 = vmul.f32 %v2841, %v2913
  %v2935 = vmul.f32 %v2843, %v2915
  %v2936 = vmul.f32 %v2845, %v2917
  %v2937 = vmul.f32 %v2847, %v2919
  %v2938 = vmul.f32 %v2849, %v2921
  %v2939 = vmul.f32 %v2851, %v2923
  %2948 = vrot.lane.b32.xlu0 %v2932, 16
  %v2949 = vpop.permute.xlu0 %2948
  %2950 = vrot.lane.b32.xlu0 %v2933, 16
  %v2951 = vpop.permute.xlu0 %2950
  %2952 = vrot.lane.b32.xlu0 %v2934, 16
  %v2953 = vpop.permute.xlu0 %2952
  %2954 = vrot.lane.b32.xlu0 %v2935, 16
  %v2955 = vpop.permute.xlu0 %2954
  %2956 = vrot.lane.b32.xlu0 %v2936, 16
  %v2957 = vpop.permute.xlu0 %2956
  %2958 = vrot.lane.b32.xlu0 %v2937, 16
  %v2959 = vpop.permute.xlu0 %2958
  %2960 = vrot.lane.b32.xlu0 %v2938, 16
  %v2961 = vpop.permute.xlu0 %2960
  %2962 = vrot.lane.b32.xlu0 %v2939, 16
  %v2963 = vpop.permute.xlu0 %2962
  %v2972 = vadd.f32 %v2892, %v2949
  %v2973 = vadd.f32 %v2893, %v2951
  %v2974 = vadd.f32 %v2894, %v2953
  %v2975 = vadd.f32 %v2895, %v2955
  %v2976 = vadd.f32 %v2896, %v2957
  %v2977 = vadd.f32 %v2897, %v2959
  %v2978 = vadd.f32 %v2898, %v2961
  %v2979 = vadd.f32 %v2899, %v2963
  %v2980 = vtanh.pop %v2972
  %v2981 = vtanh.pop %v2973
  %v2982 = vtanh.pop %v2974
  %v2983 = vtanh.pop %v2975
  %v2984 = vtanh.pop %v2976
  %v2985 = vtanh.pop %v2977
  %v2986 = vtanh.pop %v2978
  %v2987 = vtanh.pop %v2979
  %2996 = vrot.lane.b32.xlu0 %v2980, 32
  %v2997 = vpop.permute.xlu0 %2996
  %2998 = vrot.lane.b32.xlu0 %v2981, 32
  %v2999 = vpop.permute.xlu0 %2998
  %3000 = vrot.lane.b32.xlu0 %v2982, 32
  %v3001 = vpop.permute.xlu0 %3000
  %3002 = vrot.lane.b32.xlu0 %v2983, 32
  %v3003 = vpop.permute.xlu0 %3002
  %3004 = vrot.lane.b32.xlu0 %v2984, 32
  %v3005 = vpop.permute.xlu0 %3004
  %3006 = vrot.lane.b32.xlu0 %v2985, 32
  %v3007 = vpop.permute.xlu0 %3006
  %3008 = vrot.lane.b32.xlu0 %v2986, 32
  %v3009 = vpop.permute.xlu0 %3008
  %3010 = vrot.lane.b32.xlu0 %v2987, 32
  %v3011 = vpop.permute.xlu0 %3010
  %v3020 = vmul.f32 %v2837, %v2997
  %v3021 = vmul.f32 %v2839, %v2999
  %v3022 = vmul.f32 %v2841, %v3001
  %v3023 = vmul.f32 %v2843, %v3003
  %v3024 = vmul.f32 %v2845, %v3005
  %v3025 = vmul.f32 %v2847, %v3007
  %v3026 = vmul.f32 %v2849, %v3009
  %v3027 = vmul.f32 %v2851, %v3011
  %v3036 = vlaneseq
  %v3037 = vshrl.u32 %v3036, 7
  %v3038 = vsub.s32 1, %v3037
  %v3039 = vrot.slane %v2796, %v3038
  %v3040 = vlaneseq
  %v3041 = vshrl.u32 %v3040, 7
  %v3042 = vsub.s32 1, %v3041
  %v3043 = vrot.slane %v2797, %v3042
  %v3044 = vlaneseq
  %v3045 = vshrl.u32 %v3044, 7
  %v3046 = vsub.s32 1, %v3045
  %v3047 = vrot.slane %v2798, %v3046
  %v3048 = vlaneseq
  %v3049 = vshrl.u32 %v3048, 7
  %v3050 = vsub.s32 1, %v3049
  %v3051 = vrot.slane %v2799, %v3050
  %v3052 = vlaneseq
  %v3053 = vshrl.u32 %v3052, 7
  %v3054 = vsub.s32 1, %v3053
  %v3055 = vrot.slane %v2800, %v3054
  %v3056 = vlaneseq
  %v3057 = vshrl.u32 %v3056, 7
  %v3058 = vsub.s32 1, %v3057
  %v3059 = vrot.slane %v2801, %v3058
  %v3060 = vlaneseq
  %v3061 = vshrl.u32 %v3060, 7
  %v3062 = vsub.s32 1, %v3061
  %v3063 = vrot.slane %v2802, %v3062
  %v3064 = vlaneseq
  %v3065 = vshrl.u32 %v3064, 7
  %v3066 = vsub.s32 1, %v3065
  %v3067 = vrot.slane %v2803, %v3066
  %v3068 = vsel %vm2413, %v3043, %v3039
  %v3069 = vsel %vm2415, %v3047, %v3068
  %v3070 = vsel %vm2417, %v3051, %v3069
  %v3071 = vsel %vm2419, %v3055, %v3070
  %v3072 = vsel %vm2421, %v3059, %v3071
  %v3073 = vsel %vm2423, %v3063, %v3072
  %3074 = vrot.lane.b32.xlu0 %v3073, 80
  %v3075 = vpop.permute.xlu0 %3074
  %3076 = vrot.lane.b32.xlu0 %v3067, 80
  %v3077 = vpop.permute.xlu0 %3076
  %v3088 = vlaneseq
  %v3089 = vshrl.u32 %v3088, 7
  %v3090 = vsub.s32 2, %v3089
  %v3091 = vrot.slane %v3020, %v3090
  %v3092 = vlaneseq
  %v3093 = vshrl.u32 %v3092, 7
  %v3094 = vsub.s32 2, %v3093
  %v3095 = vrot.slane %v3021, %v3094
  %v3096 = vlaneseq
  %v3097 = vshrl.u32 %v3096, 7
  %v3098 = vsub.s32 2, %v3097
  %v3099 = vrot.slane %v3022, %v3098
  %v3100 = vlaneseq
  %v3101 = vshrl.u32 %v3100, 7
  %v3102 = vsub.s32 2, %v3101
  %v3103 = vrot.slane %v3023, %v3102
  %v3104 = vlaneseq
  %v3105 = vshrl.u32 %v3104, 7
  %v3106 = vsub.s32 2, %v3105
  %v3107 = vrot.slane %v3024, %v3106
  %v3108 = vlaneseq
  %v3109 = vshrl.u32 %v3108, 7
  %v3110 = vsub.s32 2, %v3109
  %v3111 = vrot.slane %v3025, %v3110
  %v3112 = vlaneseq
  %v3113 = vshrl.u32 %v3112, 7
  %v3114 = vsub.s32 2, %v3113
  %v3115 = vrot.slane %v3026, %v3114
  %v3116 = vlaneseq
  %v3117 = vshrl.u32 %v3116, 7
  %v3118 = vsub.s32 2, %v3117
  %v3119 = vrot.slane %v3027, %v3118
  %v3120 = vsel %vm2413, %v3095, %v3091
  %v3121 = vsel %vm2415, %v3099, %v3120
  %v3122 = vsel %vm2417, %v3103, %v3121
  %v3123 = vsel %vm2419, %v3107, %v3122
  %v3124 = vsel %vm2421, %v3111, %v3123
  %v3125 = vsel %vm2423, %v3115, %v3124
  %3126 = vrot.lane.b32.xlu0 %v3125, 32
  %v3127 = vpop.permute.xlu0 %3126
  %3128 = vrot.lane.b32.xlu0 %v3119, 32
  %v3129 = vpop.permute.xlu0 %3128
  %v3132 = vsel %vm308, %v3075, %v3127
  %v3133 = vsel %vm308, %v3077, %v3129
  %v3136 = vrot.slane %v3132, 1
  %v3137 = vrot.slane %v3133, 1
  %v3138 = vsel %vm146, %v3136, %v3137
  %v3139 = vsel %vm1468, %v3138, 0
  %3141 = vmatprep.subr.mxu0 0.0
  %3142 = vmatpush1.msra.mxu0 %v1866
  %3143 = vmatprep.subr.mxu0 0.0
  %3144 = vmatpush1.msra.mxu0 %v1867
  %3145 = vmatprep.subr.mxu0 0.0
  %3146 = vmatpush1.msra.mxu0 %v1868
  %3147 = vmatprep.subr.mxu0 0.0
  %3148 = vmatpush1.msra.mxu0 %v1869
  %3149 = vmatprep.subr.mxu0 0.0
  %3150 = vmatpush1.msra.mxu0 0.0
  %3151 = vmatprep.subr.mxu0 0.0
  %3152 = vmatpush1.msra.mxu0 0.0
  %3153 = vmatprep.subr.mxu0 0.0
  %3154 = vmatpush1.msra.mxu0 0.0
  %3155 = vmatprep.subr.mxu0 0.0
  %3156 = vmatpush1.msra.mxu0 0.0
  %3157 = vmatprep.subr.mxu0 0.0
  %3158 = vmatpush1.msra.mxu0 0.0
  %3159 = vmatprep.subr.mxu0 0.0
  %3160 = vmatpush1.msra.mxu0 0.0
  %3161 = vmatprep.subr.mxu0 0.0
  %3162 = vmatpush1.msra.mxu0 0.0
  %3163 = vmatprep.subr.mxu0 0.0
  %3164 = vmatpush1.msra.mxu0 0.0
  %3165 = vmatprep.subr.mxu0 0.0
  %3166 = vmatpush1.msra.mxu0 0.0
  %3167 = vmatprep.subr.mxu0 0.0
  %3168 = vmatpush1.msra.mxu0 0.0
  %3169 = vmatprep.subr.mxu0 0.0
  %3170 = vmatpush1.msra.mxu0 0.0
  %3171 = vmatprep.subr.mxu0 0.0
  %3172 = vmatpush1.msra.mxu0 0.0
  %3173 = vmatprep.subr.mxu0 0.0
  %3174 = vmatpush1.msra.mxu0 0.0
  %3175 = vmatprep.subr.mxu0 0.0
  %3176 = vmatpush1.msra.mxu0 0.0
  %3177 = vmatprep.subr.mxu0 0.0
  %3178 = vmatpush1.msra.mxu0 0.0
  %3179 = vmatprep.subr.mxu0 0.0
  %3180 = vmatpush1.msra.mxu0 0.0
  %3181 = vmatprep.subr.mxu0 0.0
  %3182 = vmatpush1.msra.mxu0 0.0
  %3183 = vmatprep.subr.mxu0 0.0
  %3184 = vmatpush1.msra.mxu0 0.0
  %3185 = vmatprep.subr.mxu0 0.0
  %3186 = vmatpush1.msra.mxu0 0.0
  %3187 = vmatprep.subr.mxu0 0.0
  %3188 = vmatpush1.msra.mxu0 0.0
  %3189 = vmatprep.subr.mxu0 0.0
  %3190 = vmatpush1.msra.mxu0 0.0
  %3191 = vmatprep.subr.mxu0 0.0
  %3192 = vmatpush1.msra.mxu0 0.0
  %3193 = vmatprep.subr.mxu0 0.0
  %3194 = vmatpush1.msra.mxu0 0.0
  %3195 = vmatprep.subr.mxu0 0.0
  %3196 = vmatpush1.msra.mxu0 0.0
  %3197 = vmatprep.subr.mxu0 0.0
  %3198 = vmatpush1.msra.mxu0 0.0
  %3199 = vmatprep.subr.mxu0 0.0
  %3200 = vmatpush1.msra.mxu0 0.0
  %3201 = vmatprep.subr.mxu0 0.0
  %3202 = vmatpush1.msra.mxu0 0.0
  %3203 = vmatprep.subr.mxu0 0.0
  %3204 = vmatpush1.msra.mxu0 0.0
  %3205 = vmatprep.mubr.f32.mxu0 0.0
  %3206 = vmatmul.mubr.f32.gmra.mrb[0].mxu0 %v3139
  %v3207 = vpop.f32.mrb[0].mxu0
  %v3208 = vadd.f32 0.0, %v3207
  %v3209 = vpop.f32.mrb[0].mxu0
  %3210 = vdwg.mxu0
  %v3212 = vcombine.high %v3208, %v3208
  %v3213 = vrot.slane %v3208, 6
  %v3214 = vrot.slane %v3208, 7
  %v3215 = vrot.slane %v3208, 1
  %v3216 = vrot.slane %v3212, 6
  %v3217 = vrot.slane %v3212, 7
  %v3218 = vrot.slane %v3212, 1
  %v3227 = vadd.f32 %v1836, %v3213
  %v3228 = vadd.f32 %v1858, %v3214
  %v3229 = vadd.f32 %v1841, %v3208
  %v3230 = vadd.f32 %v1859, %v3215
  %v3231 = vadd.f32 %v1846, %v3216
  %v3232 = vadd.f32 %v1860, %v3217
  %v3233 = vadd.f32 %v1851, %v3212
  %v3234 = vadd.f32 %v1861, %v3218
  %v3235 = vrot.slane %v3208, 2
  %v3236 = vrot.slane %v3212, 2
  %v3239 = vadd.f32 %v1836, %v3214
  %v3240 = vadd.f32 %v1858, %v3208
  %v3241 = vadd.f32 %v1841, %v3215
  %v3242 = vadd.f32 %v1859, %v3235
  %v3243 = vadd.f32 %v1846, %v3217
  %v3244 = vadd.f32 %v1860, %v3212
  %v3245 = vadd.f32 %v1851, %v3218
  %v3246 = vadd.f32 %v1861, %v3236
  %v3247 = vxor.u32 %v3227, 2147483648
  %v3248 = vxor.u32 %v3228, 2147483648
  %v3249 = vxor.u32 %v3229, 2147483648
  %v3250 = vxor.u32 %v3230, 2147483648
  %v3251 = vxor.u32 %v3231, 2147483648
  %v3252 = vxor.u32 %v3232, 2147483648
  %v3253 = vxor.u32 %v3233, 2147483648
  %v3254 = vxor.u32 %v3234, 2147483648
  %v3255 = vmul.f32 %v3247, 1.442695
  %v3256 = vpow.pop %v3255
  %v3257 = vmul.f32 %v3248, 1.442695
  %v3258 = vpow.pop %v3257
  %v3259 = vmul.f32 %v3249, 1.442695
  %v3260 = vpow.pop %v3259
  %v3261 = vmul.f32 %v3250, 1.442695
  %v3262 = vpow.pop %v3261
  %v3263 = vmul.f32 %v3251, 1.442695
  %v3264 = vpow.pop %v3263
  %v3265 = vmul.f32 %v3252, 1.442695
  %v3266 = vpow.pop %v3265
  %v3267 = vmul.f32 %v3253, 1.442695
  %v3268 = vpow.pop %v3267
  %v3269 = vmul.f32 %v3254, 1.442695
  %v3270 = vpow.pop %v3269
  %v3271 = vadd.f32 %v3256, 1.0
  %v3272 = vadd.f32 %v3258, 1.0
  %v3273 = vadd.f32 %v3260, 1.0
  %v3274 = vadd.f32 %v3262, 1.0
  %v3275 = vadd.f32 %v3264, 1.0
  %v3276 = vadd.f32 %v3266, 1.0
  %v3277 = vadd.f32 %v3268, 1.0
  %v3278 = vadd.f32 %v3270, 1.0
  %v3279 = vrcp.pop %v3271
  %v3280 = vmul.f32 1.0, %v3279
  %v3281 = vrcp.pop %v3272
  %v3282 = vmul.f32 1.0, %v3281
  %v3283 = vrcp.pop %v3273
  %v3284 = vmul.f32 1.0, %v3283
  %v3285 = vrcp.pop %v3274
  %v3286 = vmul.f32 1.0, %v3285
  %v3287 = vrcp.pop %v3275
  %v3288 = vmul.f32 1.0, %v3287
  %v3289 = vrcp.pop %v3276
  %v3290 = vmul.f32 1.0, %v3289
  %v3291 = vrcp.pop %v3277
  %v3292 = vmul.f32 1.0, %v3291
  %v3293 = vrcp.pop %v3278
  %v3294 = vmul.f32 1.0, %v3293
  %v3295 = vtanh.pop %v3227
  %v3296 = vtanh.pop %v3228
  %v3297 = vtanh.pop %v3229
  %v3298 = vtanh.pop %v3230
  %v3299 = vtanh.pop %v3231
  %v3300 = vtanh.pop %v3232
  %v3301 = vtanh.pop %v3233
  %v3302 = vtanh.pop %v3234
  %v3311 = vrot.slane %v2748, 7
  %v3312 = vrot.slane %v2749, 7
  %v3313 = vrot.slane %v2750, 7
  %v3314 = vrot.slane %v2751, 7
  %v3315 = vrot.slane %v2752, 7
  %v3316 = vrot.slane %v2753, 7
  %v3317 = vrot.slane %v2754, 7
  %v3318 = vrot.slane %v2755, 7
  %v3327 = vmul.f32 %v3280, %v3311
  %v3328 = vmul.f32 %v3282, %v3312
  %v3329 = vmul.f32 %v3284, %v3313
  %v3330 = vmul.f32 %v3286, %v3314
  %v3331 = vmul.f32 %v3288, %v3315
  %v3332 = vmul.f32 %v3290, %v3316
  %v3333 = vmul.f32 %v3292, %v3317
  %v3334 = vmul.f32 %v3294, %v3318
  %3343 = vrot.lane.b32.xlu0 %v3295, 96
  %v3344 = vpop.permute.xlu0 %3343
  %3345 = vrot.lane.b32.xlu0 %v3296, 96
  %v3346 = vpop.permute.xlu0 %3345
  %3347 = vrot.lane.b32.xlu0 %v3297, 96
  %v3348 = vpop.permute.xlu0 %3347
  %3349 = vrot.lane.b32.xlu0 %v3298, 96
  %v3350 = vpop.permute.xlu0 %3349
  %3351 = vrot.lane.b32.xlu0 %v3299, 96
  %v3352 = vpop.permute.xlu0 %3351
  %3353 = vrot.lane.b32.xlu0 %v3300, 96
  %v3354 = vpop.permute.xlu0 %3353
  %3355 = vrot.lane.b32.xlu0 %v3301, 96
  %v3356 = vpop.permute.xlu0 %3355
  %3357 = vrot.lane.b32.xlu0 %v3302, 96
  %v3358 = vpop.permute.xlu0 %3357
  %v3367 = vmul.f32 %v3280, %v3344
  %v3368 = vmul.f32 %v3282, %v3346
  %v3369 = vmul.f32 %v3284, %v3348
  %v3370 = vmul.f32 %v3286, %v3350
  %v3371 = vmul.f32 %v3288, %v3352
  %v3372 = vmul.f32 %v3290, %v3354
  %v3373 = vmul.f32 %v3292, %v3356
  %v3374 = vmul.f32 %v3294, %v3358
  %3383 = vrot.lane.b32.xlu0 %v3367, 16
  %v3384 = vpop.permute.xlu0 %3383
  %3385 = vrot.lane.b32.xlu0 %v3368, 16
  %v3386 = vpop.permute.xlu0 %3385
  %3387 = vrot.lane.b32.xlu0 %v3369, 16
  %v3388 = vpop.permute.xlu0 %3387
  %3389 = vrot.lane.b32.xlu0 %v3370, 16
  %v3390 = vpop.permute.xlu0 %3389
  %3391 = vrot.lane.b32.xlu0 %v3371, 16
  %v3392 = vpop.permute.xlu0 %3391
  %3393 = vrot.lane.b32.xlu0 %v3372, 16
  %v3394 = vpop.permute.xlu0 %3393
  %3395 = vrot.lane.b32.xlu0 %v3373, 16
  %v3396 = vpop.permute.xlu0 %3395
  %3397 = vrot.lane.b32.xlu0 %v3374, 16
  %v3398 = vpop.permute.xlu0 %3397
  %v3407 = vadd.f32 %v3327, %v3384
  %v3408 = vadd.f32 %v3328, %v3386
  %v3409 = vadd.f32 %v3329, %v3388
  %v3410 = vadd.f32 %v3330, %v3390
  %v3411 = vadd.f32 %v3331, %v3392
  %v3412 = vadd.f32 %v3332, %v3394
  %v3413 = vadd.f32 %v3333, %v3396
  %v3414 = vadd.f32 %v3334, %v3398
  %v3415 = vtanh.pop %v3407
  %v3416 = vtanh.pop %v3408
  %v3417 = vtanh.pop %v3409
  %v3418 = vtanh.pop %v3410
  %v3419 = vtanh.pop %v3411
  %v3420 = vtanh.pop %v3412
  %v3421 = vtanh.pop %v3413
  %v3422 = vtanh.pop %v3414
  %3431 = vrot.lane.b32.xlu0 %v3415, 32
  %v3432 = vpop.permute.xlu0 %3431
  %3433 = vrot.lane.b32.xlu0 %v3416, 32
  %v3434 = vpop.permute.xlu0 %3433
  %3435 = vrot.lane.b32.xlu0 %v3417, 32
  %v3436 = vpop.permute.xlu0 %3435
  %3437 = vrot.lane.b32.xlu0 %v3418, 32
  %v3438 = vpop.permute.xlu0 %3437
  %3439 = vrot.lane.b32.xlu0 %v3419, 32
  %v3440 = vpop.permute.xlu0 %3439
  %3441 = vrot.lane.b32.xlu0 %v3420, 32
  %v3442 = vpop.permute.xlu0 %3441
  %3443 = vrot.lane.b32.xlu0 %v3421, 32
  %v3444 = vpop.permute.xlu0 %3443
  %3445 = vrot.lane.b32.xlu0 %v3422, 32
  %v3446 = vpop.permute.xlu0 %3445
  %v3455 = vmul.f32 %v3280, %v3432
  %v3456 = vmul.f32 %v3282, %v3434
  %v3457 = vmul.f32 %v3284, %v3436
  %v3458 = vmul.f32 %v3286, %v3438
  %v3459 = vmul.f32 %v3288, %v3440
  %v3460 = vmul.f32 %v3290, %v3442
  %v3461 = vmul.f32 %v3292, %v3444
  %v3462 = vmul.f32 %v3294, %v3446
  %v3463 = vxor.u32 %v3239, 2147483648
  %v3464 = vxor.u32 %v3240, 2147483648
  %v3465 = vxor.u32 %v3241, 2147483648
  %v3466 = vxor.u32 %v3242, 2147483648
  %v3467 = vxor.u32 %v3243, 2147483648
  %v3468 = vxor.u32 %v3244, 2147483648
  %v3469 = vxor.u32 %v3245, 2147483648
  %v3470 = vxor.u32 %v3246, 2147483648
  %v3471 = vmul.f32 %v3463, 1.442695
  %v3472 = vpow.pop %v3471
  %v3473 = vmul.f32 %v3464, 1.442695
  %v3474 = vpow.pop %v3473
  %v3475 = vmul.f32 %v3465, 1.442695
  %v3476 = vpow.pop %v3475
  %v3477 = vmul.f32 %v3466, 1.442695
  %v3478 = vpow.pop %v3477
  %v3479 = vmul.f32 %v3467, 1.442695
  %v3480 = vpow.pop %v3479
  %v3481 = vmul.f32 %v3468, 1.442695
  %v3482 = vpow.pop %v3481
  %v3483 = vmul.f32 %v3469, 1.442695
  %v3484 = vpow.pop %v3483
  %v3485 = vmul.f32 %v3470, 1.442695
  %v3486 = vpow.pop %v3485
  %v3487 = vadd.f32 %v3472, 1.0
  %v3488 = vadd.f32 %v3474, 1.0
  %v3489 = vadd.f32 %v3476, 1.0
  %v3490 = vadd.f32 %v3478, 1.0
  %v3491 = vadd.f32 %v3480, 1.0
  %v3492 = vadd.f32 %v3482, 1.0
  %v3493 = vadd.f32 %v3484, 1.0
  %v3494 = vadd.f32 %v3486, 1.0
  %v3495 = vrcp.pop %v3487
  %v3496 = vmul.f32 1.0, %v3495
  %v3497 = vrcp.pop %v3488
  %v3498 = vmul.f32 1.0, %v3497
  %v3499 = vrcp.pop %v3489
  %v3500 = vmul.f32 1.0, %v3499
  %v3501 = vrcp.pop %v3490
  %v3502 = vmul.f32 1.0, %v3501
  %v3503 = vrcp.pop %v3491
  %v3504 = vmul.f32 1.0, %v3503
  %v3505 = vrcp.pop %v3492
  %v3506 = vmul.f32 1.0, %v3505
  %v3507 = vrcp.pop %v3493
  %v3508 = vmul.f32 1.0, %v3507
  %v3509 = vrcp.pop %v3494
  %v3510 = vmul.f32 1.0, %v3509
  %v3511 = vtanh.pop %v3239
  %v3512 = vtanh.pop %v3240
  %v3513 = vtanh.pop %v3241
  %v3514 = vtanh.pop %v3242
  %v3515 = vtanh.pop %v3243
  %v3516 = vtanh.pop %v3244
  %v3517 = vtanh.pop %v3245
  %v3518 = vtanh.pop %v3246
  %v3527 = vrot.slane %v2972, 5
  %v3528 = vrot.slane %v3527, 4
  %v3529 = vrot.slane %v2973, 5
  %v3530 = vrot.slane %v3529, 4
  %v3531 = vrot.slane %v2974, 5
  %v3532 = vrot.slane %v3531, 4
  %v3533 = vrot.slane %v2975, 5
  %v3534 = vrot.slane %v3533, 4
  %v3535 = vrot.slane %v2976, 5
  %v3536 = vrot.slane %v3535, 4
  %v3537 = vrot.slane %v2977, 5
  %v3538 = vrot.slane %v3537, 4
  %v3539 = vrot.slane %v2978, 5
  %v3540 = vrot.slane %v3539, 4
  %v3541 = vrot.slane %v2979, 5
  %v3542 = vrot.slane %v3541, 4
  %v3551 = vmul.f32 %v3496, %v3528
  %v3552 = vmul.f32 %v3498, %v3530
  %v3553 = vmul.f32 %v3500, %v3532
  %v3554 = vmul.f32 %v3502, %v3534
  %v3555 = vmul.f32 %v3504, %v3536
  %v3556 = vmul.f32 %v3506, %v3538
  %v3557 = vmul.f32 %v3508, %v3540
  %v3558 = vmul.f32 %v3510, %v3542
  %3567 = vrot.lane.b32.xlu0 %v3511, 96
  %v3568 = vpop.permute.xlu0 %3567
  %3569 = vrot.lane.b32.xlu0 %v3512, 96
  %v3570 = vpop.permute.xlu0 %3569
  %3571 = vrot.lane.b32.xlu0 %v3513, 96
  %v3572 = vpop.permute.xlu0 %3571
  %3573 = vrot.lane.b32.xlu0 %v3514, 96
  %v3574 = vpop.permute.xlu0 %3573
  %3575 = vrot.lane.b32.xlu0 %v3515, 96
  %v3576 = vpop.permute.xlu0 %3575
  %3577 = vrot.lane.b32.xlu0 %v3516, 96
  %v3578 = vpop.permute.xlu0 %3577
  %3579 = vrot.lane.b32.xlu0 %v3517, 96
  %v3580 = vpop.permute.xlu0 %3579
  %3581 = vrot.lane.b32.xlu0 %v3518, 96
  %v3582 = vpop.permute.xlu0 %3581
  %v3591 = vmul.f32 %v3496, %v3568
  %v3592 = vmul.f32 %v3498, %v3570
  %v3593 = vmul.f32 %v3500, %v3572
  %v3594 = vmul.f32 %v3502, %v3574
  %v3595 = vmul.f32 %v3504, %v3576
  %v3596 = vmul.f32 %v3506, %v3578
  %v3597 = vmul.f32 %v3508, %v3580
  %v3598 = vmul.f32 %v3510, %v3582
  %3607 = vrot.lane.b32.xlu0 %v3591, 16
  %v3608 = vpop.permute.xlu0 %3607
  %3609 = vrot.lane.b32.xlu0 %v3592, 16
  %v3610 = vpop.permute.xlu0 %3609
  %3611 = vrot.lane.b32.xlu0 %v3593, 16
  %v3612 = vpop.permute.xlu0 %3611
  %3613 = vrot.lane.b32.xlu0 %v3594, 16
  %v3614 = vpop.permute.xlu0 %3613
  %3615 = vrot.lane.b32.xlu0 %v3595, 16
  %v3616 = vpop.permute.xlu0 %3615
  %3617 = vrot.lane.b32.xlu0 %v3596, 16
  %v3618 = vpop.permute.xlu0 %3617
  %3619 = vrot.lane.b32.xlu0 %v3597, 16
  %v3620 = vpop.permute.xlu0 %3619
  %3621 = vrot.lane.b32.xlu0 %v3598, 16
  %v3622 = vpop.permute.xlu0 %3621
  %v3631 = vadd.f32 %v3551, %v3608
  %v3632 = vadd.f32 %v3552, %v3610
  %v3633 = vadd.f32 %v3553, %v3612
  %v3634 = vadd.f32 %v3554, %v3614
  %v3635 = vadd.f32 %v3555, %v3616
  %v3636 = vadd.f32 %v3556, %v3618
  %v3637 = vadd.f32 %v3557, %v3620
  %v3638 = vadd.f32 %v3558, %v3622
  %v3639 = vtanh.pop %v3631
  %v3640 = vtanh.pop %v3632
  %v3641 = vtanh.pop %v3633
  %v3642 = vtanh.pop %v3634
  %v3643 = vtanh.pop %v3635
  %v3644 = vtanh.pop %v3636
  %v3645 = vtanh.pop %v3637
  %v3646 = vtanh.pop %v3638
  %3655 = vrot.lane.b32.xlu0 %v3639, 32
  %v3656 = vpop.permute.xlu0 %3655
  %3657 = vrot.lane.b32.xlu0 %v3640, 32
  %v3658 = vpop.permute.xlu0 %3657
  %3659 = vrot.lane.b32.xlu0 %v3641, 32
  %v3660 = vpop.permute.xlu0 %3659
  %3661 = vrot.lane.b32.xlu0 %v3642, 32
  %v3662 = vpop.permute.xlu0 %3661
  %3663 = vrot.lane.b32.xlu0 %v3643, 32
  %v3664 = vpop.permute.xlu0 %3663
  %3665 = vrot.lane.b32.xlu0 %v3644, 32
  %v3666 = vpop.permute.xlu0 %3665
  %3667 = vrot.lane.b32.xlu0 %v3645, 32
  %v3668 = vpop.permute.xlu0 %3667
  %3669 = vrot.lane.b32.xlu0 %v3646, 32
  %v3670 = vpop.permute.xlu0 %3669
  %v3679 = vmul.f32 %v3496, %v3656
  %v3680 = vmul.f32 %v3498, %v3658
  %v3681 = vmul.f32 %v3500, %v3660
  %v3682 = vmul.f32 %v3502, %v3662
  %v3683 = vmul.f32 %v3504, %v3664
  %v3684 = vmul.f32 %v3506, %v3666
  %v3685 = vmul.f32 %v3508, %v3668
  %v3686 = vmul.f32 %v3510, %v3670
  %v3695 = vlaneseq
  %v3696 = vshrl.u32 %v3695, 7
  %v3697 = vsub.s32 2, %v3696
  %v3698 = vrot.slane %v3455, %v3697
  %v3699 = vlaneseq
  %v3700 = vshrl.u32 %v3699, 7
  %v3701 = vsub.s32 2, %v3700
  %v3702 = vrot.slane %v3456, %v3701
  %v3703 = vlaneseq
  %v3704 = vshrl.u32 %v3703, 7
  %v3705 = vsub.s32 2, %v3704
  %v3706 = vrot.slane %v3457, %v3705
  %v3707 = vlaneseq
  %v3708 = vshrl.u32 %v3707, 7
  %v3709 = vsub.s32 2, %v3708
  %v3710 = vrot.slane %v3458, %v3709
  %v3711 = vlaneseq
  %v3712 = vshrl.u32 %v3711, 7
  %v3713 = vsub.s32 2, %v3712
  %v3714 = vrot.slane %v3459, %v3713
  %v3715 = vlaneseq
  %v3716 = vshrl.u32 %v3715, 7
  %v3717 = vsub.s32 2, %v3716
  %v3718 = vrot.slane %v3460, %v3717
  %v3719 = vlaneseq
  %v3720 = vshrl.u32 %v3719, 7
  %v3721 = vsub.s32 2, %v3720
  %v3722 = vrot.slane %v3461, %v3721
  %v3723 = vlaneseq
  %v3724 = vshrl.u32 %v3723, 7
  %v3725 = vsub.s32 2, %v3724
  %v3726 = vrot.slane %v3462, %v3725
  %v3727 = vsel %vm2415, %v3702, %v3698
  %v3728 = vsel %vm2417, %v3706, %v3727
  %v3729 = vsel %vm2419, %v3710, %v3728
  %v3730 = vsel %vm2421, %v3714, %v3729
  %v3731 = vsel %vm2423, %v3718, %v3730
  %v3732 = vsel %vm2411, %v3726, %v3722
  %3733 = vrot.lane.b32.xlu0 %v3731, 80
  %v3734 = vpop.permute.xlu0 %3733
  %3735 = vrot.lane.b32.xlu0 %v3732, 80
  %v3736 = vpop.permute.xlu0 %3735
  %v3747 = vlaneseq
  %v3748 = vshrl.u32 %v3747, 7
  %v3749 = vsub.s32 1, %v3748
  %v3750 = vrot.slane %v3679, %v3749
  %v3751 = vlaneseq
  %v3752 = vshrl.u32 %v3751, 7
  %v3753 = vsub.s32 1, %v3752
  %v3754 = vrot.slane %v3680, %v3753
  %v3755 = vlaneseq
  %v3756 = vshrl.u32 %v3755, 7
  %v3757 = vsub.s32 1, %v3756
  %v3758 = vrot.slane %v3681, %v3757
  %v3759 = vlaneseq
  %v3760 = vshrl.u32 %v3759, 7
  %v3761 = vsub.s32 1, %v3760
  %v3762 = vrot.slane %v3682, %v3761
  %v3763 = vlaneseq
  %v3764 = vshrl.u32 %v3763, 7
  %v3765 = vsub.s32 1, %v3764
  %v3766 = vrot.slane %v3683, %v3765
  %v3767 = vlaneseq
  %v3768 = vshrl.u32 %v3767, 7
  %v3769 = vsub.s32 1, %v3768
  %v3770 = vrot.slane %v3684, %v3769
  %v3771 = vlaneseq
  %v3772 = vshrl.u32 %v3771, 7
  %v3773 = vsub.s32 1, %v3772
  %v3774 = vrot.slane %v3685, %v3773
  %v3775 = vlaneseq
  %v3776 = vshrl.u32 %v3775, 7
  %v3777 = vsub.s32 1, %v3776
  %v3778 = vrot.slane %v3686, %v3777
  %v3779 = vsel %vm2415, %v3754, %v3750
  %v3780 = vsel %vm2417, %v3758, %v3779
  %v3781 = vsel %vm2419, %v3762, %v3780
  %v3782 = vsel %vm2421, %v3766, %v3781
  %v3783 = vsel %vm2423, %v3770, %v3782
  %v3784 = vsel %vm2411, %v3778, %v3774
  %3785 = vrot.lane.b32.xlu0 %v3783, 32
  %v3786 = vpop.permute.xlu0 %3785
  %3787 = vrot.lane.b32.xlu0 %v3784, 32
  %v3788 = vpop.permute.xlu0 %3787
  %v3791 = vsel %vm308, %v3734, %v3786
  %v3792 = vsel %vm308, %v3736, %v3788
  %v3795 = vrot.slane %v3791, 2
  %v3796 = vrot.slane %v3792, 2
  %v3797 = vsel %vm781, %v3795, %v3796
  %v3798 = vsel %vm1468, %v3797, 0
  %3800 = vmatprep.subr.mxu0 0.0
  %3801 = vmatpush1.msra.mxu0 %v1866
  %3802 = vmatprep.subr.mxu0 0.0
  %3803 = vmatpush1.msra.mxu0 %v1867
  %3804 = vmatprep.subr.mxu0 0.0
  %3805 = vmatpush1.msra.mxu0 %v1868
  %3806 = vmatprep.subr.mxu0 0.0
  %3807 = vmatpush1.msra.mxu0 %v1869
  %3808 = vmatprep.subr.mxu0 0.0
  %3809 = vmatpush1.msra.mxu0 0.0
  %3810 = vmatprep.subr.mxu0 0.0
  %3811 = vmatpush1.msra.mxu0 0.0
  %3812 = vmatprep.subr.mxu0 0.0
  %3813 = vmatpush1.msra.mxu0 0.0
  %3814 = vmatprep.subr.mxu0 0.0
  %3815 = vmatpush1.msra.mxu0 0.0
  %3816 = vmatprep.subr.mxu0 0.0
  %3817 = vmatpush1.msra.mxu0 0.0
  %3818 = vmatprep.subr.mxu0 0.0
  %3819 = vmatpush1.msra.mxu0 0.0
  %3820 = vmatprep.subr.mxu0 0.0
  %3821 = vmatpush1.msra.mxu0 0.0
  %3822 = vmatprep.subr.mxu0 0.0
  %3823 = vmatpush1.msra.mxu0 0.0
  %3824 = vmatprep.subr.mxu0 0.0
  %3825 = vmatpush1.msra.mxu0 0.0
  %3826 = vmatprep.subr.mxu0 0.0
  %3827 = vmatpush1.msra.mxu0 0.0
  %3828 = vmatprep.subr.mxu0 0.0
  %3829 = vmatpush1.msra.mxu0 0.0
  %3830 = vmatprep.subr.mxu0 0.0
  %3831 = vmatpush1.msra.mxu0 0.0
  %3832 = vmatprep.subr.mxu0 0.0
  %3833 = vmatpush1.msra.mxu0 0.0
  %3834 = vmatprep.subr.mxu0 0.0
  %3835 = vmatpush1.msra.mxu0 0.0
  %3836 = vmatprep.subr.mxu0 0.0
  %3837 = vmatpush1.msra.mxu0 0.0
  %3838 = vmatprep.subr.mxu0 0.0
  %3839 = vmatpush1.msra.mxu0 0.0
  %3840 = vmatprep.subr.mxu0 0.0
  %3841 = vmatpush1.msra.mxu0 0.0
  %3842 = vmatprep.subr.mxu0 0.0
  %3843 = vmatpush1.msra.mxu0 0.0
  %3844 = vmatprep.subr.mxu0 0.0
  %3845 = vmatpush1.msra.mxu0 0.0
  %3846 = vmatprep.subr.mxu0 0.0
  %3847 = vmatpush1.msra.mxu0 0.0
  %3848 = vmatprep.subr.mxu0 0.0
  %3849 = vmatpush1.msra.mxu0 0.0
  %3850 = vmatprep.subr.mxu0 0.0
  %3851 = vmatpush1.msra.mxu0 0.0
  %3852 = vmatprep.subr.mxu0 0.0
  %3853 = vmatpush1.msra.mxu0 0.0
  %3854 = vmatprep.subr.mxu0 0.0
  %3855 = vmatpush1.msra.mxu0 0.0
  %3856 = vmatprep.subr.mxu0 0.0
  %3857 = vmatpush1.msra.mxu0 0.0
  %3858 = vmatprep.subr.mxu0 0.0
  %3859 = vmatpush1.msra.mxu0 0.0
  %3860 = vmatprep.subr.mxu0 0.0
  %3861 = vmatpush1.msra.mxu0 0.0
  %3862 = vmatprep.subr.mxu0 0.0
  %3863 = vmatpush1.msra.mxu0 0.0
  %3864 = vmatprep.mubr.f32.mxu0 0.0
  %3865 = vmatmul.mubr.f32.gmra.mrb[0].mxu0 %v3798
  %v3866 = vpop.f32.mrb[0].mxu0
  %v3867 = vadd.f32 0.0, %v3866
  %v3868 = vpop.f32.mrb[0].mxu0
  %3869 = vdwg.mxu0
  %v3871 = vcombine.high %v3867, %v3867
  %v3872 = vrot.slane %v3867, 5
  %v3873 = vrot.slane %v3867, 6
  %v3874 = vrot.slane %v3867, 7
  %v3875 = vrot.slane %v3871, 5
  %v3876 = vrot.slane %v3871, 6
  %v3877 = vrot.slane %v3871, 7
  %v3886 = vadd.f32 %v1836, %v3872
  %v3887 = vadd.f32 %v1858, %v3873
  %v3888 = vadd.f32 %v1841, %v3874
  %v3889 = vadd.f32 %v1859, %v3867
  %v3890 = vadd.f32 %v1846, %v3875
  %v3891 = vadd.f32 %v1860, %v3876
  %v3892 = vadd.f32 %v1851, %v3877
  %v3893 = vadd.f32 %v1861, %v3871
  %v3894 = vrot.slane %v3867, 1
  %v3895 = vrot.slane %v3867, 2
  %v3896 = vrot.slane %v3867, 3
  %v3897 = vrot.slane %v3871, 1
  %v3898 = vrot.slane %v3871, 2
  %v3899 = vrot.slane %v3871, 3
  %v3906 = vadd.f32 %v1836, %v3867
  %v3907 = vadd.f32 %v1858, %v3894
  %v3908 = vadd.f32 %v1841, %v3895
  %v3909 = vadd.f32 %v1859, %v3896
  %v3910 = vadd.f32 %v1846, %v3871
  %v3911 = vadd.f32 %v1860, %v3897
  %v3912 = vadd.f32 %v1851, %v3898
  %v3913 = vadd.f32 %v1861, %v3899
  %v3914 = vxor.u32 %v3886, 2147483648
  %v3915 = vxor.u32 %v3887, 2147483648
  %v3916 = vxor.u32 %v3888, 2147483648
  %v3917 = vxor.u32 %v3889, 2147483648
  %v3918 = vxor.u32 %v3890, 2147483648
  %v3919 = vxor.u32 %v3891, 2147483648
  %v3920 = vxor.u32 %v3892, 2147483648
  %v3921 = vxor.u32 %v3893, 2147483648
  %v3922 = vmul.f32 %v3914, 1.442695
  %v3923 = vpow.pop %v3922
  %v3924 = vmul.f32 %v3915, 1.442695
  %v3925 = vpow.pop %v3924
  %v3926 = vmul.f32 %v3916, 1.442695
  %v3927 = vpow.pop %v3926
  %v3928 = vmul.f32 %v3917, 1.442695
  %v3929 = vpow.pop %v3928
  %v3930 = vmul.f32 %v3918, 1.442695
  %v3931 = vpow.pop %v3930
  %v3932 = vmul.f32 %v3919, 1.442695
  %v3933 = vpow.pop %v3932
  %v3934 = vmul.f32 %v3920, 1.442695
  %v3935 = vpow.pop %v3934
  %v3936 = vmul.f32 %v3921, 1.442695
  %v3937 = vpow.pop %v3936
  %v3938 = vadd.f32 %v3923, 1.0
  %v3939 = vadd.f32 %v3925, 1.0
  %v3940 = vadd.f32 %v3927, 1.0
  %v3941 = vadd.f32 %v3929, 1.0
  %v3942 = vadd.f32 %v3931, 1.0
  %v3943 = vadd.f32 %v3933, 1.0
  %v3944 = vadd.f32 %v3935, 1.0
  %v3945 = vadd.f32 %v3937, 1.0
  %v3946 = vrcp.pop %v3938
  %v3947 = vmul.f32 1.0, %v3946
  %v3948 = vrcp.pop %v3939
  %v3949 = vmul.f32 1.0, %v3948
  %v3950 = vrcp.pop %v3940
  %v3951 = vmul.f32 1.0, %v3950
  %v3952 = vrcp.pop %v3941
  %v3953 = vmul.f32 1.0, %v3952
  %v3954 = vrcp.pop %v3942
  %v3955 = vmul.f32 1.0, %v3954
  %v3956 = vrcp.pop %v3943
  %v3957 = vmul.f32 1.0, %v3956
  %v3958 = vrcp.pop %v3944
  %v3959 = vmul.f32 1.0, %v3958
  %v3960 = vrcp.pop %v3945
  %v3961 = vmul.f32 1.0, %v3960
  %v3962 = vtanh.pop %v3886
  %v3963 = vtanh.pop %v3887
  %v3964 = vtanh.pop %v3888
  %v3965 = vtanh.pop %v3889
  %v3966 = vtanh.pop %v3890
  %v3967 = vtanh.pop %v3891
  %v3968 = vtanh.pop %v3892
  %v3969 = vtanh.pop %v3893
  %v3978 = vrot.slane %v3407, 7
  %v3979 = vrot.slane %v3408, 7
  %v3980 = vrot.slane %v3409, 7
  %v3981 = vrot.slane %v3410, 7
  %v3982 = vrot.slane %v3411, 7
  %v3983 = vrot.slane %v3412, 7
  %v3984 = vrot.slane %v3413, 7
  %v3985 = vrot.slane %v3414, 7
  %v3994 = vmul.f32 %v3947, %v3978
  %v3995 = vmul.f32 %v3949, %v3979
  %v3996 = vmul.f32 %v3951, %v3980
  %v3997 = vmul.f32 %v3953, %v3981
  %v3998 = vmul.f32 %v3955, %v3982
  %v3999 = vmul.f32 %v3957, %v3983
  %v4000 = vmul.f32 %v3959, %v3984
  %v4001 = vmul.f32 %v3961, %v3985
  %4010 = vrot.lane.b32.xlu0 %v3962, 96
  %v4011 = vpop.permute.xlu0 %4010
  %4012 = vrot.lane.b32.xlu0 %v3963, 96
  %v4013 = vpop.permute.xlu0 %4012
  %4014 = vrot.lane.b32.xlu0 %v3964, 96
  %v4015 = vpop.permute.xlu0 %4014
  %4016 = vrot.lane.b32.xlu0 %v3965, 96
  %v4017 = vpop.permute.xlu0 %4016
  %4018 = vrot.lane.b32.xlu0 %v3966, 96
  %v4019 = vpop.permute.xlu0 %4018
  %4020 = vrot.lane.b32.xlu0 %v3967, 96
  %v4021 = vpop.permute.xlu0 %4020
  %4022 = vrot.lane.b32.xlu0 %v3968, 96
  %v4023 = vpop.permute.xlu0 %4022
  %4024 = vrot.lane.b32.xlu0 %v3969, 96
  %v4025 = vpop.permute.xlu0 %4024
  %v4034 = vmul.f32 %v3947, %v4011
  %v4035 = vmul.f32 %v3949, %v4013
  %v4036 = vmul.f32 %v3951, %v4015
  %v4037 = vmul.f32 %v3953, %v4017
  %v4038 = vmul.f32 %v3955, %v4019
  %v4039 = vmul.f32 %v3957, %v4021
  %v4040 = vmul.f32 %v3959, %v4023
  %v4041 = vmul.f32 %v3961, %v4025
  %4050 = vrot.lane.b32.xlu0 %v4034, 16
  %v4051 = vpop.permute.xlu0 %4050
  %4052 = vrot.lane.b32.xlu0 %v4035, 16
  %v4053 = vpop.permute.xlu0 %4052
  %4054 = vrot.lane.b32.xlu0 %v4036, 16
  %v4055 = vpop.permute.xlu0 %4054
  %4056 = vrot.lane.b32.xlu0 %v4037, 16
  %v4057 = vpop.permute.xlu0 %4056
  %4058 = vrot.lane.b32.xlu0 %v4038, 16
  %v4059 = vpop.permute.xlu0 %4058
  %4060 = vrot.lane.b32.xlu0 %v4039, 16
  %v4061 = vpop.permute.xlu0 %4060
  %4062 = vrot.lane.b32.xlu0 %v4040, 16
  %v4063 = vpop.permute.xlu0 %4062
  %4064 = vrot.lane.b32.xlu0 %v4041, 16
  %v4065 = vpop.permute.xlu0 %4064
  %v4074 = vadd.f32 %v3994, %v4051
  %v4075 = vadd.f32 %v3995, %v4053
  %v4076 = vadd.f32 %v3996, %v4055
  %v4077 = vadd.f32 %v3997, %v4057
  %v4078 = vadd.f32 %v3998, %v4059
  %v4079 = vadd.f32 %v3999, %v4061
  %v4080 = vadd.f32 %v4000, %v4063
  %v4081 = vadd.f32 %v4001, %v4065
  %v4082 = vtanh.pop %v4074
  %v4083 = vtanh.pop %v4075
  %v4084 = vtanh.pop %v4076
  %v4085 = vtanh.pop %v4077
  %v4086 = vtanh.pop %v4078
  %v4087 = vtanh.pop %v4079
  %v4088 = vtanh.pop %v4080
  %v4089 = vtanh.pop %v4081
  %4098 = vrot.lane.b32.xlu0 %v4082, 32
  %v4099 = vpop.permute.xlu0 %4098
  %4100 = vrot.lane.b32.xlu0 %v4083, 32
  %v4101 = vpop.permute.xlu0 %4100
  %4102 = vrot.lane.b32.xlu0 %v4084, 32
  %v4103 = vpop.permute.xlu0 %4102
  %4104 = vrot.lane.b32.xlu0 %v4085, 32
  %v4105 = vpop.permute.xlu0 %4104
  %4106 = vrot.lane.b32.xlu0 %v4086, 32
  %v4107 = vpop.permute.xlu0 %4106
  %4108 = vrot.lane.b32.xlu0 %v4087, 32
  %v4109 = vpop.permute.xlu0 %4108
  %4110 = vrot.lane.b32.xlu0 %v4088, 32
  %v4111 = vpop.permute.xlu0 %4110
  %4112 = vrot.lane.b32.xlu0 %v4089, 32
  %v4113 = vpop.permute.xlu0 %4112
  %v4122 = vmul.f32 %v3947, %v4099
  %v4123 = vmul.f32 %v3949, %v4101
  %v4124 = vmul.f32 %v3951, %v4103
  %v4125 = vmul.f32 %v3953, %v4105
  %v4126 = vmul.f32 %v3955, %v4107
  %v4127 = vmul.f32 %v3957, %v4109
  %v4128 = vmul.f32 %v3959, %v4111
  %v4129 = vmul.f32 %v3961, %v4113
  %v4130 = vxor.u32 %v3906, 2147483648
  %v4131 = vxor.u32 %v3907, 2147483648
  %v4132 = vxor.u32 %v3908, 2147483648
  %v4133 = vxor.u32 %v3909, 2147483648
  %v4134 = vxor.u32 %v3910, 2147483648
  %v4135 = vxor.u32 %v3911, 2147483648
  %v4136 = vxor.u32 %v3912, 2147483648
  %v4137 = vxor.u32 %v3913, 2147483648
  %v4138 = vmul.f32 %v4130, 1.442695
  %v4139 = vpow.pop %v4138
  %v4140 = vmul.f32 %v4131, 1.442695
  %v4141 = vpow.pop %v4140
  %v4142 = vmul.f32 %v4132, 1.442695
  %v4143 = vpow.pop %v4142
  %v4144 = vmul.f32 %v4133, 1.442695
  %v4145 = vpow.pop %v4144
  %v4146 = vmul.f32 %v4134, 1.442695
  %v4147 = vpow.pop %v4146
  %v4148 = vmul.f32 %v4135, 1.442695
  %v4149 = vpow.pop %v4148
  %v4150 = vmul.f32 %v4136, 1.442695
  %v4151 = vpow.pop %v4150
  %v4152 = vmul.f32 %v4137, 1.442695
  %v4153 = vpow.pop %v4152
  %v4154 = vadd.f32 %v4139, 1.0
  %v4155 = vadd.f32 %v4141, 1.0
  %v4156 = vadd.f32 %v4143, 1.0
  %v4157 = vadd.f32 %v4145, 1.0
  %v4158 = vadd.f32 %v4147, 1.0
  %v4159 = vadd.f32 %v4149, 1.0
  %v4160 = vadd.f32 %v4151, 1.0
  %v4161 = vadd.f32 %v4153, 1.0
  %v4162 = vrcp.pop %v4154
  %v4163 = vmul.f32 1.0, %v4162
  %v4164 = vrcp.pop %v4155
  %v4165 = vmul.f32 1.0, %v4164
  %v4166 = vrcp.pop %v4156
  %v4167 = vmul.f32 1.0, %v4166
  %v4168 = vrcp.pop %v4157
  %v4169 = vmul.f32 1.0, %v4168
  %v4170 = vrcp.pop %v4158
  %v4171 = vmul.f32 1.0, %v4170
  %v4172 = vrcp.pop %v4159
  %v4173 = vmul.f32 1.0, %v4172
  %v4174 = vrcp.pop %v4160
  %v4175 = vmul.f32 1.0, %v4174
  %v4176 = vrcp.pop %v4161
  %v4177 = vmul.f32 1.0, %v4176
  %v4178 = vtanh.pop %v3906
  %v4179 = vtanh.pop %v3907
  %v4180 = vtanh.pop %v3908
  %v4181 = vtanh.pop %v3909
  %v4182 = vtanh.pop %v3910
  %v4183 = vtanh.pop %v3911
  %v4184 = vtanh.pop %v3912
  %v4185 = vtanh.pop %v3913
  %v4194 = vrot.slane %v3631, 5
  %v4195 = vrot.slane %v4194, 4
  %v4196 = vrot.slane %v3632, 5
  %v4197 = vrot.slane %v4196, 4
  %v4198 = vrot.slane %v3633, 5
  %v4199 = vrot.slane %v4198, 4
  %v4200 = vrot.slane %v3634, 5
  %v4201 = vrot.slane %v4200, 4
  %v4202 = vrot.slane %v3635, 5
  %v4203 = vrot.slane %v4202, 4
  %v4204 = vrot.slane %v3636, 5
  %v4205 = vrot.slane %v4204, 4
  %v4206 = vrot.slane %v3637, 5
  %v4207 = vrot.slane %v4206, 4
  %v4208 = vrot.slane %v3638, 5
  %v4209 = vrot.slane %v4208, 4
  %v4218 = vmul.f32 %v4163, %v4195
  %v4219 = vmul.f32 %v4165, %v4197
  %v4220 = vmul.f32 %v4167, %v4199
  %v4221 = vmul.f32 %v4169, %v4201
  %v4222 = vmul.f32 %v4171, %v4203
  %v4223 = vmul.f32 %v4173, %v4205
  %v4224 = vmul.f32 %v4175, %v4207
  %v4225 = vmul.f32 %v4177, %v4209
  %4234 = vrot.lane.b32.xlu0 %v4178, 96
  %v4235 = vpop.permute.xlu0 %4234
  %4236 = vrot.lane.b32.xlu0 %v4179, 96
  %v4237 = vpop.permute.xlu0 %4236
  %4238 = vrot.lane.b32.xlu0 %v4180, 96
  %v4239 = vpop.permute.xlu0 %4238
  %4240 = vrot.lane.b32.xlu0 %v4181, 96
  %v4241 = vpop.permute.xlu0 %4240
  %4242 = vrot.lane.b32.xlu0 %v4182, 96
  %v4243 = vpop.permute.xlu0 %4242
  %4244 = vrot.lane.b32.xlu0 %v4183, 96
  %v4245 = vpop.permute.xlu0 %4244
  %4246 = vrot.lane.b32.xlu0 %v4184, 96
  %v4247 = vpop.permute.xlu0 %4246
  %4248 = vrot.lane.b32.xlu0 %v4185, 96
  %v4249 = vpop.permute.xlu0 %4248
  %v4258 = vmul.f32 %v4163, %v4235
  %v4259 = vmul.f32 %v4165, %v4237
  %v4260 = vmul.f32 %v4167, %v4239
  %v4261 = vmul.f32 %v4169, %v4241
  %v4262 = vmul.f32 %v4171, %v4243
  %v4263 = vmul.f32 %v4173, %v4245
  %v4264 = vmul.f32 %v4175, %v4247
  %v4265 = vmul.f32 %v4177, %v4249
  %4274 = vrot.lane.b32.xlu0 %v4258, 16
  %v4275 = vpop.permute.xlu0 %4274
  %4276 = vrot.lane.b32.xlu0 %v4259, 16
  %v4277 = vpop.permute.xlu0 %4276
  %4278 = vrot.lane.b32.xlu0 %v4260, 16
  %v4279 = vpop.permute.xlu0 %4278
  %4280 = vrot.lane.b32.xlu0 %v4261, 16
  %v4281 = vpop.permute.xlu0 %4280
  %4282 = vrot.lane.b32.xlu0 %v4262, 16
  %v4283 = vpop.permute.xlu0 %4282
  %4284 = vrot.lane.b32.xlu0 %v4263, 16
  %v4285 = vpop.permute.xlu0 %4284
  %4286 = vrot.lane.b32.xlu0 %v4264, 16
  %v4287 = vpop.permute.xlu0 %4286
  %4288 = vrot.lane.b32.xlu0 %v4265, 16
  %v4289 = vpop.permute.xlu0 %4288
  %v4298 = vadd.f32 %v4218, %v4275
  %v4299 = vadd.f32 %v4219, %v4277
  %v4300 = vadd.f32 %v4220, %v4279
  %v4301 = vadd.f32 %v4221, %v4281
  %v4302 = vadd.f32 %v4222, %v4283
  %v4303 = vadd.f32 %v4223, %v4285
  %v4304 = vadd.f32 %v4224, %v4287
  %v4305 = vadd.f32 %v4225, %v4289
  %v4306 = vtanh.pop %v4298
  %v4307 = vtanh.pop %v4299
  %v4308 = vtanh.pop %v4300
  %v4309 = vtanh.pop %v4301
  %v4310 = vtanh.pop %v4302
  %v4311 = vtanh.pop %v4303
  %v4312 = vtanh.pop %v4304
  %v4313 = vtanh.pop %v4305
  %4322 = vrot.lane.b32.xlu0 %v4306, 32
  %v4323 = vpop.permute.xlu0 %4322
  %4324 = vrot.lane.b32.xlu0 %v4307, 32
  %v4325 = vpop.permute.xlu0 %4324
  %4326 = vrot.lane.b32.xlu0 %v4308, 32
  %v4327 = vpop.permute.xlu0 %4326
  %4328 = vrot.lane.b32.xlu0 %v4309, 32
  %v4329 = vpop.permute.xlu0 %4328
  %4330 = vrot.lane.b32.xlu0 %v4310, 32
  %v4331 = vpop.permute.xlu0 %4330
  %4332 = vrot.lane.b32.xlu0 %v4311, 32
  %v4333 = vpop.permute.xlu0 %4332
  %4334 = vrot.lane.b32.xlu0 %v4312, 32
  %v4335 = vpop.permute.xlu0 %4334
  %4336 = vrot.lane.b32.xlu0 %v4313, 32
  %v4337 = vpop.permute.xlu0 %4336
  %v4346 = vmul.f32 %v4163, %v4323
  %v4347 = vmul.f32 %v4165, %v4325
  %v4348 = vmul.f32 %v4167, %v4327
  %v4349 = vmul.f32 %v4169, %v4329
  %v4350 = vmul.f32 %v4171, %v4331
  %v4351 = vmul.f32 %v4173, %v4333
  %v4352 = vmul.f32 %v4175, %v4335
  %v4353 = vmul.f32 %v4177, %v4337
  %v4362 = vlaneseq
  %v4363 = vshrl.u32 %v4362, 7
  %v4364 = vsub.s32 0, %v4363
  %v4365 = vrot.slane %v4346, %v4364
  %v4366 = vlaneseq
  %v4367 = vshrl.u32 %v4366, 7
  %v4368 = vsub.s32 0, %v4367
  %v4369 = vrot.slane %v4347, %v4368
  %v4370 = vlaneseq
  %v4371 = vshrl.u32 %v4370, 7
  %v4372 = vsub.s32 0, %v4371
  %v4373 = vrot.slane %v4348, %v4372
  %v4374 = vlaneseq
  %v4375 = vshrl.u32 %v4374, 7
  %v4376 = vsub.s32 0, %v4375
  %v4377 = vrot.slane %v4349, %v4376
  %v4378 = vlaneseq
  %v4379 = vshrl.u32 %v4378, 7
  %v4380 = vsub.s32 0, %v4379
  %v4381 = vrot.slane %v4350, %v4380
  %v4382 = vlaneseq
  %v4383 = vshrl.u32 %v4382, 7
  %v4384 = vsub.s32 0, %v4383
  %v4385 = vrot.slane %v4351, %v4384
  %v4386 = vlaneseq
  %v4387 = vshrl.u32 %v4386, 7
  %v4388 = vsub.s32 0, %v4387
  %v4389 = vrot.slane %v4352, %v4388
  %v4390 = vlaneseq
  %v4391 = vshrl.u32 %v4390, 7
  %v4392 = vsub.s32 0, %v4391
  %v4393 = vrot.slane %v4353, %v4392
  %v4394 = vsel %vm2411, %v4369, %v4365
  %v4395 = vsel %vm2413, %v4373, %v4394
  %v4396 = vsel %vm2415, %v4377, %v4395
  %v4397 = vsel %vm2417, %v4381, %v4396
  %v4398 = vsel %vm2419, %v4385, %v4397
  %v4399 = vsel %vm2421, %v4389, %v4398
  %v4400 = vsel %vm2423, %v4393, %v4399
  %4401 = vrot.lane.b32.xlu0 %v4400, 32
  %v4402 = vpop.permute.xlu0 %4401
  %v4404 = vsel %vm2411, %v3043, %v3039
  %v4405 = vsel %vm2413, %v3047, %v4404
  %v4406 = vsel %vm2415, %v3051, %v4405
  %v4407 = vsel %vm2417, %v3055, %v4406
  %v4408 = vsel %vm2419, %v3059, %v4407
  %v4409 = vsel %vm2421, %v3063, %v4408
  %v4410 = vsel %vm2423, %v3067, %v4409
  %4411 = vrot.lane.b32.xlu0 %v4410, 112
  %v4412 = vpop.permute.xlu0 %4411
  %v4414 = vsel %vm2411, %v3754, %v3750
  %v4415 = vsel %vm2413, %v3758, %v4414
  %v4416 = vsel %vm2415, %v3762, %v4415
  %v4417 = vsel %vm2417, %v3766, %v4416
  %v4418 = vsel %vm2419, %v3770, %v4417
  %v4419 = vsel %vm2421, %v3774, %v4418
  %v4420 = vsel %vm2423, %v3778, %v4419
  %4421 = vrot.lane.b32.xlu0 %v4420, 64
  %v4422 = vpop.permute.xlu0 %4421
  %v4424 = vsel %vm2411, %v3702, %v3698
  %v4425 = vsel %vm2413, %v3706, %v4424
  %v4426 = vsel %vm2415, %v3710, %v4425
  %v4427 = vsel %vm2417, %v3714, %v4426
  %v4428 = vsel %vm2419, %v3718, %v4427
  %v4429 = vsel %vm2421, %v3722, %v4428
  %v4430 = vsel %vm2423, %v3726, %v4429
  %4431 = vrot.lane.b32.xlu0 %v4430, 16
  %v4432 = vpop.permute.xlu0 %4431
  %v4434 = vsel %vm2411, %v3095, %v3091
  %v4435 = vsel %vm2413, %v3099, %v4434
  %v4436 = vsel %vm2415, %v3103, %v4435
  %v4437 = vsel %vm2417, %v3107, %v4436
  %v4438 = vsel %vm2419, %v3111, %v4437
  %v4439 = vsel %vm2421, %v3115, %v4438
  %v4440 = vsel %vm2423, %v3119, %v4439
  %4441 = vrot.lane.b32.xlu0 %v4440, 96
  %v4442 = vpop.permute.xlu0 %4441
  %v4452 = vlaneseq
  %v4453 = vshrl.u32 %v4452, 7
  %v4454 = vsub.s32 3, %v4453
  %v4455 = vrot.slane %v4122, %v4454
  %v4456 = vlaneseq
  %v4457 = vshrl.u32 %v4456, 7
  %v4458 = vsub.s32 3, %v4457
  %v4459 = vrot.slane %v4123, %v4458
  %v4460 = vlaneseq
  %v4461 = vshrl.u32 %v4460, 7
  %v4462 = vsub.s32 3, %v4461
  %v4463 = vrot.slane %v4124, %v4462
  %v4464 = vlaneseq
  %v4465 = vshrl.u32 %v4464, 7
  %v4466 = vsub.s32 3, %v4465
  %v4467 = vrot.slane %v4125, %v4466
  %v4468 = vlaneseq
  %v4469 = vshrl.u32 %v4468, 7
  %v4470 = vsub.s32 3, %v4469
  %v4471 = vrot.slane %v4126, %v4470
  %v4472 = vlaneseq
  %v4473 = vshrl.u32 %v4472, 7
  %v4474 = vsub.s32 3, %v4473
  %v4475 = vrot.slane %v4127, %v4474
  %v4476 = vlaneseq
  %v4477 = vshrl.u32 %v4476, 7
  %v4478 = vsub.s32 3, %v4477
  %v4479 = vrot.slane %v4128, %v4478
  %v4480 = vlaneseq
  %v4481 = vshrl.u32 %v4480, 7
  %v4482 = vsub.s32 3, %v4481
  %v4483 = vrot.slane %v4129, %v4482
  %v4484 = vsel %vm2411, %v4459, %v4455
  %v4485 = vsel %vm2413, %v4463, %v4484
  %v4486 = vsel %vm2415, %v4467, %v4485
  %v4487 = vsel %vm2417, %v4471, %v4486
  %v4488 = vsel %vm2419, %v4475, %v4487
  %v4489 = vsel %vm2421, %v4479, %v4488
  %v4490 = vsel %vm2423, %v4483, %v4489
  %4491 = vrot.lane.b32.xlu0 %v4490, 48
  %v4492 = vpop.permute.xlu0 %4491
  %v4495 = vsel %vm308, %v2426, %v4402
  %v4496 = vsel %vm1468, %v4495, %v4412
  %v4497 = vsel %vm1490, %v4496, %v4422
  %vm4498 = vcmask 523264
  %v4499 = vsel %vm4498, %v4497, %v4432
  %vm4500 = vcmask 654336
  %v4501 = vsel %vm4500, %v4499, %v4442
  %vm4502 = vcmask 785408
  %v4503 = vsel %vm4502, %v4501, %v4492
  %vm4504 = vcmask 916480
  %v4505 = vsel %vm4504, %v4503, %v2474
  %v4506 = vld [vmem:[%s12] sm:$0xff]
  %v4507 = vld [vmem:[%s12 + $0x8] sm:$0xff]
  %v4508 = vld [vmem:[%s12 + $0x10] sm:$0xff]
  %v4509 = vld [vmem:[%s12 + $0x18] sm:$0xff]
  %v4510 = vld [vmem:[%s12 + $0x20] sm:$0xff]
  %v4511 = vld [vmem:[%s12 + $0x28] sm:$0xff]
  %v4512 = vld [vmem:[%s12 + $0x30] sm:$0xff]
  %v4513 = vld [vmem:[%s12 + $0x38] sm:$0xff]
  %v4514 = vld [vmem:[%s12 + $0x40] sm:$0xff]
  %v4515 = vld [vmem:[%s12 + $0x48] sm:$0xff]
  %v4516 = vld [vmem:[%s12 + $0x50] sm:$0xff]
  %v4517 = vld [vmem:[%s12 + $0x58] sm:$0xff]
  %v4518 = vld [vmem:[%s12 + $0x60] sm:$0xff]
  %v4519 = vld [vmem:[%s12 + $0x68] sm:$0xff]
  %v4520 = vld [vmem:[%s12 + $0x70] sm:$0xff]
  %v4521 = vld [vmem:[%s12 + $0x78] sm:$0xff]
  %v4522 = vld [vmem:[%s13] sm:$0x1]
  %v4524 = vlaneseq
  %v4525 = vshrl.u32 %v4524, 7
  %v4526 = vsub.s32 0, %v4525
  %v4527 = vrot.slane %v4522, %v4526
  %4529 = vmatprep.subr.mxu0 0.0
  %4530 = vmatpush1.msra.mxu0 %v4506
  %4531 = vmatprep.subr.mxu0 0.0
  %4532 = vmatpush1.msra.mxu0 %v4507
  %4533 = vmatprep.subr.mxu0 0.0
  %4534 = vmatpush1.msra.mxu0 %v4508
  %4535 = vmatprep.subr.mxu0 0.0
  %4536 = vmatpush1.msra.mxu0 %v4509
  %4537 = vmatprep.subr.mxu0 0.0
  %4538 = vmatpush1.msra.mxu0 %v4510
  %4539 = vmatprep.subr.mxu0 0.0
  %4540 = vmatpush1.msra.mxu0 %v4511
  %4541 = vmatprep.subr.mxu0 0.0
  %4542 = vmatpush1.msra.mxu0 %v4512
  %4543 = vmatprep.subr.mxu0 0.0
  %4544 = vmatpush1.msra.mxu0 %v4513
  %4545 = vmatprep.subr.mxu0 0.0
  %4546 = vmatpush1.msra.mxu0 %v4514
  %4547 = vmatprep.subr.mxu0 0.0
  %4548 = vmatpush1.msra.mxu0 %v4515
  %4549 = vmatprep.subr.mxu0 0.0
  %4550 = vmatpush1.msra.mxu0 %v4516
  %4551 = vmatprep.subr.mxu0 0.0
  %4552 = vmatpush1.msra.mxu0 %v4517
  %4553 = vmatprep.subr.mxu0 0.0
  %4554 = vmatpush1.msra.mxu0 %v4518
  %4555 = vmatprep.subr.mxu0 0.0
  %4556 = vmatpush1.msra.mxu0 %v4519
  %4557 = vmatprep.subr.mxu0 0.0
  %4558 = vmatpush1.msra.mxu0 %v4520
  %4559 = vmatprep.subr.mxu0 0.0
  %4560 = vmatpush1.msra.mxu0 %v4521
  %4561 = vmatprep.subr.mxu0 0.0
  %4562 = vmatpush1.msra.mxu0 0.0
  %4563 = vmatprep.subr.mxu0 0.0
  %4564 = vmatpush1.msra.mxu0 0.0
  %4565 = vmatprep.subr.mxu0 0.0
  %4566 = vmatpush1.msra.mxu0 0.0
  %4567 = vmatprep.subr.mxu0 0.0
  %4568 = vmatpush1.msra.mxu0 0.0
  %4569 = vmatprep.subr.mxu0 0.0
  %4570 = vmatpush1.msra.mxu0 0.0
  %4571 = vmatprep.subr.mxu0 0.0
  %4572 = vmatpush1.msra.mxu0 0.0
  %4573 = vmatprep.subr.mxu0 0.0
  %4574 = vmatpush1.msra.mxu0 0.0
  %4575 = vmatprep.subr.mxu0 0.0
  %4576 = vmatpush1.msra.mxu0 0.0
  %4577 = vmatprep.subr.mxu0 0.0
  %4578 = vmatpush1.msra.mxu0 0.0
  %4579 = vmatprep.subr.mxu0 0.0
  %4580 = vmatpush1.msra.mxu0 0.0
  %4581 = vmatprep.subr.mxu0 0.0
  %4582 = vmatpush1.msra.mxu0 0.0
  %4583 = vmatprep.subr.mxu0 0.0
  %4584 = vmatpush1.msra.mxu0 0.0
  %4585 = vmatprep.subr.mxu0 0.0
  %4586 = vmatpush1.msra.mxu0 0.0
  %4587 = vmatprep.subr.mxu0 0.0
  %4588 = vmatpush1.msra.mxu0 0.0
  %4589 = vmatprep.subr.mxu0 0.0
  %4590 = vmatpush1.msra.mxu0 0.0
  %4591 = vmatprep.subr.mxu0 0.0
  %4592 = vmatpush1.msra.mxu0 0.0
  %4593 = vmatprep.mubr.f32.mxu0 0.0
  %4594 = vmatmul.mubr.f32.gmra.mrb[0].mxu0 %v4505
  %v4595 = vpop.f32.mrb[0].mxu0
  %v4596 = vadd.f32 %v4527, %v4595
  %v4597 = vpop.f32.mrb[0].mxu0
  %4598 = vdwg.mxu0
  %v4599 = vmax.f32 %v4596, 0.0
  %v4600 = vld [vmem:[%s14] sm:$0xff]
  %v4601 = vld [vmem:[%s14 + $0x8] sm:$0xff]
  %v4602 = vld [vmem:[%s14 + $0x10] sm:$0xff]
  %v4603 = vld [vmem:[%s14 + $0x18] sm:$0xff]
  %v4604 = vld [vmem:[%s15] sm:$0x1]
  %v4606 = vlaneseq
  %v4607 = vshrl.u32 %v4606, 7
  %v4608 = vsub.s32 0, %v4607
  %v4609 = vrot.slane %v4604, %v4608
  %v4612 = vsel %vm1468, %v4599, 0
  %4614 = vmatprep.subr.mxu0 0.0
  %4615 = vmatpush1.msra.mxu0 %v4600
  %4616 = vmatprep.subr.mxu0 0.0
  %4617 = vmatpush1.msra.mxu0 %v4601
  %4618 = vmatprep.subr.mxu0 0.0
  %4619 = vmatpush1.msra.mxu0 %v4602
  %4620 = vmatprep.subr.mxu0 0.0
  %4621 = vmatpush1.msra.mxu0 %v4603
  %4622 = vmatprep.subr.mxu0 0.0
  %4623 = vmatpush1.msra.mxu0 0.0
  %4624 = vmatprep.subr.mxu0 0.0
  %4625 = vmatpush1.msra.mxu0 0.0
  %4626 = vmatprep.subr.mxu0 0.0
  %4627 = vmatpush1.msra.mxu0 0.0
  %4628 = vmatprep.subr.mxu0 0.0
  %4629 = vmatpush1.msra.mxu0 0.0
  %4630 = vmatprep.subr.mxu0 0.0
  %4631 = vmatpush1.msra.mxu0 0.0
  %4632 = vmatprep.subr.mxu0 0.0
  %4633 = vmatpush1.msra.mxu0 0.0
  %4634 = vmatprep.subr.mxu0 0.0
  %4635 = vmatpush1.msra.mxu0 0.0
  %4636 = vmatprep.subr.mxu0 0.0
  %4637 = vmatpush1.msra.mxu0 0.0
  %4638 = vmatprep.subr.mxu0 0.0
  %4639 = vmatpush1.msra.mxu0 0.0
  %4640 = vmatprep.subr.mxu0 0.0
  %4641 = vmatpush1.msra.mxu0 0.0
  %4642 = vmatprep.subr.mxu0 0.0
  %4643 = vmatpush1.msra.mxu0 0.0
  %4644 = vmatprep.subr.mxu0 0.0
  %4645 = vmatpush1.msra.mxu0 0.0
  %4646 = vmatprep.subr.mxu0 0.0
  %4647 = vmatpush1.msra.mxu0 0.0
  %4648 = vmatprep.subr.mxu0 0.0
  %4649 = vmatpush1.msra.mxu0 0.0
  %4650 = vmatprep.subr.mxu0 0.0
  %4651 = vmatpush1.msra.mxu0 0.0
  %4652 = vmatprep.subr.mxu0 0.0
  %4653 = vmatpush1.msra.mxu0 0.0
  %4654 = vmatprep.subr.mxu0 0.0
  %4655 = vmatpush1.msra.mxu0 0.0
  %4656 = vmatprep.subr.mxu0 0.0
  %4657 = vmatpush1.msra.mxu0 0.0
  %4658 = vmatprep.subr.mxu0 0.0
  %4659 = vmatpush1.msra.mxu0 0.0
  %4660 = vmatprep.subr.mxu0 0.0
  %4661 = vmatpush1.msra.mxu0 0.0
  %4662 = vmatprep.subr.mxu0 0.0
  %4663 = vmatpush1.msra.mxu0 0.0
  %4664 = vmatprep.subr.mxu0 0.0
  %4665 = vmatpush1.msra.mxu0 0.0
  %4666 = vmatprep.subr.mxu0 0.0
  %4667 = vmatpush1.msra.mxu0 0.0
  %4668 = vmatprep.subr.mxu0 0.0
  %4669 = vmatpush1.msra.mxu0 0.0
  %4670 = vmatprep.subr.mxu0 0.0
  %4671 = vmatpush1.msra.mxu0 0.0
  %4672 = vmatprep.subr.mxu0 0.0
  %4673 = vmatpush1.msra.mxu0 0.0
  %4674 = vmatprep.subr.mxu0 0.0
  %4675 = vmatpush1.msra.mxu0 0.0
  %4676 = vmatprep.subr.mxu0 0.0
  %4677 = vmatpush1.msra.mxu0 0.0
  %4678 = vmatprep.mubr.f32.mxu0 0.0
  %4679 = vmatmul.mubr.f32.gmra.mrb[0].mxu0 %v4612
  %v4680 = vpop.f32.mrb[0].mxu0
  %v4681 = vadd.f32 %v4609, %v4680
  %v4682 = vpop.f32.mrb[0].mxu0
  %4683 = vdwg.mxu0
  %v4684 = vmax.f32 %v4681, 0.0
  %v4685 = vld [vmem:[%s16] sm:$0xff]
  %v4686 = vld [vmem:[%s16 + $0x8] sm:$0xff]
  %v4687 = vld [vmem:[%s17] sm:$0x1]
  %v4689 = vlaneseq
  %v4690 = vshrl.u32 %v4689, 7
  %v4691 = vsub.s32 0, %v4690
  %v4692 = vrot.slane %v4687, %v4691
  %v4695 = vsel %vm308, %v4684, 0
  %4697 = vmatprep.subr.mxu0 0.0
  %4698 = vmatpush1.msra.mxu0 %v4685
  %4699 = vmatprep.subr.mxu0 0.0
  %4700 = vmatpush1.msra.mxu0 %v4686
  %4701 = vmatprep.subr.mxu0 0.0
  %4702 = vmatpush1.msra.mxu0 0.0
  %4703 = vmatprep.subr.mxu0 0.0
  %4704 = vmatpush1.msra.mxu0 0.0
  %4705 = vmatprep.subr.mxu0 0.0
  %4706 = vmatpush1.msra.mxu0 0.0
  %4707 = vmatprep.subr.mxu0 0.0
  %4708 = vmatpush1.msra.mxu0 0.0
  %4709 = vmatprep.subr.mxu0 0.0
  %4710 = vmatpush1.msra.mxu0 0.0
  %4711 = vmatprep.subr.mxu0 0.0
  %4712 = vmatpush1.msra.mxu0 0.0
  %4713 = vmatprep.subr.mxu0 0.0
  %4714 = vmatpush1.msra.mxu0 0.0
  %4715 = vmatprep.subr.mxu0 0.0
  %4716 = vmatpush1.msra.mxu0 0.0
  %4717 = vmatprep.subr.mxu0 0.0
  %4718 = vmatpush1.msra.mxu0 0.0
  %4719 = vmatprep.subr.mxu0 0.0
  %4720 = vmatpush1.msra.mxu0 0.0
  %4721 = vmatprep.subr.mxu0 0.0
  %4722 = vmatpush1.msra.mxu0 0.0
  %4723 = vmatprep.subr.mxu0 0.0
  %4724 = vmatpush1.msra.mxu0 0.0
  %4725 = vmatprep.subr.mxu0 0.0
  %4726 = vmatpush1.msra.mxu0 0.0
  %4727 = vmatprep.subr.mxu0 0.0
  %4728 = vmatpush1.msra.mxu0 0.0
  %4729 = vmatprep.subr.mxu0 0.0
  %4730 = vmatpush1.msra.mxu0 0.0
  %4731 = vmatprep.subr.mxu0 0.0
  %4732 = vmatpush1.msra.mxu0 0.0
  %4733 = vmatprep.subr.mxu0 0.0
  %4734 = vmatpush1.msra.mxu0 0.0
  %4735 = vmatprep.subr.mxu0 0.0
  %4736 = vmatpush1.msra.mxu0 0.0
  %4737 = vmatprep.subr.mxu0 0.0
  %4738 = vmatpush1.msra.mxu0 0.0
  %4739 = vmatprep.subr.mxu0 0.0
  %4740 = vmatpush1.msra.mxu0 0.0
  %4741 = vmatprep.subr.mxu0 0.0
  %4742 = vmatpush1.msra.mxu0 0.0
  %4743 = vmatprep.subr.mxu0 0.0
  %4744 = vmatpush1.msra.mxu0 0.0
  %4745 = vmatprep.subr.mxu0 0.0
  %4746 = vmatpush1.msra.mxu0 0.0
  %4747 = vmatprep.subr.mxu0 0.0
  %4748 = vmatpush1.msra.mxu0 0.0
  %4749 = vmatprep.subr.mxu0 0.0
  %4750 = vmatpush1.msra.mxu0 0.0
  %4751 = vmatprep.subr.mxu0 0.0
  %4752 = vmatpush1.msra.mxu0 0.0
  %4753 = vmatprep.subr.mxu0 0.0
  %4754 = vmatpush1.msra.mxu0 0.0
  %4755 = vmatprep.subr.mxu0 0.0
  %4756 = vmatpush1.msra.mxu0 0.0
  %4757 = vmatprep.subr.mxu0 0.0
  %4758 = vmatpush1.msra.mxu0 0.0
  %4759 = vmatprep.subr.mxu0 0.0
  %4760 = vmatpush1.msra.mxu0 0.0
  %4761 = vmatprep.mubr.f32.mxu0 0.0
  %4762 = vmatmul.mubr.f32.gmra.mrb[0].mxu0 %v4695
  %v4763 = vpop.f32.mrb[0].mxu0
  %v4764 = vadd.f32 %v4692, %v4763
  %v4765 = vpop.f32.mrb[0].mxu0
  %4766 = vdwg.mxu0
  %v4767 = vmax.f32 %v4764, 0.0
  %v4768 = vld [vmem:[%s18] sm:$0xff]
  %v4769 = vld [vmem:[%s19] sm:$0x1]
  %v4771 = vlaneseq
  %v4772 = vshrl.u32 %v4771, 7
  %v4773 = vsub.s32 0, %v4772
  %v4774 = vrot.slane %v4769, %v4773
  %v4777 = vsel %vm291, %v4767, 0
  %4779 = vmatprep.subr.mxu0 0.0
  %4780 = vmatpush1.msra.mxu0 %v4768
  %4781 = vmatprep.subr.mxu0 0.0
  %4782 = vmatpush1.msra.mxu0 0.0
  %4783 = vmatprep.subr.mxu0 0.0
  %4784 = vmatpush1.msra.mxu0 0.0
  %4785 = vmatprep.subr.mxu0 0.0
  %4786 = vmatpush1.msra.mxu0 0.0
  %4787 = vmatprep.subr.mxu0 0.0
  %4788 = vmatpush1.msra.mxu0 0.0
  %4789 = vmatprep.subr.mxu0 0.0
  %4790 = vmatpush1.msra.mxu0 0.0
  %4791 = vmatprep.subr.mxu0 0.0
  %4792 = vmatpush1.msra.mxu0 0.0
  %4793 = vmatprep.subr.mxu0 0.0
  %4794 = vmatpush1.msra.mxu0 0.0
  %4795 = vmatprep.subr.mxu0 0.0
  %4796 = vmatpush1.msra.mxu0 0.0
  %4797 = vmatprep.subr.mxu0 0.0
  %4798 = vmatpush1.msra.mxu0 0.0
  %4799 = vmatprep.subr.mxu0 0.0
  %4800 = vmatpush1.msra.mxu0 0.0
  %4801 = vmatprep.subr.mxu0 0.0
  %4802 = vmatpush1.msra.mxu0 0.0
  %4803 = vmatprep.subr.mxu0 0.0
  %4804 = vmatpush1.msra.mxu0 0.0
  %4805 = vmatprep.subr.mxu0 0.0
  %4806 = vmatpush1.msra.mxu0 0.0
  %4807 = vmatprep.subr.mxu0 0.0
  %4808 = vmatpush1.msra.mxu0 0.0
  %4809 = vmatprep.subr.mxu0 0.0
  %4810 = vmatpush1.msra.mxu0 0.0
  %4811 = vmatprep.subr.mxu0 0.0
  %4812 = vmatpush1.msra.mxu0 0.0
  %4813 = vmatprep.subr.mxu0 0.0
  %4814 = vmatpush1.msra.mxu0 0.0
  %4815 = vmatprep.subr.mxu0 0.0
  %4816 = vmatpush1.msra.mxu0 0.0
  %4817 = vmatprep.subr.mxu0 0.0
  %4818 = vmatpush1.msra.mxu0 0.0
  %4819 = vmatprep.subr.mxu0 0.0
  %4820 = vmatpush1.msra.mxu0 0.0
  %4821 = vmatprep.subr.mxu0 0.0
  %4822 = vmatpush1.msra.mxu0 0.0
  %4823 = vmatprep.subr.mxu0 0.0
  %4824 = vmatpush1.msra.mxu0 0.0
  %4825 = vmatprep.subr.mxu0 0.0
  %4826 = vmatpush1.msra.mxu0 0.0
  %4827 = vmatprep.subr.mxu0 0.0
  %4828 = vmatpush1.msra.mxu0 0.0
  %4829 = vmatprep.subr.mxu0 0.0
  %4830 = vmatpush1.msra.mxu0 0.0
  %4831 = vmatprep.subr.mxu0 0.0
  %4832 = vmatpush1.msra.mxu0 0.0
  %4833 = vmatprep.subr.mxu0 0.0
  %4834 = vmatpush1.msra.mxu0 0.0
  %4835 = vmatprep.subr.mxu0 0.0
  %4836 = vmatpush1.msra.mxu0 0.0
  %4837 = vmatprep.subr.mxu0 0.0
  %4838 = vmatpush1.msra.mxu0 0.0
  %4839 = vmatprep.subr.mxu0 0.0
  %4840 = vmatpush1.msra.mxu0 0.0
  %4841 = vmatprep.subr.mxu0 0.0
  %4842 = vmatpush1.msra.mxu0 0.0
  %4843 = vmatprep.mubr.f32.mxu0 0.0
  %4844 = vmatmul.mubr.f32.gmra.mrb[0].mxu0 %v4777
  %v4845 = vpop.f32.mrb[0].mxu0
  %v4846 = vadd.f32 %v4774, %v4845
  %v4847 = vpop.f32.mrb[0].mxu0
  %4848 = vdwg.mxu0
  %vm4849 = vcmask 15360
  %v4850 = vsel %vm4849, %v4846, -inf
  %4851 = vmax.xlane.f32.xlu0 %v4850
  %v4852 = vpop.xlane.xlu0 %4851
  %v4853 = vsub.f32 %v4846, %v4852
  %v4854 = vmul.f32 %v4853, 1.442695
  %v4855 = vpow.pop %v4854
  %v4856 = vsel %vm4849, %v4855, 0.0
  %4857 = vadd.xlane.f32.xlu0 %v4856
  %v4858 = vpop.xlane.xlu0 %4857
  %v4859 = vlog2.pop %v4858
  %v4860 = vmul.f32 %v4859, 0.6931472
  %v4861 = vadd.f32 %v4852, %v4860
  %v4862 = vsub.f32 %v4846, %v4861
  %4863 = vst.msk [vmem:[%s20] sm:$0xff] %vm4849, %v4862
  // Predicated region
  $region82: #{cnn_bilstm_forward.1} parent=0 // pred_check
    _
  $region83: #{cnn_bilstm_forward.1} parent=0 // pred_check_branch
    %4865 = sbr.rel (0) target = $region85
  $region84: #{cnn_bilstm_forward.1} parent=0 // pred_region
    _
  $region85: #{cnn_bilstm_forward.1} parent=0 // pred_fallthru
    _
  // Predicated region
  $region86: #{cnn_bilstm_forward.1} parent=0 // pred_check
    _
  $region87: #{cnn_bilstm_forward.1} parent=0 // pred_check_branch
    %4867 = sbr.rel (0) target = $region89
  $region88: #{cnn_bilstm_forward.1} parent=0 // pred_region
    _
  $region89: #{cnn_bilstm_forward.1} parent=0 // pred_fallthru
    _

</llo_original>
